<compile_context>
chip_gen: v5e
topology: v5e:2x2
jax: 0.10.0
libtpu: 0.0.40
codegen_flags: <defaults>
</compile_context>

<pallas_src>
import jax
import jax.numpy as jnp
import numpy as np
from jax.experimental import pallas as pl
from jax.experimental.pallas import tpu as pltpu

# bf16 operands into the MXU on v5e/v6e/v7x; f32 accumulate; f32 elementwise everywhere.
MXU_OPERAND_DTYPE = jnp.bfloat16
_NEG_BIG = -1e30      # pads unused vocab lanes so the log-softmax ignores them
_LANE = 128


def _round_up(x, m):
    return ((x + m - 1) // m) * m


def attn_decoder_kernel(
    emb_ref,    # (B, E)       bf16  this step's embedded tokens (leading T dim squeezed)
    ctx0_ref,   # (B, 2H)      f32   initial last_context  (read only at t == 0)
    h0_ref,     # (B, 2H)      f32   initial h             (read only at t == 0)
    c0_ref,     # (B, 2H)      f32   initial c             (read only at t == 0)
    enc_ref,    # (B, S, 2H)   bf16  encoder outputs       (constant index map -> DMA once)
    wg_ref,     # (E+4H, 8H)   bf16  cat([W_ih, W_hh], 1).T (DMA once)
    bg_ref,     # (1, 8H)      f32   b_ih + b_hh            (DMA once)
    wo_ref,     # (4H, O_pad)  bf16  W_out.T, lane-padded    (DMA once)
    bo_ref,     # (1, O_pad)   f32   b_out, padded lanes=-1e30 (DMA once)
    out_ref,    # (B, W)       f32   lane-dense step slab [logsm|h1|ctx|c1|attn|0]
    x_scr,      # (B, E+4H)    bf16  fused-gate operand [emb|ctx|h]
    hc_scr,     # (B, 4H)      bf16  projection operand [h1|ctx]
    h_scr,      # (B, 2H)      f32   carried hidden state
    c_scr,      # (B, 2H)      f32   carried cell state
    ctx_scr,    # (B, 2H)      f32   carried attention context
):
    t = pl.program_id(0)
    e_dim = emb_ref.shape[-1]
    two_h = h_scr.shape[-1]
    s_len = enc_ref.shape[1]
    o_pad = wo_ref.shape[-1]

    @pl.when(t == 0)
    def _init():
        h_scr[...] = h0_ref[...]
        c_scr[...] = c0_ref[...]
        ctx_scr[...] = ctx0_ref[...]

    # ---- Assemble the fused-gate operand [emb | ctx | h] in VMEM (in-kernel concat) ----
    x_scr[:, 0:e_dim] = emb_ref[...]
    x_scr[:, e_dim:e_dim + two_h] = ctx_scr[...].astype(x_scr.dtype)
    x_scr[:, e_dim + two_h:] = h_scr[...].astype(x_scr.dtype)

    # ---- LSTM cell: ONE fused MXU matmul for all four gates (PyTorch order i, f, g, o) ----
    gates = (jnp.dot(x_scr[...], wg_ref[...], preferred_element_type=jnp.float32)
             + bg_ref[...])                                   # (B, 8H) f32
    i_g = jax.nn.sigmoid(gates[:, 0 * two_h:1 * two_h])
    f_g = jax.nn.sigmoid(gates[:, 1 * two_h:2 * two_h])
    g_g = jnp.tanh(gates[:, 2 * two_h:3 * two_h])
    o_g = jax.nn.sigmoid(gates[:, 3 * two_h:4 * two_h])
    c1 = f_g * c_scr[...] + i_g * g_g
    h1 = o_g * jnp.tanh(c1)
    c_scr[...] = c1
    h_scr[...] = h1

    # ---- Attention (spec's 'general' == plain batched dot).  VPU/XLU path is right at
    # (B=32, S=16, 2H=64); move to bf16 einsum on the MXU once 2H >= 128 or S*2H grows.
    enc = enc_ref[...].astype(jnp.float32)
    scores = jnp.sum(h1[:, None, :] * enc, axis=-1)           # (B, S)
    m = jnp.max(scores, axis=-1, keepdims=True)
    p = jnp.exp(scores - m)
    attn = p / jnp.sum(p, axis=-1, keepdims=True)             # exact softmax
    context = jnp.sum(attn[:, :, None] * enc, axis=1)         # (B, 2H)
    ctx_scr[...] = context

    # ---- Output projection: ONE matmul on the packed [h1 | context] slab (B, 4H=128) ----
    hc_scr[:, 0:two_h] = h1.astype(hc_scr.dtype)
    hc_scr[:, two_h:] = context.astype(hc_scr.dtype)
    logits = (jnp.dot(hc_scr[...], wo_ref[...], preferred_element_type=jnp.float32)
              + bo_ref[...])                                  # (B, O_pad)
    lmax = jnp.max(logits, axis=-1, keepdims=True)
    lse = jnp.log(jnp.sum(jnp.exp(logits - lmax), axis=-1, keepdims=True)) + lmax
    logsm = logits - lse                                      # padded lanes ~ -1e30

    # ---- ONE lane-dense per-step output slab (single unmasked 128k-lane writeback) ----
    out_ref[:, 0:o_pad] = logsm
    out_ref[:, o_pad:o_pad + two_h] = h1
    out_ref[:, o_pad + two_h:o_pad + 2 * two_h] = context
    out_ref[:, o_pad + 2 * two_h:o_pad + 3 * two_h] = c1
    out_ref[:, o_pad + 3 * two_h:o_pad + 3 * two_h + s_len] = attn
    tail = o_pad + 3 * two_h + s_len
    if out_ref.shape[-1] > tail:          # static pad region
        out_ref[:, tail:] = jnp.zeros(
            (out_ref.shape[0], out_ref.shape[-1] - tail), jnp.float32)


def prepare_params(params, mxu_dtype=MXU_OPERAND_DTYPE):
    """One-time weight prep (fuse, transpose, pad, cast) -- hoisted out of decode calls."""
    out_size = params["b_out"].shape[0]
    o_pad = _round_up(out_size, _LANE)
    w_gates_t = jnp.concatenate([params["W_ih"], params["W_hh"]], axis=1).T   # (E+4H, 8H)
    w_out_t = jnp.pad(params["W_out"].T, ((0, 0), (0, o_pad - out_size)))     # (4H, O_pad)
    b_out = jnp.pad(params["b_out"], (0, o_pad - out_size), constant_values=_NEG_BIG)
    return {
        "embedding": params["embedding"].astype(mxu_dtype),   # bf16 table (half the gather traffic)
        "w_gates_t": w_gates_t.astype(mxu_dtype),
        "b_gates": (params["b_ih"] + params["b_hh"])[None, :].astype(jnp.float32),
        "w_out_t": w_out_t.astype(mxu_dtype),
        "b_out": b_out[None, :].astype(jnp.float32),
    }


def attn_decoder_decode(word_inputs, last_context, last_hidden, encoder_outputs,
                        kparams, *, out_size):
    """T teacher-forced applications of AttnDecoderLSTM.forward in ONE pallas_call.

    word_inputs: (T, B) int32; last_context: (1,B,2H); last_hidden: (h0, c0) each
    (1,B,2H); encoder_outputs: (B,S,2H) f32; kparams: output of prepare_params().
    Returns per-step (T,B,O) log-softmax, (T,B,2H) context, ((T,B,2H),(T,B,2H)) h/c,
    (T,B,S) attention weights.
    """
    T, B = word_inputs.shape
    S = encoder_outputs.shape[1]
    two_h = last_hidden[0].shape[-1]
    o_pad = kparams["w_out_t"].shape[1]
    slab_w = _round_up(o_pad + 3 * two_h + S, _LANE)

    # Glue done ONCE per fused call (not per token): embedding gather for all T tokens
    # (+ eval-mode dropout identity), bf16 cast of encoder outputs, layer-dim squeeze.
    emb_seq = kparams["embedding"][word_inputs]                       # (T, B, E) bf16
    enc_bf = encoder_outputs.astype(kparams["w_gates_t"].dtype)       # (B, S, 2H) bf16
    ctx0 = last_context[0]                                            # (B, 2H)
    h0 = last_hidden[0][0]                                            # (B, 2H)
    c0 = last_hidden[1][0]                                            # (B, 2H)
    E = emb_seq.shape[-1]

    grid_spec = pltpu.PrefetchScalarGridSpec(
        num_scalar_prefetch=0,
        grid=(T,),
        in_specs=[
            pl.BlockSpec((None, B, E), lambda t: (t, 0, 0)),             # emb_t (per step)
            pl.BlockSpec((B, two_h), lambda t: (0, 0)),                  # ctx0  (once)
            pl.BlockSpec((B, two_h), lambda t: (0, 0)),                  # h0    (once)
            pl.BlockSpec((B, two_h), lambda t: (0, 0)),                  # c0    (once)
            pl.BlockSpec((B, S, two_h), lambda t: (0, 0, 0)),            # enc   (once)
            pl.BlockSpec((E + 2 * two_h, 4 * two_h), lambda t: (0, 0)),  # wg    (once)
            pl.BlockSpec((1, 4 * two_h), lambda t: (0, 0)),              # bg    (once)
            pl.BlockSpec((2 * two_h, o_pad), lambda t: (0, 0)),          # wo    (once)
            pl.BlockSpec((1, o_pad), lambda t: (0, 0)),                  # bo    (once)
        ],
        out_specs=pl.BlockSpec((None, B, slab_w), lambda t: (t, 0, 0)),
        scratch_shapes=[
            pltpu.VMEM((B, E + 2 * two_h), kparams["w_gates_t"].dtype),  # x_scr
            pltpu.VMEM((B, 2 * two_h), kparams["w_out_t"].dtype),        # hc_scr
            pltpu.VMEM((B, two_h), jnp.float32),                         # h_scr
            pltpu.VMEM((B, two_h), jnp.float32),                         # c_scr
            pltpu.VMEM((B, two_h), jnp.float32),                         # ctx_scr
        ],
    )
    slab = pl.pallas_call(
        attn_decoder_kernel,
        out_shape=jax.ShapeDtypeStruct((T, B, slab_w), jnp.float32),
        grid_spec=grid_spec,
        compiler_params=pltpu.CompilerParams(dimension_semantics=("arbitrary",)),
    )(emb_seq, ctx0, h0, c0, enc_bf,
      kparams["w_gates_t"], kparams["b_gates"], kparams["w_out_t"], kparams["b_out"])

    # One slice pass per CALL (not per token).
    outputs = slab[:, :, :out_size]                                      # (T, B, O)
    h_seq = slab[:, :, o_pad:o_pad + two_h]                              # (T, B, 2H)
    ctx_seq = slab[:, :, o_pad + two_h:o_pad + 2 * two_h]                # (T, B, 2H)
    c_seq = slab[:, :, o_pad + 2 * two_h:o_pad + 3 * two_h]              # (T, B, 2H)
    attn_seq = slab[:, :, o_pad + 3 * two_h:o_pad + 3 * two_h + S]       # (T, B, S)
    return outputs, ctx_seq, (h_seq, c_seq), attn_seq


def attn_decoder_forward(word_input, last_context, last_hidden, encoder_outputs,
                         kparams, *, out_size):
    """Exactly AttnDecoderLSTM.forward (one step) — the T=1 case of the fused kernel.
    Returns output (B,O), context (B,1,2H), hidden=(h,c) each (1,B,2H), attn (B,1,S)."""
    outs, ctx_seq, (h_seq, c_seq), attn_seq = attn_decoder_decode(
        word_input[None, :], last_context, last_hidden, encoder_outputs,
        kparams, out_size=out_size)
    output = outs[0]
    context = ctx_seq[0][:, None, :]
    hidden = (h_seq[0][None, :, :], c_seq[0][None, :, :])
    attn = attn_seq[0][:, None, :]
    return output, context, hidden, attn


# ------------------------------ pure-JAX references ------------------------------
def reference_forward(word_input, last_context, last_hidden, encoder_outputs, params,
                      matmul_dtype=jnp.float32):
    """Single-step reference mirroring the PyTorch semantics. `matmul_dtype` lets us
    check both against full-f32 math (loose) and against bf16-MXU-operand rounding."""
    md = matmul_dtype
    hi = jax.lax.Precision.HIGHEST
    emb = params["embedding"][word_input]
    x = jnp.concatenate([emb, last_context[0], last_hidden[0][0]], axis=1)
    w_g = jnp.concatenate([params["W_ih"], params["W_hh"]], axis=1)
    gates = (jnp.dot(x.astype(md), w_g.T.astype(md),
                     preferred_element_type=jnp.float32, precision=hi)
             + params["b_ih"] + params["b_hh"])
    two_h = last_hidden[0].shape[-1]
    i_g, f_g, g_g, o_g = [gates[:, k * two_h:(k + 1) * two_h] for k in range(4)]
    c1 = jax.nn.sigmoid(f_g) * last_hidden[1][0] + jax.nn.sigmoid(i_g) * jnp.tanh(g_g)
    h1 = jax.nn.sigmoid(o_g) * jnp.tanh(c1)
    scores = jnp.sum(h1[:, None, :] * encoder_outputs, axis=-1)
    attn = jax.nn.softmax(scores, axis=-1)
    context = jnp.sum(attn[:, :, None] * encoder_outputs, axis=1)
    hc = jnp.concatenate([h1, context], axis=1)
    logits = (jnp.dot(hc.astype(md), params["W_out"].T.astype(md),
                      preferred_element_type=jnp.float32, precision=hi)
              + params["b_out"])
    out = jax.nn.log_softmax(logits, axis=-1)
    return out, context[:, None, :], (h1[None], c1[None]), attn[:, None, :]


def reference_decode(word_inputs, last_context, last_hidden, encoder_outputs, params,
                     matmul_dtype=jnp.float32):
    """T-step teacher-forced reference: repeated single-step forward, context fed back."""
    ctx = last_context
    h, c = last_hidden
    outs, ctxs, hs, cs, attns = [], [], [], [], []
    for t in range(word_inputs.shape[0]):
        out, ctx_b, (h, c), attn = reference_forward(
            word_inputs[t], ctx, (h, c), encoder_outputs, params, matmul_dtype)
        ctx = jnp.transpose(ctx_b, (1, 0, 2))          # (B,1,2H) -> (1,B,2H) for next step
        outs.append(out); ctxs.append(ctx_b[:, 0, :])
        hs.append(h[0]); cs.append(c[0]); attns.append(attn[:, 0, :])
    return (jnp.stack(outs), jnp.stack(ctxs),
            (jnp.stack(hs), jnp.stack(cs)), jnp.stack(attns))


if __name__ == "__main__":
    # Shapes consistent with the module (spec hardcodes batch_size=32, n_layers=1,
    # attn_model='general'); B=32 also fills 32 MXU rows instead of 8.
    B, H, E, S, O, V, T = 32, 32, 32, 16, 50, 100, 4
    two_h = 2 * H

    key = jax.random.PRNGKey(0)
    ks = jax.random.split(key, 12)
    scale = 1.0 / np.sqrt(two_h)
    params = {
        "embedding": jax.random.normal(ks[0], (V, E), jnp.float32) * 0.1,
        "W_ih": jax.random.uniform(ks[1], (4 * two_h, two_h + E), jnp.float32, -scale, scale),
        "W_hh": jax.random.uniform(ks[2], (4 * two_h, two_h), jnp.float32, -scale, scale),
        "b_ih": jax.random.uniform(ks[3], (4 * two_h,), jnp.float32, -scale, scale),
        "b_hh": jax.random.uniform(ks[4], (4 * two_h,), jnp.float32, -scale, scale),
        "W_out": jax.random.uniform(ks[5], (O, 2 * two_h), jnp.float32, -scale, scale),
        "b_out": jax.random.uniform(ks[6], (O,), jnp.float32, -scale, scale),
    }

    word_inputs = jax.random.randint(ks[7], (T, B), 0, V)
    last_context = jax.random.normal(ks[8], (1, B, two_h), jnp.float32)
    h0 = jax.random.normal(ks[9], (1, B, two_h), jnp.float32)
    c0 = jax.random.normal(ks[10], (1, B, two_h), jnp.float32)
    encoder_outputs = jax.random.normal(ks[11], (B, S, two_h), jnp.float32)
    # Reference copy of the encoder outputs with the kernel's bf16 storage rounding.
    enc_q = encoder_outputs.astype(MXU_OPERAND_DTYPE).astype(jnp.float32)

    kparams = prepare_params(params)   # one-time fuse / transpose / pad / bf16 cast

    # ---------------- Single-step forward (exact module semantics) ----------------
    fwd = jax.jit(attn_decoder_forward, static_argnames=("out_size",))
    outs1 = fwd(word_inputs[0], last_context, (h0, c0), encoder_outputs, kparams, out_size=O)
    outs1 = jax.block_until_ready(outs1)
    output, context, (h1, c1), attn_w = outs1
    assert output.shape == (B, O)
    assert context.shape == (B, 1, two_h)
    assert h1.shape == (1, B, two_h) and c1.shape == (1, B, two_h)
    assert attn_w.shape == (B, 1, S)
    got1 = (output, context, h1, c1, attn_w)

    # Tight: reference with the SAME bf16 operand/storage rounding as the kernel.
    ref = reference_forward(word_inputs[0], last_context, (h0, c0), enc_q, params,
                            matmul_dtype=MXU_OPERAND_DTYPE)
    for g, w in zip(got1, (ref[0], ref[1], ref[2][0], ref[2][1], ref[3])):
        np.testing.assert_allclose(np.asarray(g), np.asarray(w), atol=5e-3, rtol=5e-3)

    # Loose: full-f32 reference (quantifies bf16 operand + enc/emb storage loss).
    ref32 = reference_forward(word_inputs[0], last_context, (h0, c0), encoder_outputs,
                              params, matmul_dtype=jnp.float32)
    for g, w in zip(got1, (ref32[0], ref32[1], ref32[2][0], ref32[2][1], ref32[3])):
        np.testing.assert_allclose(np.asarray(g), np.asarray(w), atol=3e-2, rtol=3e-2)

    # ---------------- Fused T-step decode loop (one pallas_call) ----------------
    dec = jax.jit(attn_decoder_decode, static_argnames=("out_size",))
    outsT = dec(word_inputs, last_context, (h0, c0), encoder_outputs, kparams, out_size=O)
    outsT = jax.block_until_ready(outsT)
    out_seq, ctx_seq, (h_seq, c_seq), attn_seq = outsT
    assert out_seq.shape == (T, B, O) and attn_seq.shape == (T, B, S)

    refT = reference_decode(word_inputs, last_context, (h0, c0), enc_q, params,
                            matmul_dtype=MXU_OPERAND_DTYPE)
    for g, w in zip((out_seq, ctx_seq, h_seq, c_seq, attn_seq),
                    (refT[0], refT[1], refT[2][0], refT[2][1], refT[3])):
        np.testing.assert_allclose(np.asarray(g), np.asarray(w), atol=1e-2, rtol=1e-2)

    print("KERNEL_OK")
</pallas_src>

<mosaic_0001>
module attributes {stable_mosaic.version = 11 : i64} {
  func.func @attn_decoder_kernel(%arg0: i32, %arg1: memref<1x32x32xbf16, #tpu.memory_space<vmem>>, %arg2: memref<32x64xf32, #tpu.memory_space<vmem>>, %arg3: memref<32x64xf32, #tpu.memory_space<vmem>>, %arg4: memref<32x64xf32, #tpu.memory_space<vmem>>, %arg5: memref<32x16x64xbf16, #tpu.memory_space<vmem>>, %arg6: memref<160x256xbf16, #tpu.memory_space<vmem>>, %arg7: memref<1x256xf32, #tpu.memory_space<vmem>>, %arg8: memref<128x128xbf16, #tpu.memory_space<vmem>>, %arg9: memref<1x128xf32, #tpu.memory_space<vmem>>, %arg10: memref<1x32x384xf32, #tpu.memory_space<vmem>>, %arg11: memref<32x160xbf16, #tpu.memory_space<vmem>>, %arg12: memref<32x128xbf16, #tpu.memory_space<vmem>>, %arg13: memref<32x64xf32, #tpu.memory_space<vmem>>, %arg14: memref<32x64xf32, #tpu.memory_space<vmem>>, %arg15: memref<32x64xf32, #tpu.memory_space<vmem>>) attributes {dimension_semantics = [#tpu.dimension_semantics<arbitrary>], iteration_bounds = array<i64: 1>, scalar_prefetch = 0 : i64, scratch_operands = 5 : i64, tpu.core_type = #tpu.core_type<tc>, window_params = [{transform_indices = @transform_0, window_bounds = array<i64: 1, 32, 32>}, {pipeline_mode = #tpu.pipeline_mode<synchronous>, transform_indices = @transform_1, window_bounds = array<i64: 32, 64>}, {pipeline_mode = #tpu.pipeline_mode<synchronous>, transform_indices = @transform_2, window_bounds = array<i64: 32, 64>}, {pipeline_mode = #tpu.pipeline_mode<synchronous>, transform_indices = @transform_3, window_bounds = array<i64: 32, 64>}, {pipeline_mode = #tpu.pipeline_mode<synchronous>, transform_indices = @transform_4, window_bounds = array<i64: 32, 16, 64>}, {pipeline_mode = #tpu.pipeline_mode<synchronous>, transform_indices = @transform_5, window_bounds = array<i64: 160, 256>}, {pipeline_mode = #tpu.pipeline_mode<synchronous>, transform_indices = @transform_6, window_bounds = array<i64: 1, 256>}, {pipeline_mode = #tpu.pipeline_mode<synchronous>, transform_indices = @transform_7, window_bounds = array<i64: 128, 128>}, {pipeline_mode = #tpu.pipeline_mode<synchronous>, transform_indices = @transform_8, window_bounds = array<i64: 1, 128>}, {transform_indices = @transform_9, window_bounds = array<i64: 1, 32, 384>}]} {
    %c0_i32 = arith.constant 0 : i32
    %0 = arith.cmpi eq, %arg0, %c0_i32 : i32
    %1 = arith.extui %0 : i1 to i32
    %c0_i32_0 = arith.constant 0 : i32
    %2 = arith.cmpi ne, %1, %c0_i32_0 : i32
    scf.if %2 {
      %c0_61 = arith.constant 0 : index
      %c0_62 = arith.constant 0 : index
      %106 = vector.load %arg3[%c0_61, %c0_62] : memref<32x64xf32, #tpu.memory_space<vmem>>, vector<32x64xf32>
      %c0_63 = arith.constant 0 : index
      %c0_64 = arith.constant 0 : index
      %107 = vector.load %arg13[%c0_63, %c0_64] : memref<32x64xf32, #tpu.memory_space<vmem>>, vector<32x64xf32>
      tpu.vector_store %arg13[%c0_63, %c0_64], %106 {strides = array<i32>} : memref<32x64xf32, #tpu.memory_space<vmem>>, vector<32x64xf32>,
      %c0_65 = arith.constant 0 : index
      %c0_66 = arith.constant 0 : index
      %108 = vector.load %arg4[%c0_65, %c0_66] : memref<32x64xf32, #tpu.memory_space<vmem>>, vector<32x64xf32>
      %c0_67 = arith.constant 0 : index
      %c0_68 = arith.constant 0 : index
      %109 = vector.load %arg14[%c0_67, %c0_68] : memref<32x64xf32, #tpu.memory_space<vmem>>, vector<32x64xf32>
      tpu.vector_store %arg14[%c0_67, %c0_68], %108 {strides = array<i32>} : memref<32x64xf32, #tpu.memory_space<vmem>>, vector<32x64xf32>,
      %c0_69 = arith.constant 0 : index
      %c0_70 = arith.constant 0 : index
      %110 = vector.load %arg2[%c0_69, %c0_70] : memref<32x64xf32, #tpu.memory_space<vmem>>, vector<32x64xf32>
      %c0_71 = arith.constant 0 : index
      %c0_72 = arith.constant 0 : index
      %111 = vector.load %arg15[%c0_71, %c0_72] : memref<32x64xf32, #tpu.memory_space<vmem>>, vector<32x64xf32>
      tpu.vector_store %arg15[%c0_71, %c0_72], %110 {strides = array<i32>} : memref<32x64xf32, #tpu.memory_space<vmem>>, vector<32x64xf32>,
    } else {
    }
    %c0 = arith.constant 0 : index
    %c0_1 = arith.constant 0 : index
    %c0_2 = arith.constant 0 : index
    %3 = vector.load %arg1[%c0, %c0_1, %c0_2] : memref<1x32x32xbf16, #tpu.memory_space<vmem>>, vector<1x32x32xbf16>
    %4 = vector.shape_cast %3 : vector<1x32x32xbf16> to vector<32x32xbf16>
    %c0_3 = arith.constant 0 : index
    %c0_4 = arith.constant 0 : index
    %5 = vector.load %arg11[%c0_3, %c0_4] : memref<32x160xbf16, #tpu.memory_space<vmem>>, vector<32x32xbf16>
    tpu.vector_store %arg11[%c0_3, %c0_4], %4 {strides = array<i32>} : memref<32x160xbf16, #tpu.memory_space<vmem>>, vector<32x32xbf16>,
    %c0_5 = arith.constant 0 : index
    %c0_6 = arith.constant 0 : index
    %6 = vector.load %arg15[%c0_5, %c0_6] : memref<32x64xf32, #tpu.memory_space<vmem>>, vector<32x64xf32>
    %7 = arith.truncf %6 : vector<32x64xf32> to vector<32x64xbf16>
    %c0_7 = arith.constant 0 : index
    %c32 = arith.constant 32 : index
    %8 = vector.load %arg11[%c0_7, %c32] : memref<32x160xbf16, #tpu.memory_space<vmem>>, vector<32x64xbf16>
    tpu.vector_store %arg11[%c0_7, %c32], %7 {strides = array<i32>} : memref<32x160xbf16, #tpu.memory_space<vmem>>, vector<32x64xbf16>,
    %c0_8 = arith.constant 0 : index
    %c0_9 = arith.constant 0 : index
    %9 = vector.load %arg13[%c0_8, %c0_9] : memref<32x64xf32, #tpu.memory_space<vmem>>, vector<32x64xf32>
    %10 = arith.truncf %9 : vector<32x64xf32> to vector<32x64xbf16>
    %c0_10 = arith.constant 0 : index
    %c96 = arith.constant 96 : index
    %11 = vector.load %arg11[%c0_10, %c96] : memref<32x160xbf16, #tpu.memory_space<vmem>>, vector<32x64xbf16>
    tpu.vector_store %arg11[%c0_10, %c96], %10 {strides = array<i32>} : memref<32x160xbf16, #tpu.memory_space<vmem>>, vector<32x64xbf16>,
    %c0_11 = arith.constant 0 : index
    %c0_12 = arith.constant 0 : index
    %12 = vector.load %arg11[%c0_11, %c0_12] : memref<32x160xbf16, #tpu.memory_space<vmem>>, vector<32x160xbf16>
    %c0_13 = arith.constant 0 : index
    %c0_14 = arith.constant 0 : index
    %13 = vector.load %arg6[%c0_13, %c0_14] : memref<160x256xbf16, #tpu.memory_space<vmem>>, vector<160x256xbf16>
    %cst = arith.constant dense<0.000000e+00> : vector<32x256xf32>
    %14 = tpu.matmul %12, %13, %cst {dimension_numbers = #tpu.dot_dimension_numbers<[1], [0], [0], [1], [0, 0, 1, 1], [], []>} : vector<32x160xbf16>, vector<160x256xbf16>, vector<32x256xf32> -> vector<32x256xf32>
    %c0_15 = arith.constant 0 : index
    %c0_16 = arith.constant 0 : index
    %15 = vector.load %arg7[%c0_15, %c0_16] : memref<1x256xf32, #tpu.memory_space<vmem>>, vector<1x256xf32>
    %16 = vector.broadcast %15 : vector<1x256xf32> to vector<32x256xf32>
    %17 = arith.addf %14, %16 : vector<32x256xf32>
    %18 = vector.extract_strided_slice %17 {offsets = [0, 0], sizes = [32, 64], strides = [1, 1]} : vector<32x256xf32> to vector<32x64xf32>
    %19 = arith.negf %18 : vector<32x64xf32>
    %20 = math.exp %19 : vector<32x64xf32>
    %cst_17 = arith.constant 1.000000e+00 : f32
    %21 = vector.broadcast %cst_17 : f32 to vector<32x64xf32>
    %22 = arith.addf %21, %20 : vector<32x64xf32>
    %23 = arith.divf %21, %22 : vector<32x64xf32>
    %24 = vector.extract_strided_slice %17 {offsets = [0, 64], sizes = [32, 64], strides = [1, 1]} : vector<32x256xf32> to vector<32x64xf32>
    %25 = arith.negf %24 : vector<32x64xf32>
    %26 = math.exp %25 : vector<32x64xf32>
    %cst_18 = arith.constant 1.000000e+00 : f32
    %27 = vector.broadcast %cst_18 : f32 to vector<32x64xf32>
    %28 = arith.addf %27, %26 : vector<32x64xf32>
    %29 = arith.divf %27, %28 : vector<32x64xf32>
    %30 = vector.extract_strided_slice %17 {offsets = [0, 128], sizes = [32, 64], strides = [1, 1]} : vector<32x256xf32> to vector<32x64xf32>
    %31 = math.tanh %30 : vector<32x64xf32>
    %32 = vector.extract_strided_slice %17 {offsets = [0, 192], sizes = [32, 64], strides = [1, 1]} : vector<32x256xf32> to vector<32x64xf32>
    %33 = arith.negf %32 : vector<32x64xf32>
    %34 = math.exp %33 : vector<32x64xf32>
    %cst_19 = arith.constant 1.000000e+00 : f32
    %35 = vector.broadcast %cst_19 : f32 to vector<32x64xf32>
    %36 = arith.addf %35, %34 : vector<32x64xf32>
    %37 = arith.divf %35, %36 : vector<32x64xf32>
    %c0_20 = arith.constant 0 : index
    %c0_21 = arith.constant 0 : index
    %38 = vector.load %arg14[%c0_20, %c0_21] : memref<32x64xf32, #tpu.memory_space<vmem>>, vector<32x64xf32>
    %39 = arith.mulf %29, %38 : vector<32x64xf32>
    %40 = arith.mulf %23, %31 : vector<32x64xf32>
    %41 = arith.addf %39, %40 : vector<32x64xf32>
    %42 = math.tanh %41 : vector<32x64xf32>
    %43 = arith.mulf %37, %42 : vector<32x64xf32>
    %c0_22 = arith.constant 0 : index
    %c0_23 = arith.constant 0 : index
    %44 = vector.load %arg14[%c0_22, %c0_23] : memref<32x64xf32, #tpu.memory_space<vmem>>, vector<32x64xf32>
    tpu.vector_store %arg14[%c0_22, %c0_23], %41 {strides = array<i32>} : memref<32x64xf32, #tpu.memory_space<vmem>>, vector<32x64xf32>,
    %c0_24 = arith.constant 0 : index
    %c0_25 = arith.constant 0 : index
    %45 = vector.load %arg13[%c0_24, %c0_25] : memref<32x64xf32, #tpu.memory_space<vmem>>, vector<32x64xf32>
    tpu.vector_store %arg13[%c0_24, %c0_25], %43 {strides = array<i32>} : memref<32x64xf32, #tpu.memory_space<vmem>>, vector<32x64xf32>,
    %c0_26 = arith.constant 0 : index
    %c0_27 = arith.constant 0 : index
    %c0_28 = arith.constant 0 : index
    %46 = vector.load %arg5[%c0_26, %c0_27, %c0_28] : memref<32x16x64xbf16, #tpu.memory_space<vmem>>, vector<32x16x64xbf16>
    %47 = arith.extf %46 : vector<32x16x64xbf16> to vector<32x16x64xf32>
    %48 = vector.shape_cast %43 : vector<32x64xf32> to vector<32x1x64xf32>
    %49 = vector.broadcast %48 : vector<32x1x64xf32> to vector<32x16x64xf32>
    %50 = arith.mulf %49, %47 : vector<32x16x64xf32>
    %cst_29 = arith.constant dense<0.000000e+00> : vector<32x16xf32>
    %51 = vector.multi_reduction <add>, %50, %cst_29 [2] : vector<32x16x64xf32> to vector<32x16xf32>
    %cst_30 = arith.constant dense<0xFF800000> : vector<32xf32>
    %52 = vector.multi_reduction <maximumf>, %51, %cst_30 [1] : vector<32x16xf32> to vector<32xf32>
    %53 = vector.shape_cast %52 : vector<32xf32> to vector<32x1xf32>
    %54 = vector.broadcast %53 : vector<32x1xf32> to vector<32x16xf32>
    %55 = arith.subf %51, %54 : vector<32x16xf32>
    %56 = math.exp %55 : vector<32x16xf32>
    %cst_31 = arith.constant dense<0.000000e+00> : vector<32xf32>
    %57 = vector.multi_reduction <add>, %56, %cst_31 [1] : vector<32x16xf32> to vector<32xf32>
    %58 = vector.shape_cast %57 : vector<32xf32> to vector<32x1xf32>
    %59 = vector.broadcast %58 : vector<32x1xf32> to vector<32x16xf32>
    %60 = arith.divf %56, %59 : vector<32x16xf32>
    %61 = vector.shape_cast %60 : vector<32x16xf32> to vector<32x16x1xf32>
    %62 = vector.broadcast %61 : vector<32x16x1xf32> to vector<32x16x64xf32>
    %63 = arith.mulf %62, %47 : vector<32x16x64xf32>
    %cst_32 = arith.constant dense<0.000000e+00> : vector<32x64xf32>
    %64 = vector.multi_reduction <add>, %63, %cst_32 [1] : vector<32x16x64xf32> to vector<32x64xf32>
    %c0_33 = arith.constant 0 : index
    %c0_34 = arith.constant 0 : index
    %65 = vector.load %arg15[%c0_33, %c0_34] : memref<32x64xf32, #tpu.memory_space<vmem>>, vector<32x64xf32>
    tpu.vector_store %arg15[%c0_33, %c0_34], %64 {strides = array<i32>} : memref<32x64xf32, #tpu.memory_space<vmem>>, vector<32x64xf32>,
    %66 = arith.truncf %43 : vector<32x64xf32> to vector<32x64xbf16>
    %c0_35 = arith.constant 0 : index
    %c0_36 = arith.constant 0 : index
    %67 = vector.load %arg12[%c0_35, %c0_36] : memref<32x128xbf16, #tpu.memory_space<vmem>>, vector<32x64xbf16>
    tpu.vector_store %arg12[%c0_35, %c0_36], %66 {strides = array<i32>} : memref<32x128xbf16, #tpu.memory_space<vmem>>, vector<32x64xbf16>,
    %68 = arith.truncf %64 : vector<32x64xf32> to vector<32x64xbf16>
    %c0_37 = arith.constant 0 : index
    %c64 = arith.constant 64 : index
    %69 = vector.load %arg12[%c0_37, %c64] : memref<32x128xbf16, #tpu.memory_space<vmem>>, vector<32x64xbf16>
    tpu.vector_store %arg12[%c0_37, %c64], %68 {strides = array<i32>} : memref<32x128xbf16, #tpu.memory_space<vmem>>, vector<32x64xbf16>,
    %c0_38 = arith.constant 0 : index
    %c0_39 = arith.constant 0 : index
    %70 = vector.load %arg12[%c0_38, %c0_39] : memref<32x128xbf16, #tpu.memory_space<vmem>>, vector<32x128xbf16>
    %c0_40 = arith.constant 0 : index
    %c0_41 = arith.constant 0 : index
    %71 = vector.load %arg8[%c0_40, %c0_41] : memref<128x128xbf16, #tpu.memory_space<vmem>>, vector<128x128xbf16>
    %cst_42 = arith.constant dense<0.000000e+00> : vector<32x128xf32>
    %72 = tpu.matmul %70, %71, %cst_42 {dimension_numbers = #tpu.dot_dimension_numbers<[1], [0], [0], [1], [0, 0, 1, 1], [], []>} : vector<32x128xbf16>, vector<128x128xbf16>, vector<32x128xf32> -> vector<32x128xf32>
    %c0_43 = arith.constant 0 : index
    %c0_44 = arith.constant 0 : index
    %73 = vector.load %arg9[%c0_43, %c0_44] : memref<1x128xf32, #tpu.memory_space<vmem>>, vector<1x128xf32>
    %74 = vector.broadcast %73 : vector<1x128xf32> to vector<32x128xf32>
    %75 = arith.addf %72, %74 : vector<32x128xf32>
    %cst_45 = arith.constant dense<0xFF800000> : vector<32xf32>
    %76 = vector.multi_reduction <maximumf>, %75, %cst_45 [1] : vector<32x128xf32> to vector<32xf32>
    %77 = vector.shape_cast %76 : vector<32xf32> to vector<32x1xf32>
    %78 = vector.broadcast %77 : vector<32x1xf32> to vector<32x128xf32>
    %79 = arith.subf %75, %78 : vector<32x128xf32>
    %80 = math.exp %79 : vector<32x128xf32>
    %cst_46 = arith.constant dense<0.000000e+00> : vector<32xf32>
    %81 = vector.multi_reduction <add>, %80, %cst_46 [1] : vector<32x128xf32> to vector<32xf32>
    %82 = vector.shape_cast %81 : vector<32xf32> to vector<32x1xf32>
    %83 = math.log %82 : vector<32x1xf32>
    %84 = arith.addf %83, %77 : vector<32x1xf32>
    %85 = vector.broadcast %84 : vector<32x1xf32> to vector<32x128xf32>
    %86 = arith.subf %75, %85 : vector<32x128xf32>
    %c0_47 = arith.constant 0 : index
    %c0_48 = arith.constant 0 : index
    %c0_49 = arith.constant 0 : index
    %87 = vector.load %arg10[%c0_47, %c0_48, %c0_49] : memref<1x32x384xf32, #tpu.memory_space<vmem>>, vector<1x32x128xf32>
    %88 = vector.shape_cast %87 : vector<1x32x128xf32> to vector<32x128xf32>
    %89 = vector.shape_cast %86 : vector<32x128xf32> to vector<1x32x128xf32>
    tpu.vector_store %arg10[%c0_47, %c0_48, %c0_49], %89 {strides = array<i32>} : memref<1x32x384xf32, #tpu.memory_space<vmem>>, vector<1x32x128xf32>,
    %c0_50 = arith.constant 0 : index
    %c0_51 = arith.constant 0 : index
    %c128 = arith.constant 128 : index
    %90 = vector.load %arg10[%c0_50, %c0_51, %c128] : memref<1x32x384xf32, #tpu.memory_space<vmem>>, vector<1x32x64xf32>
    %91 = vector.shape_cast %90 : vector<1x32x64xf32> to vector<32x64xf32>
    %92 = vector.shape_cast %43 : vector<32x64xf32> to vector<1x32x64xf32>
    tpu.vector_store %arg10[%c0_50, %c0_51, %c128], %92 {strides = array<i32>} : memref<1x32x384xf32, #tpu.memory_space<vmem>>, vector<1x32x64xf32>,
    %c0_52 = arith.constant 0 : index
    %c0_53 = arith.constant 0 : index
    %c192 = arith.constant 192 : index
    %93 = vector.load %arg10[%c0_52, %c0_53, %c192] : memref<1x32x384xf32, #tpu.memory_space<vmem>>, vector<1x32x64xf32>
    %94 = vector.shape_cast %93 : vector<1x32x64xf32> to vector<32x64xf32>
    %95 = vector.shape_cast %64 : vector<32x64xf32> to vector<1x32x64xf32>
    tpu.vector_store %arg10[%c0_52, %c0_53, %c192], %95 {strides = array<i32>} : memref<1x32x384xf32, #tpu.memory_space<vmem>>, vector<1x32x64xf32>,
    %c0_54 = arith.constant 0 : index
    %c0_55 = arith.constant 0 : index
    %c256 = arith.constant 256 : index
    %96 = vector.load %arg10[%c0_54, %c0_55, %c256] : memref<1x32x384xf32, #tpu.memory_space<vmem>>, vector<1x32x64xf32>
    %97 = vector.shape_cast %96 : vector<1x32x64xf32> to vector<32x64xf32>
    %98 = vector.shape_cast %41 : vector<32x64xf32> to vector<1x32x64xf32>
    tpu.vector_store %arg10[%c0_54, %c0_55, %c256], %98 {strides = array<i32>} : memref<1x32x384xf32, #tpu.memory_space<vmem>>, vector<1x32x64xf32>,
    %c0_56 = arith.constant 0 : index
    %c0_57 = arith.constant 0 : index
    %c320 = arith.constant 320 : index
    %99 = vector.load %arg10[%c0_56, %c0_57, %c320] : memref<1x32x384xf32, #tpu.memory_space<vmem>>, vector<1x32x16xf32>
    %100 = vector.shape_cast %99 : vector<1x32x16xf32> to vector<32x16xf32>
    %101 = vector.shape_cast %60 : vector<32x16xf32> to vector<1x32x16xf32>
    tpu.vector_store %arg10[%c0_56, %c0_57, %c320], %101 {strides = array<i32>} : memref<1x32x384xf32, #tpu.memory_space<vmem>>, vector<1x32x16xf32>,
    %cst_58 = arith.constant 0.000000e+00 : f32
    %102 = vector.broadcast %cst_58 : f32 to vector<32x48xf32>
    %c0_59 = arith.constant 0 : index
    %c0_60 = arith.constant 0 : index
    %c336 = arith.constant 336 : index
    %103 = vector.load %arg10[%c0_59, %c0_60, %c336] : memref<1x32x384xf32, #tpu.memory_space<vmem>>, vector<1x32x48xf32>
    %104 = vector.shape_cast %103 : vector<1x32x48xf32> to vector<32x48xf32>
    %105 = vector.shape_cast %102 : vector<32x48xf32> to vector<1x32x48xf32>
    tpu.vector_store %arg10[%c0_59, %c0_60, %c336], %105 {strides = array<i32>} : memref<1x32x384xf32, #tpu.memory_space<vmem>>, vector<1x32x48xf32>,
    return
  }
  func.func @transform_0(%arg0: i32) -> (i32, i32, i32) {
    %c0_i32 = arith.constant 0 : i32
    %c0_i32_0 = arith.constant 0 : i32
    %c0_i32_1 = arith.constant 0 : i32
    return %arg0, %c0_i32, %c0_i32_0 : i32, i32, i32
  }
  func.func @transform_1(%arg0: i32) -> (i32, i32) {
    %c0_i32 = arith.constant 0 : i32
    %c0_i32_0 = arith.constant 0 : i32
    %c0_i32_1 = arith.constant 0 : i32
    return %c0_i32, %c0_i32_0 : i32, i32
  }
  func.func @transform_2(%arg0: i32) -> (i32, i32) {
    %c0_i32 = arith.constant 0 : i32
    %c0_i32_0 = arith.constant 0 : i32
    %c0_i32_1 = arith.constant 0 : i32
    return %c0_i32, %c0_i32_0 : i32, i32
  }
  func.func @transform_3(%arg0: i32) -> (i32, i32) {
    %c0_i32 = arith.constant 0 : i32
    %c0_i32_0 = arith.constant 0 : i32
    %c0_i32_1 = arith.constant 0 : i32
    return %c0_i32, %c0_i32_0 : i32, i32
  }
  func.func @transform_4(%arg0: i32) -> (i32, i32, i32) {
    %c0_i32 = arith.constant 0 : i32
    %c0_i32_0 = arith.constant 0 : i32
    %c0_i32_1 = arith.constant 0 : i32
    %c0_i32_2 = arith.constant 0 : i32
    return %c0_i32, %c0_i32_0, %c0_i32_1 : i32, i32, i32
  }
  func.func @transform_5(%arg0: i32) -> (i32, i32) {
    %c0_i32 = arith.constant 0 : i32
    %c0_i32_0 = arith.constant 0 : i32
    %c0_i32_1 = arith.constant 0 : i32
    return %c0_i32, %c0_i32_0 : i32, i32
  }
  func.func @transform_6(%arg0: i32) -> (i32, i32) {
    %c0_i32 = arith.constant 0 : i32
    %c0_i32_0 = arith.constant 0 : i32
    %c0_i32_1 = arith.constant 0 : i32
    return %c0_i32, %c0_i32_0 : i32, i32
  }
  func.func @transform_7(%arg0: i32) -> (i32, i32) {
    %c0_i32 = arith.constant 0 : i32
    %c0_i32_0 = arith.constant 0 : i32
    %c0_i32_1 = arith.constant 0 : i32
    return %c0_i32, %c0_i32_0 : i32, i32
  }
  func.func @transform_8(%arg0: i32) -> (i32, i32) {
    %c0_i32 = arith.constant 0 : i32
    %c0_i32_0 = arith.constant 0 : i32
    %c0_i32_1 = arith.constant 0 : i32
    return %c0_i32, %c0_i32_0 : i32, i32
  }
  func.func @transform_9(%arg0: i32) -> (i32, i32, i32) {
    %c0_i32 = arith.constant 0 : i32
    %c0_i32_0 = arith.constant 0 : i32
    %c0_i32_1 = arith.constant 0 : i32
    return %arg0, %c0_i32, %c0_i32_0 : i32, i32, i32
  }
}

</mosaic_0001>

<llo_original>
// kernel: attn_decoder_forward.1
$region0: #{attn_decoder_forward.1}
  #allocation0 [shape = 'u32[]', space=smem, size = 0x4, offset = 0x4, fixed_abs, tag = 'smem constant byte address 0x4 - core index']
  #allocation1 [shape = 'u32[72,128]{1,0:T(1,128)}', space=vmem, size = 0x9000, scoped, tag = 'internal scratch']
  #allocation2 [shape = 'bf16[32,160]{1,0:T(8,128)(2,1)}', space=vmem, size = 0x4000, scoped, tag = 'scratch operand']
  #allocation3 [shape = 'bf16[32,128]{1,0:T(8,128)(2,1)}', space=vmem, size = 0x2000, scoped, tag = 'scratch operand']
  #allocation4 [shape = 'f32[32,64]{1,0:T(8,128)}', space=vmem, size = 0x4000, scoped, tag = 'scratch operand']
  #allocation5 [shape = 'f32[32,64]{1,0:T(8,128)}', space=vmem, size = 0x4000, scoped, tag = 'scratch operand']
  #allocation6 [shape = 'f32[32,64]{1,0:T(8,128)}', space=vmem, size = 0x4000, scoped, tag = 'scratch operand']
  %s0 = inlined_call_operand.vmem [shape: bf16[1,32,32], index: 0, kind: input, shape index: {}]
  %s1 = inlined_call_operand.vmem [shape: f32[32,64], index: 1, kind: input, shape index: {}]
  %s2 = inlined_call_operand.vmem [shape: f32[32,64], index: 2, kind: input, shape index: {}]
  %s3 = inlined_call_operand.vmem [shape: f32[32,64], index: 3, kind: input, shape index: {}]
  %s4 = inlined_call_operand.vmem [shape: bf16[32,16,64], index: 4, kind: input, shape index: {}]
  %s5 = inlined_call_operand.vmem [shape: bf16[160,256], index: 5, kind: input, shape index: {}]
  %s6 = inlined_call_operand.vmem [shape: f32[1,256], index: 6, kind: input, shape index: {}]
  %s7 = inlined_call_operand.vmem [shape: bf16[128,128], index: 7, kind: input, shape index: {}]
  %s8 = inlined_call_operand.vmem [shape: f32[1,128], index: 8, kind: input, shape index: {}]
  %s9 = inlined_call_operand.vmem [shape: f32[1,32,384], index: 9, kind: output, shape index: {}]
  %s10 = sld [smem:[#allocation0]]
  $region50: #{attn_decoder_forward.1} parent=0
    _
  %s12 = ssub.s32 1, %s10
  %s13 = scalar_select 0, %s12, %s10
  // Predicated region
  $region2: #{attn_decoder_forward.1} parent=0 // pred_check
    _
  $region3: #{attn_decoder_forward.1} parent=0 // pred_check_branch
    %15 = sbr.rel (0) target = $region5
  $region4: #{attn_decoder_forward.1} parent=0 // pred_region
    _
  $region5: #{attn_decoder_forward.1} parent=0 // pred_fallthru
    _
  // Predicated region
  $region6: #{attn_decoder_forward.1} parent=0 // pred_check
    _
  $region7: #{attn_decoder_forward.1} parent=0 // pred_check_branch
    %17 = sbr.rel (0) target = $region9
  $region8: #{attn_decoder_forward.1} parent=0 // pred_region
    _
  $region9: #{attn_decoder_forward.1} parent=0 // pred_fallthru
    _
  // Predicated region
  $region10: #{attn_decoder_forward.1} parent=0 // pred_check
    _
  $region11: #{attn_decoder_forward.1} parent=0 // pred_check_branch
    %19 = sbr.rel (0) target = $region13
  $region12: #{attn_decoder_forward.1} parent=0 // pred_region
    _
  $region13: #{attn_decoder_forward.1} parent=0 // pred_fallthru
    _
  // Predicated region
  $region14: #{attn_decoder_forward.1} parent=0 // pred_check
    _
  $region15: #{attn_decoder_forward.1} parent=0 // pred_check_branch
    %21 = sbr.rel (0) target = $region17
  $region16: #{attn_decoder_forward.1} parent=0 // pred_region
    _
  $region17: #{attn_decoder_forward.1} parent=0 // pred_fallthru
    _
  // Predicated region
  $region18: #{attn_decoder_forward.1} parent=0 // pred_check
    _
  $region19: #{attn_decoder_forward.1} parent=0 // pred_check_branch
    %23 = sbr.rel (0) target = $region21
  $region20: #{attn_decoder_forward.1} parent=0 // pred_region
    _
  $region21: #{attn_decoder_forward.1} parent=0 // pred_fallthru
    _
  // Predicated region
  $region22: #{attn_decoder_forward.1} parent=0 // pred_check
    _
  $region23: #{attn_decoder_forward.1} parent=0 // pred_check_branch
    %25 = sbr.rel (0) target = $region25
  $region24: #{attn_decoder_forward.1} parent=0 // pred_region
    _
  $region25: #{attn_decoder_forward.1} parent=0 // pred_fallthru
    _
  // Predicated region
  $region26: #{attn_decoder_forward.1} parent=0 // pred_check
    _
  $region27: #{attn_decoder_forward.1} parent=0 // pred_check_branch
    %27 = sbr.rel (0) target = $region29
  $region28: #{attn_decoder_forward.1} parent=0 // pred_region
    _
  $region29: #{attn_decoder_forward.1} parent=0 // pred_fallthru
    _
  // Predicated region
  $region30: #{attn_decoder_forward.1} parent=0 // pred_check
    _
  $region31: #{attn_decoder_forward.1} parent=0 // pred_check_branch
    %29 = sbr.rel (0) target = $region33
  $region32: #{attn_decoder_forward.1} parent=0 // pred_region
    _
  $region33: #{attn_decoder_forward.1} parent=0 // pred_fallthru
    _
  // Predicated region
  $region34: #{attn_decoder_forward.1} parent=0 // pred_check
    _
  $region35: #{attn_decoder_forward.1} parent=0 // pred_check_branch
    %31 = sbr.rel (0) target = $region37
  $region36: #{attn_decoder_forward.1} parent=0 // pred_region
    _
  $region37: #{attn_decoder_forward.1} parent=0 // pred_fallthru
    _
  %p33 = scmp.eq.s32.totalorder 0, 0
  // Predicated region
  $region38: #{attn_decoder_forward.1} parent=0 // pred_check
    %p34 = pneg %p33
  $region39: #{attn_decoder_forward.1} parent=0 // pred_check_branch
    %36 = sbr.rel (%p34) target = $region41
  $region40: #{attn_decoder_forward.1} parent=0 // pred_region
    %v37 = vld [vmem:[%s2] sm:$0xff]
    %v38 = vld [vmem:[%s2 + $0x8] sm:$0xff]
    %v39 = vld [vmem:[%s2 + $0x10] sm:$0xff]
    %v40 = vld [vmem:[%s2 + $0x18] sm:$0xff]
    %vm41 = vcmask 523264
    %42 = vst.msk [vmem:[#allocation4] sm:$0xff] %vm41, %v37
    %43 = vst.msk [vmem:[#allocation4 + $0x8] sm:$0xff] %vm41, %v38
    %44 = vst.msk [vmem:[#allocation4 + $0x10] sm:$0xff] %vm41, %v39
    %45 = vst.msk [vmem:[#allocation4 + $0x18] sm:$0xff] %vm41, %v40
    %v46 = vld [vmem:[%s3] sm:$0xff]
    %v47 = vld [vmem:[%s3 + $0x8] sm:$0xff]
    %v48 = vld [vmem:[%s3 + $0x10] sm:$0xff]
    %v49 = vld [vmem:[%s3 + $0x18] sm:$0xff]
    %50 = vst.msk [vmem:[#allocation5] sm:$0xff] %vm41, %v46
    %51 = vst.msk [vmem:[#allocation5 + $0x8] sm:$0xff] %vm41, %v47
    %52 = vst.msk [vmem:[#allocation5 + $0x10] sm:$0xff] %vm41, %v48
    %53 = vst.msk [vmem:[#allocation5 + $0x18] sm:$0xff] %vm41, %v49
    %v54 = vld [vmem:[%s1] sm:$0xff]
    %v55 = vld [vmem:[%s1 + $0x8] sm:$0xff]
    %v56 = vld [vmem:[%s1 + $0x10] sm:$0xff]
    %v57 = vld [vmem:[%s1 + $0x18] sm:$0xff]
    %58 = vst.msk [vmem:[#allocation6] sm:$0xff] %vm41, %v54
    %59 = vst.msk [vmem:[#allocation6 + $0x8] sm:$0xff] %vm41, %v55
    %60 = vst.msk [vmem:[#allocation6 + $0x10] sm:$0xff] %vm41, %v56
    %61 = vst.msk [vmem:[#allocation6 + $0x18] sm:$0xff] %vm41, %v57
  $region41: #{attn_decoder_forward.1} parent=0 // pred_fallthru
    _
  %v62 = vld [vmem:[%s0] sm:$0xf]
  %v63 = vld [vmem:[%s0 + $0x4] sm:$0xf]
  %v64 = vld [vmem:[%s0 + $0x8] sm:$0xf]
  %v65 = vld [vmem:[%s0 + $0xc] sm:$0xf]
  %vm66 = vcmask 257024
  %67 = vst.msk [vmem:[#allocation2] sm:$0xf] %vm66, %v62
  %68 = vst.msk [vmem:[#allocation2 + $0x8] sm:$0xf] %vm66, %v63
  %69 = vst.msk [vmem:[#allocation2 + $0x10] sm:$0xf] %vm66, %v64
  %70 = vst.msk [vmem:[#allocation2 + $0x18] sm:$0xf] %vm66, %v65
  %v71 = vld [vmem:[#allocation6] sm:$0xff]
  %v72 = vld [vmem:[#allocation6 + $0x8] sm:$0xff]
  %v73 = vld [vmem:[#allocation6 + $0x10] sm:$0xff]
  %v74 = vld [vmem:[#allocation6 + $0x18] sm:$0xff]
  %v75 = vpack.c.bf16 %v71, %v71
  %v76 = vpack.c.bf16 %v72, %v72
  %v77 = vpack.c.bf16 %v73, %v73
  %v78 = vpack.c.bf16 %v74, %v74
  %83 = vrot.lane.b32.xlu0 %v75, 32
  %v84 = vpop.permute.xlu0 %83
  %85 = vrot.lane.b32.xlu0 %v76, 32
  %v86 = vpop.permute.xlu0 %85
  %87 = vrot.lane.b32.xlu0 %v77, 32
  %v88 = vpop.permute.xlu0 %87
  %89 = vrot.lane.b32.xlu0 %v78, 32
  %v90 = vpop.permute.xlu0 %89
  %vm95 = vcmask 781568
  %96 = vst.msk [vmem:[#allocation2] sm:$0xf] %vm95, %v84
  %97 = vst.msk [vmem:[#allocation2 + $0x8] sm:$0xf] %vm95, %v86
  %98 = vst.msk [vmem:[#allocation2 + $0x10] sm:$0xf] %vm95, %v88
  %99 = vst.msk [vmem:[#allocation2 + $0x18] sm:$0xf] %vm95, %v90
  %v100 = vld [vmem:[#allocation4] sm:$0xff]
  %v101 = vld [vmem:[#allocation4 + $0x8] sm:$0xff]
  %v102 = vld [vmem:[#allocation4 + $0x10] sm:$0xff]
  %v103 = vld [vmem:[#allocation4 + $0x18] sm:$0xff]
  %v104 = vpack.c.bf16 %v100, %v100
  %v105 = vpack.c.bf16 %v101, %v101
  %v106 = vpack.c.bf16 %v102, %v102
  %v107 = vpack.c.bf16 %v103, %v103
  %112 = vrot.lane.b32.xlu0 %v104, 96
  %v113 = vpop.permute.xlu0 %112
  %114 = vrot.lane.b32.xlu0 %v105, 96
  %v115 = vpop.permute.xlu0 %114
  %116 = vrot.lane.b32.xlu0 %v106, 96
  %v117 = vpop.permute.xlu0 %116
  %118 = vrot.lane.b32.xlu0 %v107, 96
  %v119 = vpop.permute.xlu0 %118
  %v120 = vrot.slane %v113, 4
  %v121 = vrot.slane %v115, 4
  %v122 = vrot.slane %v117, 4
  %v123 = vrot.slane %v119, 4
  %vm124 = vcmask 785408
  %v125 = vsel %vm124, %v120, %v113
  %v126 = vsel %vm124, %v121, %v115
  %v127 = vsel %vm124, %v122, %v117
  %v128 = vsel %vm124, %v123, %v119
  %vm133 = vcmask 1044224
  %vm134 = vcmask 261124
  %vm135 = vmor %vm134, %vm133
  %136 = vst.msk [vmem:[#allocation2] sm:$0xff] %vm135, %v125
  %137 = vst.msk [vmem:[#allocation2 + $0x8] sm:$0xff] %vm135, %v126
  %138 = vst.msk [vmem:[#allocation2 + $0x10] sm:$0xff] %vm135, %v127
  %139 = vst.msk [vmem:[#allocation2 + $0x18] sm:$0xff] %vm135, %v128
  %v140 = vld [vmem:[#allocation2] sm:$0xff]
  %v141 = vld [vmem:[#allocation2 + $0x8] sm:$0xff]
  %v142 = vld [vmem:[#allocation2 + $0x10] sm:$0xff]
  %v143 = vld [vmem:[#allocation2 + $0x18] sm:$0xff]
  %v144 = vld [vmem:[%s5] sm:$0xff]
  %v145 = vld [vmem:[%s5 + $0x8] sm:$0xff]
  %v146 = vld [vmem:[%s5 + $0x10] sm:$0xff]
  %v147 = vld [vmem:[%s5 + $0x18] sm:$0xff]
  %v148 = vld [vmem:[%s5 + $0x20] sm:$0xff]
  %v149 = vld [vmem:[%s5 + $0x28] sm:$0xff]
  %v150 = vld [vmem:[%s5 + $0x30] sm:$0xff]
  %v151 = vld [vmem:[%s5 + $0x38] sm:$0xff]
  %v152 = vld [vmem:[%s5 + $0x40] sm:$0xff]
  %v153 = vld [vmem:[%s5 + $0x48] sm:$0xff]
  %v154 = vld [vmem:[%s5 + $0x50] sm:$0xff]
  %v155 = vld [vmem:[%s5 + $0x58] sm:$0xff]
  %v156 = vld [vmem:[%s5 + $0x60] sm:$0xff]
  %v157 = vld [vmem:[%s5 + $0x68] sm:$0xff]
  %v158 = vld [vmem:[%s5 + $0x70] sm:$0xff]
  %v159 = vld [vmem:[%s5 + $0x78] sm:$0xff]
  %v160 = vld [vmem:[%s5 + $0x80] sm:$0xff]
  %v161 = vld [vmem:[%s5 + $0x88] sm:$0xff]
  %v162 = vld [vmem:[%s5 + $0x90] sm:$0xff]
  %v163 = vld [vmem:[%s5 + $0x98] sm:$0xff]
  %v164 = vld [vmem:[%s6] sm:$0x3]
  %v166 = vperm.slane %v164, 0
  %v167 = vperm.slane %v164, 1
  %v174 = vunpack.c.l.b16 %v140
  %v175 = vunpack.c.h.b16 %v140
  %v176 = vunpack.c.l.b16 %v141
  %v177 = vunpack.c.h.b16 %v141
  %v178 = vunpack.c.l.b16 %v142
  %v179 = vunpack.c.h.b16 %v142
  %v180 = vunpack.c.l.b16 %v143
  %v181 = vunpack.c.h.b16 %v143
  %v182 = vpack.c.b16 %v176, %v174
  %v183 = vpack.c.b16 %v177, %v175
  %v184 = vpack.c.b16 %v180, %v178
  %v185 = vpack.c.b16 %v181, %v179
  %v208 = vunpack.c.l.b16 %v144
  %v209 = vunpack.c.h.b16 %v144
  %v210 = vunpack.c.l.b16 %v145
  %v211 = vunpack.c.h.b16 %v145
  %v212 = vunpack.c.l.b16 %v146
  %v213 = vunpack.c.h.b16 %v146
  %v214 = vunpack.c.l.b16 %v147
  %v215 = vunpack.c.h.b16 %v147
  %v216 = vunpack.c.l.b16 %v148
  %v217 = vunpack.c.h.b16 %v148
  %v218 = vunpack.c.l.b16 %v149
  %v219 = vunpack.c.h.b16 %v149
  %v220 = vunpack.c.l.b16 %v150
  %v221 = vunpack.c.h.b16 %v150
  %v222 = vunpack.c.l.b16 %v151
  %v223 = vunpack.c.h.b16 %v151
  %v224 = vunpack.c.l.b16 %v152
  %v225 = vunpack.c.h.b16 %v152
  %v226 = vunpack.c.l.b16 %v153
  %v227 = vunpack.c.h.b16 %v153
  %v228 = vunpack.c.l.b16 %v154
  %v229 = vunpack.c.h.b16 %v154
  %v230 = vunpack.c.l.b16 %v155
  %v231 = vunpack.c.h.b16 %v155
  %v232 = vunpack.c.l.b16 %v156
  %v233 = vunpack.c.h.b16 %v156
  %v234 = vunpack.c.l.b16 %v157
  %v235 = vunpack.c.h.b16 %v157
  %v236 = vunpack.c.l.b16 %v158
  %v237 = vunpack.c.h.b16 %v158
  %v238 = vunpack.c.l.b16 %v159
  %v239 = vunpack.c.h.b16 %v159
  %v240 = vunpack.c.l.b16 %v160
  %v241 = vunpack.c.h.b16 %v160
  %v242 = vunpack.c.l.b16 %v161
  %v243 = vunpack.c.h.b16 %v161
  %v244 = vunpack.c.l.b16 %v162
  %v245 = vunpack.c.h.b16 %v162
  %v246 = vunpack.c.l.b16 %v163
  %v247 = vunpack.c.h.b16 %v163
  %v248 = vpack.c.b16 %v210, %v208
  %v249 = vpack.c.b16 %v211, %v209
  %v250 = vpack.c.b16 %v214, %v212
  %v251 = vpack.c.b16 %v215, %v213
  %v252 = vpack.c.b16 %v218, %v216
  %v253 = vpack.c.b16 %v219, %v217
  %v254 = vpack.c.b16 %v222, %v220
  %v255 = vpack.c.b16 %v223, %v221
  %v256 = vpack.c.b16 %v226, %v224
  %v257 = vpack.c.b16 %v227, %v225
  %v258 = vpack.c.b16 %v230, %v228
  %v259 = vpack.c.b16 %v231, %v229
  %v260 = vpack.c.b16 %v234, %v232
  %v261 = vpack.c.b16 %v235, %v233
  %v262 = vpack.c.b16 %v238, %v236
  %v263 = vpack.c.b16 %v239, %v237
  %v264 = vpack.c.b16 %v242, %v240
  %v265 = vpack.c.b16 %v243, %v241
  %v266 = vpack.c.b16 %v246, %v244
  %v267 = vpack.c.b16 %v247, %v245
  %vm288 = vcmask 261120
  %v290 = vsel %vm288, %v183, 0
  %v293 = vsel %vm288, %v185, 0
  %295 = vmatpush.bf16.msra.mxu0 %v262
  %296 = vmatpush.bf16.msra.mxu0 %v260
  %297 = vmatpush.bf16.msra.mxu0 %v258
  %298 = vmatpush.bf16.msra.mxu0 %v256
  %299 = vmatpush.bf16.msra.mxu0 %v254
  %300 = vmatpush.bf16.msra.mxu0 %v252
  %301 = vmatpush.bf16.msra.mxu0 %v250
  %302 = vmatpush.bf16.msra.mxu0 %v248
  %303 = vmatmul.bf16.gmra.mxu0 %v182
  %v304 = vpop.f32.mrf.mxu0
  %v305 = vadd.f32 %v166, %v304
  %v306 = vpop.f32.mrf.mxu0
  %v307 = vadd.f32 %v166, %v306
  %308 = vmatmul.bf16.gmra.mxu0 %v184
  %v309 = vpop.f32.mrf.mxu0
  %v310 = vadd.f32 %v166, %v309
  %v311 = vpop.f32.mrf.mxu0
  %v312 = vadd.f32 %v166, %v311
  %313 = vdwg.mxu0
  %314 = vmatpush.bf16.msra.mxu0 0
  %315 = vmatpush.bf16.msra.mxu0 0
  %316 = vmatpush.bf16.msra.mxu0 0
  %317 = vmatpush.bf16.msra.mxu0 0
  %318 = vmatpush.bf16.msra.mxu0 0
  %319 = vmatpush.bf16.msra.mxu0 0
  %320 = vmatpush.bf16.msra.mxu0 %v266
  %321 = vmatpush.bf16.msra.mxu0 %v264
  %322 = vmatmul.bf16.gmra.mxu0 %v290
  %v323 = vpop.f32.mrf.mxu0
  %v324 = vadd.f32 %v305, %v323
  %v325 = vpop.f32.mrf.mxu0
  %v326 = vadd.f32 %v307, %v325
  %327 = vmatmul.bf16.gmra.mxu0 %v293
  %v328 = vpop.f32.mrf.mxu0
  %v329 = vadd.f32 %v310, %v328
  %v330 = vpop.f32.mrf.mxu0
  %v331 = vadd.f32 %v312, %v330
  %332 = vdwg.mxu0
  %333 = vmatpush.bf16.msra.mxu0 %v263
  %334 = vmatpush.bf16.msra.mxu0 %v261
  %335 = vmatpush.bf16.msra.mxu0 %v259
  %336 = vmatpush.bf16.msra.mxu0 %v257
  %337 = vmatpush.bf16.msra.mxu0 %v255
  %338 = vmatpush.bf16.msra.mxu0 %v253
  %339 = vmatpush.bf16.msra.mxu0 %v251
  %340 = vmatpush.bf16.msra.mxu0 %v249
  %341 = vmatmul.bf16.gmra.mxu0 %v182
  %v342 = vpop.f32.mrf.mxu0
  %v343 = vadd.f32 %v167, %v342
  %v344 = vpop.f32.mrf.mxu0
  %v345 = vadd.f32 %v167, %v344
  %346 = vmatmul.bf16.gmra.mxu0 %v184
  %v347 = vpop.f32.mrf.mxu0
  %v348 = vadd.f32 %v167, %v347
  %v349 = vpop.f32.mrf.mxu0
  %v350 = vadd.f32 %v167, %v349
  %351 = vdwg.mxu0
  %352 = vmatpush.bf16.msra.mxu0 0
  %353 = vmatpush.bf16.msra.mxu0 0
  %354 = vmatpush.bf16.msra.mxu0 0
  %355 = vmatpush.bf16.msra.mxu0 0
  %356 = vmatpush.bf16.msra.mxu0 0
  %357 = vmatpush.bf16.msra.mxu0 0
  %358 = vmatpush.bf16.msra.mxu0 %v267
  %359 = vmatpush.bf16.msra.mxu0 %v265
  %360 = vmatmul.bf16.gmra.mxu0 %v290
  %v361 = vpop.f32.mrf.mxu0
  %v362 = vadd.f32 %v343, %v361
  %v363 = vpop.f32.mrf.mxu0
  %v364 = vadd.f32 %v345, %v363
  %365 = vmatmul.bf16.gmra.mxu0 %v293
  %v366 = vpop.f32.mrf.mxu0
  %v367 = vadd.f32 %v348, %v366
  %v368 = vpop.f32.mrf.mxu0
  %v369 = vadd.f32 %v350, %v368
  %370 = vdwg.mxu0
  %v371 = vxor.u32 %v324, 2147483648
  %v372 = vxor.u32 %v326, 2147483648
  %v373 = vxor.u32 %v329, 2147483648
  %v374 = vxor.u32 %v331, 2147483648
  %v375 = vmul.f32 %v371, 1.442695
  %v376 = vpow.pop %v375
  %v377 = vmul.f32 %v372, 1.442695
  %v378 = vpow.pop %v377
  %v379 = vmul.f32 %v373, 1.442695
  %v380 = vpow.pop %v379
  %v381 = vmul.f32 %v374, 1.442695
  %v382 = vpow.pop %v381
  %v383 = vadd.f32 %v376, 1.0
  %v384 = vadd.f32 %v378, 1.0
  %v385 = vadd.f32 %v380, 1.0
  %v386 = vadd.f32 %v382, 1.0
  %v387 = vrcp.pop %v383
  %v388 = vmul.f32 %v383, %v387
  %v389 = vsub.f32 1.0, %v388
  %v390 = vmul.f32 %v387, %v389
  %v391 = vadd.f32 %v387, %v390
  %vm392 = vweird.f32 %v383
  %vm393 = vweird.f32 %v387
  %vm394 = vmor %vm392, %vm393
  %v395 = vsel %vm394, %v387, %v391
  %v396 = vand.u32 2147483647, %v383
  %vm397 = vcmp.eq.f32.partialorder %v396, 8.507059e+37
  %v398 = vand.u32 %v383, 2147483648
  %v399 = vor.u32 1.1754944e-38, %v398
  %v400 = vsel %vm397, %v399, %v395
  %v401 = vmul.f32 1.0, %v400
  %v402 = vrcp.pop %v384
  %v403 = vmul.f32 %v384, %v402
  %v404 = vsub.f32 1.0, %v403
  %v405 = vmul.f32 %v402, %v404
  %v406 = vadd.f32 %v402, %v405
  %vm407 = vweird.f32 %v384
  %vm408 = vweird.f32 %v402
  %vm409 = vmor %vm407, %vm408
  %v410 = vsel %vm409, %v402, %v406
  %v411 = vand.u32 2147483647, %v384
  %vm412 = vcmp.eq.f32.partialorder %v411, 8.507059e+37
  %v413 = vand.u32 %v384, 2147483648
  %v414 = vor.u32 1.1754944e-38, %v413
  %v415 = vsel %vm412, %v414, %v410
  %v416 = vmul.f32 1.0, %v415
  %v417 = vrcp.pop %v385
  %v418 = vmul.f32 %v385, %v417
  %v419 = vsub.f32 1.0, %v418
  %v420 = vmul.f32 %v417, %v419
  %v421 = vadd.f32 %v417, %v420
  %vm422 = vweird.f32 %v385
  %vm423 = vweird.f32 %v417
  %vm424 = vmor %vm422, %vm423
  %v425 = vsel %vm424, %v417, %v421
  %v426 = vand.u32 2147483647, %v385
  %vm427 = vcmp.eq.f32.partialorder %v426, 8.507059e+37
  %v428 = vand.u32 %v385, 2147483648
  %v429 = vor.u32 1.1754944e-38, %v428
  %v430 = vsel %vm427, %v429, %v425
  %v431 = vmul.f32 1.0, %v430
  %v432 = vrcp.pop %v386
  %v433 = vmul.f32 %v386, %v432
  %v434 = vsub.f32 1.0, %v433
  %v435 = vmul.f32 %v432, %v434
  %v436 = vadd.f32 %v432, %v435
  %vm437 = vweird.f32 %v386
  %vm438 = vweird.f32 %v432
  %vm439 = vmor %vm437, %vm438
  %v440 = vsel %vm439, %v432, %v436
  %v441 = vand.u32 2147483647, %v386
  %vm442 = vcmp.eq.f32.partialorder %v441, 8.507059e+37
  %v443 = vand.u32 %v386, 2147483648
  %v444 = vor.u32 1.1754944e-38, %v443
  %v445 = vsel %vm442, %v444, %v440
  %v446 = vmul.f32 1.0, %v445
  %v447 = vtanh.pop %v362
  %v448 = vtanh.pop %v364
  %v449 = vtanh.pop %v367
  %v450 = vtanh.pop %v369
  %v451 = vxor.u32 %v362, 2147483648
  %v452 = vxor.u32 %v364, 2147483648
  %v453 = vxor.u32 %v367, 2147483648
  %v454 = vxor.u32 %v369, 2147483648
  %v455 = vmul.f32 %v451, 1.442695
  %v456 = vpow.pop %v455
  %v457 = vmul.f32 %v452, 1.442695
  %v458 = vpow.pop %v457
  %v459 = vmul.f32 %v453, 1.442695
  %v460 = vpow.pop %v459
  %v461 = vmul.f32 %v454, 1.442695
  %v462 = vpow.pop %v461
  %v463 = vadd.f32 %v456, 1.0
  %v464 = vadd.f32 %v458, 1.0
  %v465 = vadd.f32 %v460, 1.0
  %v466 = vadd.f32 %v462, 1.0
  %v467 = vrcp.pop %v463
  %v468 = vmul.f32 %v463, %v467
  %v469 = vsub.f32 1.0, %v468
  %v470 = vmul.f32 %v467, %v469
  %v471 = vadd.f32 %v467, %v470
  %vm472 = vweird.f32 %v463
  %vm473 = vweird.f32 %v467
  %vm474 = vmor %vm472, %vm473
  %v475 = vsel %vm474, %v467, %v471
  %v476 = vand.u32 2147483647, %v463
  %vm477 = vcmp.eq.f32.partialorder %v476, 8.507059e+37
  %v478 = vand.u32 %v463, 2147483648
  %v479 = vor.u32 1.1754944e-38, %v478
  %v480 = vsel %vm477, %v479, %v475
  %v481 = vmul.f32 1.0, %v480
  %v482 = vrcp.pop %v464
  %v483 = vmul.f32 %v464, %v482
  %v484 = vsub.f32 1.0, %v483
  %v485 = vmul.f32 %v482, %v484
  %v486 = vadd.f32 %v482, %v485
  %vm487 = vweird.f32 %v464
  %vm488 = vweird.f32 %v482
  %vm489 = vmor %vm487, %vm488
  %v490 = vsel %vm489, %v482, %v486
  %v491 = vand.u32 2147483647, %v464
  %vm492 = vcmp.eq.f32.partialorder %v491, 8.507059e+37
  %v493 = vand.u32 %v464, 2147483648
  %v494 = vor.u32 1.1754944e-38, %v493
  %v495 = vsel %vm492, %v494, %v490
  %v496 = vmul.f32 1.0, %v495
  %v497 = vrcp.pop %v465
  %v498 = vmul.f32 %v465, %v497
  %v499 = vsub.f32 1.0, %v498
  %v500 = vmul.f32 %v497, %v499
  %v501 = vadd.f32 %v497, %v500
  %vm502 = vweird.f32 %v465
  %vm503 = vweird.f32 %v497
  %vm504 = vmor %vm502, %vm503
  %v505 = vsel %vm504, %v497, %v501
  %v506 = vand.u32 2147483647, %v465
  %vm507 = vcmp.eq.f32.partialorder %v506, 8.507059e+37
  %v508 = vand.u32 %v465, 2147483648
  %v509 = vor.u32 1.1754944e-38, %v508
  %v510 = vsel %vm507, %v509, %v505
  %v511 = vmul.f32 1.0, %v510
  %v512 = vrcp.pop %v466
  %v513 = vmul.f32 %v466, %v512
  %v514 = vsub.f32 1.0, %v513
  %v515 = vmul.f32 %v512, %v514
  %v516 = vadd.f32 %v512, %v515
  %vm517 = vweird.f32 %v466
  %vm518 = vweird.f32 %v512
  %vm519 = vmor %vm517, %vm518
  %v520 = vsel %vm519, %v512, %v516
  %v521 = vand.u32 2147483647, %v466
  %vm522 = vcmp.eq.f32.partialorder %v521, 8.507059e+37
  %v523 = vand.u32 %v466, 2147483648
  %v524 = vor.u32 1.1754944e-38, %v523
  %v525 = vsel %vm522, %v524, %v520
  %v526 = vmul.f32 1.0, %v525
  %v527 = vld [vmem:[#allocation5] sm:$0xff]
  %v528 = vld [vmem:[#allocation5 + $0x8] sm:$0xff]
  %v529 = vld [vmem:[#allocation5 + $0x10] sm:$0xff]
  %v530 = vld [vmem:[#allocation5 + $0x18] sm:$0xff]
  %535 = vrot.lane.b32.xlu0 %v527, 64
  %v536 = vpop.permute.xlu0 %535
  %537 = vrot.lane.b32.xlu0 %v528, 64
  %v538 = vpop.permute.xlu0 %537
  %539 = vrot.lane.b32.xlu0 %v529, 64
  %v540 = vpop.permute.xlu0 %539
  %541 = vrot.lane.b32.xlu0 %v530, 64
  %v542 = vpop.permute.xlu0 %541
  %v547 = vmul.f32 %v401, %v536
  %v548 = vmul.f32 %v416, %v538
  %v549 = vmul.f32 %v431, %v540
  %v550 = vmul.f32 %v446, %v542
  %v551 = vmul.f32 %v401, %v447
  %v552 = vmul.f32 %v416, %v448
  %v553 = vmul.f32 %v431, %v449
  %v554 = vmul.f32 %v446, %v450
  %559 = vrot.lane.b32.xlu0 %v551, 64
  %v560 = vpop.permute.xlu0 %559
  %561 = vrot.lane.b32.xlu0 %v552, 64
  %v562 = vpop.permute.xlu0 %561
  %563 = vrot.lane.b32.xlu0 %v553, 64
  %v564 = vpop.permute.xlu0 %563
  %565 = vrot.lane.b32.xlu0 %v554, 64
  %v566 = vpop.permute.xlu0 %565
  %v571 = vadd.f32 %v547, %v560
  %v572 = vadd.f32 %v548, %v562
  %v573 = vadd.f32 %v549, %v564
  %v574 = vadd.f32 %v550, %v566
  %v575 = vtanh.pop %v571
  %v576 = vtanh.pop %v572
  %v577 = vtanh.pop %v573
  %v578 = vtanh.pop %v574
  %v579 = vmul.f32 %v481, %v575
  %v580 = vmul.f32 %v496, %v576
  %v581 = vmul.f32 %v511, %v577
  %v582 = vmul.f32 %v526, %v578
  %587 = vrot.lane.b32.xlu0 %v571, 64
  %v588 = vpop.permute.xlu0 %587
  %589 = vrot.lane.b32.xlu0 %v572, 64
  %v590 = vpop.permute.xlu0 %589
  %591 = vrot.lane.b32.xlu0 %v573, 64
  %v592 = vpop.permute.xlu0 %591
  %593 = vrot.lane.b32.xlu0 %v574, 64
  %v594 = vpop.permute.xlu0 %593
  %vm599 = vcmask 523264
  %600 = vst.msk [vmem:[#allocation5] sm:$0xff] %vm599, %v588
  %601 = vst.msk [vmem:[#allocation5 + $0x8] sm:$0xff] %vm599, %v590
  %602 = vst.msk [vmem:[#allocation5 + $0x10] sm:$0xff] %vm599, %v592
  %603 = vst.msk [vmem:[#allocation5 + $0x18] sm:$0xff] %vm599, %v594
  %608 = vrot.lane.b32.xlu0 %v579, 64
  %v609 = vpop.permute.xlu0 %608
  %610 = vrot.lane.b32.xlu0 %v580, 64
  %v611 = vpop.permute.xlu0 %610
  %612 = vrot.lane.b32.xlu0 %v581, 64
  %v613 = vpop.permute.xlu0 %612
  %614 = vrot.lane.b32.xlu0 %v582, 64
  %v615 = vpop.permute.xlu0 %614
  %620 = vst.msk [vmem:[#allocation4] sm:$0xff] %vm599, %v609
  %621 = vst.msk [vmem:[#allocation4 + $0x8] sm:$0xff] %vm599, %v611
  %622 = vst.msk [vmem:[#allocation4 + $0x10] sm:$0xff] %vm599, %v613
  %623 = vst.msk [vmem:[#allocation4 + $0x18] sm:$0xff] %vm599, %v615
  %v624 = vld [vmem:[%s4] sm:$0xf]
  %v625 = vld [vmem:[%s4 + $0x4] sm:$0xf]
  %v626 = vld [vmem:[%s4 + $0x8] sm:$0xf]
  %v627 = vld [vmem:[%s4 + $0xc] sm:$0xf]
  %v628 = vld [vmem:[%s4 + $0x10] sm:$0xf]
  %v629 = vld [vmem:[%s4 + $0x14] sm:$0xf]
  %v630 = vld [vmem:[%s4 + $0x18] sm:$0xf]
  %v631 = vld [vmem:[%s4 + $0x1c] sm:$0xf]
  %v632 = vld [vmem:[%s4 + $0x20] sm:$0xf]
  %v633 = vld [vmem:[%s4 + $0x24] sm:$0xf]
  %v634 = vld [vmem:[%s4 + $0x28] sm:$0xf]
  %v635 = vld [vmem:[%s4 + $0x2c] sm:$0xf]
  %v636 = vld [vmem:[%s4 + $0x30] sm:$0xf]
  %v637 = vld [vmem:[%s4 + $0x34] sm:$0xf]
  %v638 = vld [vmem:[%s4 + $0x38] sm:$0xf]
  %v639 = vld [vmem:[%s4 + $0x3c] sm:$0xf]
  %v640 = vld [vmem:[%s4 + $0x40] sm:$0xf]
  %v641 = vld [vmem:[%s4 + $0x44] sm:$0xf]
  %v642 = vld [vmem:[%s4 + $0x48] sm:$0xf]
  %v643 = vld [vmem:[%s4 + $0x4c] sm:$0xf]
  %v644 = vld [vmem:[%s4 + $0x50] sm:$0xf]
  %v645 = vld [vmem:[%s4 + $0x54] sm:$0xf]
  %v646 = vld [vmem:[%s4 + $0x58] sm:$0xf]
  %v647 = vld [vmem:[%s4 + $0x5c] sm:$0xf]
  %v648 = vld [vmem:[%s4 + $0x60] sm:$0xf]
  %v649 = vld [vmem:[%s4 + $0x64] sm:$0xf]
  %v650 = vld [vmem:[%s4 + $0x68] sm:$0xf]
  %v651 = vld [vmem:[%s4 + $0x6c] sm:$0xf]
  %v652 = vld [vmem:[%s4 + $0x70] sm:$0xf]
  %v653 = vld [vmem:[%s4 + $0x74] sm:$0xf]
  %v654 = vld [vmem:[%s4 + $0x78] sm:$0xf]
  %v655 = vld [vmem:[%s4 + $0x7c] sm:$0xf]
  %v656 = vld [vmem:[%s4 + $0x80] sm:$0xf]
  %v657 = vld [vmem:[%s4 + $0x84] sm:$0xf]
  %v658 = vld [vmem:[%s4 + $0x88] sm:$0xf]
  %v659 = vld [vmem:[%s4 + $0x8c] sm:$0xf]
  %v660 = vld [vmem:[%s4 + $0x90] sm:$0xf]
  %v661 = vld [vmem:[%s4 + $0x94] sm:$0xf]
  %v662 = vld [vmem:[%s4 + $0x98] sm:$0xf]
  %v663 = vld [vmem:[%s4 + $0x9c] sm:$0xf]
  %v664 = vld [vmem:[%s4 + $0xa0] sm:$0xf]
  %v665 = vld [vmem:[%s4 + $0xa4] sm:$0xf]
  %v666 = vld [vmem:[%s4 + $0xa8] sm:$0xf]
  %v667 = vld [vmem:[%s4 + $0xac] sm:$0xf]
  %v668 = vld [vmem:[%s4 + $0xb0] sm:$0xf]
  %v669 = vld [vmem:[%s4 + $0xb4] sm:$0xf]
  %v670 = vld [vmem:[%s4 + $0xb8] sm:$0xf]
  %v671 = vld [vmem:[%s4 + $0xbc] sm:$0xf]
  %v672 = vld [vmem:[%s4 + $0xc0] sm:$0xf]
  %v673 = vld [vmem:[%s4 + $0xc4] sm:$0xf]
  %v674 = vld [vmem:[%s4 + $0xc8] sm:$0xf]
  %v675 = vld [vmem:[%s4 + $0xcc] sm:$0xf]
  %v676 = vld [vmem:[%s4 + $0xd0] sm:$0xf]
  %v677 = vld [vmem:[%s4 + $0xd4] sm:$0xf]
  %v678 = vld [vmem:[%s4 + $0xd8] sm:$0xf]
  %v679 = vld [vmem:[%s4 + $0xdc] sm:$0xf]
  %v680 = vld [vmem:[%s4 + $0xe0] sm:$0xf]
  %v681 = vld [vmem:[%s4 + $0xe4] sm:$0xf]
  %v682 = vld [vmem:[%s4 + $0xe8] sm:$0xf]
  %v683 = vld [vmem:[%s4 + $0xec] sm:$0xf]
  %v684 = vld [vmem:[%s4 + $0xf0] sm:$0xf]
  %v685 = vld [vmem:[%s4 + $0xf4] sm:$0xf]
  %v686 = vld [vmem:[%s4 + $0xf8] sm:$0xf]
  %v687 = vld [vmem:[%s4 + $0xfc] sm:$0xf]
  %v688 = vunpack.c.l.bf16 %v624
  %v689 = vunpack.c.l.bf16 %v625
  %v690 = vunpack.c.l.bf16 %v626
  %v691 = vunpack.c.l.bf16 %v627
  %v692 = vunpack.c.l.bf16 %v628
  %v693 = vunpack.c.l.bf16 %v629
  %v694 = vunpack.c.l.bf16 %v630
  %v695 = vunpack.c.l.bf16 %v631
  %v696 = vunpack.c.l.bf16 %v632
  %v697 = vunpack.c.l.bf16 %v633
  %v698 = vunpack.c.l.bf16 %v634
  %v699 = vunpack.c.l.bf16 %v635
  %v700 = vunpack.c.l.bf16 %v636
  %v701 = vunpack.c.l.bf16 %v637
  %v702 = vunpack.c.l.bf16 %v638
  %v703 = vunpack.c.l.bf16 %v639
  %v704 = vunpack.c.l.bf16 %v640
  %v705 = vunpack.c.l.bf16 %v641
  %v706 = vunpack.c.l.bf16 %v642
  %v707 = vunpack.c.l.bf16 %v643
  %v708 = vunpack.c.l.bf16 %v644
  %v709 = vunpack.c.l.bf16 %v645
  %v710 = vunpack.c.l.bf16 %v646
  %v711 = vunpack.c.l.bf16 %v647
  %v712 = vunpack.c.l.bf16 %v648
  %v713 = vunpack.c.l.bf16 %v649
  %v714 = vunpack.c.l.bf16 %v650
  %v715 = vunpack.c.l.bf16 %v651
  %v716 = vunpack.c.l.bf16 %v652
  %v717 = vunpack.c.l.bf16 %v653
  %v718 = vunpack.c.l.bf16 %v654
  %v719 = vunpack.c.l.bf16 %v655
  %v720 = vunpack.c.l.bf16 %v656
  %v721 = vunpack.c.l.bf16 %v657
  %v722 = vunpack.c.l.bf16 %v658
  %v723 = vunpack.c.l.bf16 %v659
  %v724 = vunpack.c.l.bf16 %v660
  %v725 = vunpack.c.l.bf16 %v661
  %v726 = vunpack.c.l.bf16 %v662
  %v727 = vunpack.c.l.bf16 %v663
  %v728 = vunpack.c.l.bf16 %v664
  %v729 = vunpack.c.l.bf16 %v665
  %v730 = vunpack.c.l.bf16 %v666
  %v731 = vunpack.c.l.bf16 %v667
  %v732 = vunpack.c.l.bf16 %v668
  %v733 = vunpack.c.l.bf16 %v669
  %v734 = vunpack.c.l.bf16 %v670
  %v735 = vunpack.c.l.bf16 %v671
  %v736 = vunpack.c.l.bf16 %v672
  %v737 = vunpack.c.l.bf16 %v673
  %v738 = vunpack.c.l.bf16 %v674
  %v739 = vunpack.c.l.bf16 %v675
  %v740 = vunpack.c.l.bf16 %v676
  %v741 = vunpack.c.l.bf16 %v677
  %v742 = vunpack.c.l.bf16 %v678
  %v743 = vunpack.c.l.bf16 %v679
  %v744 = vunpack.c.l.bf16 %v680
  %v745 = vunpack.c.l.bf16 %v681
  %v746 = vunpack.c.l.bf16 %v682
  %v747 = vunpack.c.l.bf16 %v683
  %v748 = vunpack.c.l.bf16 %v684
  %v749 = vunpack.c.l.bf16 %v685
  %v750 = vunpack.c.l.bf16 %v686
  %v751 = vunpack.c.l.bf16 %v687
  %v752 = vrot.slane %v579, 1
  %v753 = vrot.slane %v579, 2
  %v754 = vrot.slane %v579, 3
  %v755 = vrot.slane %v579, 4
  %v756 = vrot.slane %v579, 5
  %v757 = vrot.slane %v579, 6
  %v758 = vrot.slane %v579, 7
  %v759 = vrot.slane %v580, 1
  %v760 = vrot.slane %v580, 2
  %v761 = vrot.slane %v580, 3
  %v762 = vrot.slane %v580, 4
  %v763 = vrot.slane %v580, 5
  %v764 = vrot.slane %v580, 6
  %v765 = vrot.slane %v580, 7
  %v766 = vrot.slane %v581, 1
  %v767 = vrot.slane %v581, 2
  %v768 = vrot.slane %v581, 3
  %v769 = vrot.slane %v581, 4
  %v770 = vrot.slane %v581, 5
  %v771 = vrot.slane %v581, 6
  %v772 = vrot.slane %v581, 7
  %v773 = vrot.slane %v582, 1
  %v774 = vrot.slane %v582, 2
  %v775 = vrot.slane %v582, 3
  %v776 = vrot.slane %v582, 4
  %v777 = vrot.slane %v582, 5
  %v778 = vrot.slane %v582, 6
  %v779 = vrot.slane %v582, 7
  %v780 = vperm.slane %v579, 0
  %v781 = vperm.slane %v752, 0
  %v782 = vperm.slane %v753, 0
  %v783 = vperm.slane %v754, 0
  %v784 = vperm.slane %v755, 0
  %v785 = vperm.slane %v756, 0
  %v786 = vperm.slane %v757, 0
  %v787 = vperm.slane %v758, 0
  %v788 = vperm.slane %v580, 0
  %v789 = vperm.slane %v759, 0
  %v790 = vperm.slane %v760, 0
  %v791 = vperm.slane %v761, 0
  %v792 = vperm.slane %v762, 0
  %v793 = vperm.slane %v763, 0
  %v794 = vperm.slane %v764, 0
  %v795 = vperm.slane %v765, 0
  %v796 = vperm.slane %v581, 0
  %v797 = vperm.slane %v766, 0
  %v798 = vperm.slane %v767, 0
  %v799 = vperm.slane %v768, 0
  %v800 = vperm.slane %v769, 0
  %v801 = vperm.slane %v770, 0
  %v802 = vperm.slane %v771, 0
  %v803 = vperm.slane %v772, 0
  %v804 = vperm.slane %v582, 0
  %v805 = vperm.slane %v773, 0
  %v806 = vperm.slane %v774, 0
  %v807 = vperm.slane %v775, 0
  %v808 = vperm.slane %v776, 0
  %v809 = vperm.slane %v777, 0
  %v810 = vperm.slane %v778, 0
  %v811 = vperm.slane %v779, 0
  %908 = vrot.lane.b32.xlu0 %v688, 64
  %v909 = vpop.permute.xlu0 %908
  %910 = vrot.lane.b32.xlu0 %v689, 64
  %v911 = vpop.permute.xlu0 %910
  %912 = vrot.lane.b32.xlu0 %v690, 64
  %v913 = vpop.permute.xlu0 %912
  %914 = vrot.lane.b32.xlu0 %v691, 64
  %v915 = vpop.permute.xlu0 %914
  %916 = vrot.lane.b32.xlu0 %v692, 64
  %v917 = vpop.permute.xlu0 %916
  %918 = vrot.lane.b32.xlu0 %v693, 64
  %v919 = vpop.permute.xlu0 %918
  %920 = vrot.lane.b32.xlu0 %v694, 64
  %v921 = vpop.permute.xlu0 %920
  %922 = vrot.lane.b32.xlu0 %v695, 64
  %v923 = vpop.permute.xlu0 %922
  %924 = vrot.lane.b32.xlu0 %v696, 64
  %v925 = vpop.permute.xlu0 %924
  %926 = vrot.lane.b32.xlu0 %v697, 64
  %v927 = vpop.permute.xlu0 %926
  %928 = vrot.lane.b32.xlu0 %v698, 64
  %v929 = vpop.permute.xlu0 %928
  %930 = vrot.lane.b32.xlu0 %v699, 64
  %v931 = vpop.permute.xlu0 %930
  %932 = vrot.lane.b32.xlu0 %v700, 64
  %v933 = vpop.permute.xlu0 %932
  %934 = vrot.lane.b32.xlu0 %v701, 64
  %v935 = vpop.permute.xlu0 %934
  %936 = vrot.lane.b32.xlu0 %v702, 64
  %v937 = vpop.permute.xlu0 %936
  %938 = vrot.lane.b32.xlu0 %v703, 64
  %v939 = vpop.permute.xlu0 %938
  %940 = vrot.lane.b32.xlu0 %v704, 64
  %v941 = vpop.permute.xlu0 %940
  %942 = vrot.lane.b32.xlu0 %v705, 64
  %v943 = vpop.permute.xlu0 %942
  %944 = vrot.lane.b32.xlu0 %v706, 64
  %v945 = vpop.permute.xlu0 %944
  %946 = vrot.lane.b32.xlu0 %v707, 64
  %v947 = vpop.permute.xlu0 %946
  %948 = vrot.lane.b32.xlu0 %v708, 64
  %v949 = vpop.permute.xlu0 %948
  %950 = vrot.lane.b32.xlu0 %v709, 64
  %v951 = vpop.permute.xlu0 %950
  %952 = vrot.lane.b32.xlu0 %v710, 64
  %v953 = vpop.permute.xlu0 %952
  %954 = vrot.lane.b32.xlu0 %v711, 64
  %v955 = vpop.permute.xlu0 %954
  %956 = vrot.lane.b32.xlu0 %v712, 64
  %v957 = vpop.permute.xlu0 %956
  %958 = vrot.lane.b32.xlu0 %v713, 64
  %v959 = vpop.permute.xlu0 %958
  %960 = vrot.lane.b32.xlu0 %v714, 64
  %v961 = vpop.permute.xlu0 %960
  %962 = vrot.lane.b32.xlu0 %v715, 64
  %v963 = vpop.permute.xlu0 %962
  %964 = vrot.lane.b32.xlu0 %v716, 64
  %v965 = vpop.permute.xlu0 %964
  %966 = vrot.lane.b32.xlu0 %v717, 64
  %v967 = vpop.permute.xlu0 %966
  %968 = vrot.lane.b32.xlu0 %v718, 64
  %v969 = vpop.permute.xlu0 %968
  %970 = vrot.lane.b32.xlu0 %v719, 64
  %v971 = vpop.permute.xlu0 %970
  %972 = vrot.lane.b32.xlu0 %v720, 64
  %v973 = vpop.permute.xlu0 %972
  %974 = vrot.lane.b32.xlu0 %v721, 64
  %v975 = vpop.permute.xlu0 %974
  %976 = vrot.lane.b32.xlu0 %v722, 64
  %v977 = vpop.permute.xlu0 %976
  %978 = vrot.lane.b32.xlu0 %v723, 64
  %v979 = vpop.permute.xlu0 %978
  %980 = vrot.lane.b32.xlu0 %v724, 64
  %v981 = vpop.permute.xlu0 %980
  %982 = vrot.lane.b32.xlu0 %v725, 64
  %v983 = vpop.permute.xlu0 %982
  %984 = vrot.lane.b32.xlu0 %v726, 64
  %v985 = vpop.permute.xlu0 %984
  %986 = vrot.lane.b32.xlu0 %v727, 64
  %v987 = vpop.permute.xlu0 %986
  %988 = vrot.lane.b32.xlu0 %v728, 64
  %v989 = vpop.permute.xlu0 %988
  %990 = vrot.lane.b32.xlu0 %v729, 64
  %v991 = vpop.permute.xlu0 %990
  %992 = vrot.lane.b32.xlu0 %v730, 64
  %v993 = vpop.permute.xlu0 %992
  %994 = vrot.lane.b32.xlu0 %v731, 64
  %v995 = vpop.permute.xlu0 %994
  %996 = vrot.lane.b32.xlu0 %v732, 64
  %v997 = vpop.permute.xlu0 %996
  %998 = vrot.lane.b32.xlu0 %v733, 64
  %v999 = vpop.permute.xlu0 %998
  %1000 = vrot.lane.b32.xlu0 %v734, 64
  %v1001 = vpop.permute.xlu0 %1000
  %1002 = vrot.lane.b32.xlu0 %v735, 64
  %v1003 = vpop.permute.xlu0 %1002
  %1004 = vrot.lane.b32.xlu0 %v736, 64
  %v1005 = vpop.permute.xlu0 %1004
  %1006 = vrot.lane.b32.xlu0 %v737, 64
  %v1007 = vpop.permute.xlu0 %1006
  %1008 = vrot.lane.b32.xlu0 %v738, 64
  %v1009 = vpop.permute.xlu0 %1008
  %1010 = vrot.lane.b32.xlu0 %v739, 64
  %v1011 = vpop.permute.xlu0 %1010
  %1012 = vrot.lane.b32.xlu0 %v740, 64
  %v1013 = vpop.permute.xlu0 %1012
  %1014 = vrot.lane.b32.xlu0 %v741, 64
  %v1015 = vpop.permute.xlu0 %1014
  %1016 = vrot.lane.b32.xlu0 %v742, 64
  %v1017 = vpop.permute.xlu0 %1016
  %1018 = vrot.lane.b32.xlu0 %v743, 64
  %v1019 = vpop.permute.xlu0 %1018
  %1020 = vrot.lane.b32.xlu0 %v744, 64
  %v1021 = vpop.permute.xlu0 %1020
  %1022 = vrot.lane.b32.xlu0 %v745, 64
  %v1023 = vpop.permute.xlu0 %1022
  %1024 = vrot.lane.b32.xlu0 %v746, 64
  %v1025 = vpop.permute.xlu0 %1024
  %1026 = vrot.lane.b32.xlu0 %v747, 64
  %v1027 = vpop.permute.xlu0 %1026
  %1028 = vrot.lane.b32.xlu0 %v748, 64
  %v1029 = vpop.permute.xlu0 %1028
  %1030 = vrot.lane.b32.xlu0 %v749, 64
  %v1031 = vpop.permute.xlu0 %1030
  %1032 = vrot.lane.b32.xlu0 %v750, 64
  %v1033 = vpop.permute.xlu0 %1032
  %1034 = vrot.lane.b32.xlu0 %v751, 64
  %v1035 = vpop.permute.xlu0 %1034
  %v1100 = vmul.f32 %v780, %v909
  %v1101 = vmul.f32 %v780, %v911
  %v1102 = vmul.f32 %v781, %v913
  %v1103 = vmul.f32 %v781, %v915
  %v1104 = vmul.f32 %v782, %v917
  %v1105 = vmul.f32 %v782, %v919
  %v1106 = vmul.f32 %v783, %v921
  %v1107 = vmul.f32 %v783, %v923
  %v1108 = vmul.f32 %v784, %v925
  %v1109 = vmul.f32 %v784, %v927
  %v1110 = vmul.f32 %v785, %v929
  %v1111 = vmul.f32 %v785, %v931
  %v1112 = vmul.f32 %v786, %v933
  %v1113 = vmul.f32 %v786, %v935
  %v1114 = vmul.f32 %v787, %v937
  %v1115 = vmul.f32 %v787, %v939
  %v1116 = vmul.f32 %v788, %v941
  %v1117 = vmul.f32 %v788, %v943
  %v1118 = vmul.f32 %v789, %v945
  %v1119 = vmul.f32 %v789, %v947
  %v1120 = vmul.f32 %v790, %v949
  %v1121 = vmul.f32 %v790, %v951
  %v1122 = vmul.f32 %v791, %v953
  %v1123 = vmul.f32 %v791, %v955
  %v1124 = vmul.f32 %v792, %v957
  %v1125 = vmul.f32 %v792, %v959
  %v1126 = vmul.f32 %v793, %v961
  %v1127 = vmul.f32 %v793, %v963
  %v1128 = vmul.f32 %v794, %v965
  %v1129 = vmul.f32 %v794, %v967
  %v1130 = vmul.f32 %v795, %v969
  %v1131 = vmul.f32 %v795, %v971
  %v1132 = vmul.f32 %v796, %v973
  %v1133 = vmul.f32 %v796, %v975
  %v1134 = vmul.f32 %v797, %v977
  %v1135 = vmul.f32 %v797, %v979
  %v1136 = vmul.f32 %v798, %v981
  %v1137 = vmul.f32 %v798, %v983
  %v1138 = vmul.f32 %v799, %v985
  %v1139 = vmul.f32 %v799, %v987
  %v1140 = vmul.f32 %v800, %v989
  %v1141 = vmul.f32 %v800, %v991
  %v1142 = vmul.f32 %v801, %v993
  %v1143 = vmul.f32 %v801, %v995
  %v1144 = vmul.f32 %v802, %v997
  %v1145 = vmul.f32 %v802, %v999
  %v1146 = vmul.f32 %v803, %v1001
  %v1147 = vmul.f32 %v803, %v1003
  %v1148 = vmul.f32 %v804, %v1005
  %v1149 = vmul.f32 %v804, %v1007
  %v1150 = vmul.f32 %v805, %v1009
  %v1151 = vmul.f32 %v805, %v1011
  %v1152 = vmul.f32 %v806, %v1013
  %v1153 = vmul.f32 %v806, %v1015
  %v1154 = vmul.f32 %v807, %v1017
  %v1155 = vmul.f32 %v807, %v1019
  %v1156 = vmul.f32 %v808, %v1021
  %v1157 = vmul.f32 %v808, %v1023
  %v1158 = vmul.f32 %v809, %v1025
  %v1159 = vmul.f32 %v809, %v1027
  %v1160 = vmul.f32 %v810, %v1029
  %v1161 = vmul.f32 %v810, %v1031
  %v1162 = vmul.f32 %v811, %v1033
  %v1163 = vmul.f32 %v811, %v1035
  %1228 = vrot.lane.b32.xlu0 %v1100, 64
  %v1229 = vpop.permute.xlu0 %1228
  %1230 = vrot.lane.b32.xlu0 %v1101, 64
  %v1231 = vpop.permute.xlu0 %1230
  %1232 = vrot.lane.b32.xlu0 %v1102, 64
  %v1233 = vpop.permute.xlu0 %1232
  %1234 = vrot.lane.b32.xlu0 %v1103, 64
  %v1235 = vpop.permute.xlu0 %1234
  %1236 = vrot.lane.b32.xlu0 %v1104, 64
  %v1237 = vpop.permute.xlu0 %1236
  %1238 = vrot.lane.b32.xlu0 %v1105, 64
  %v1239 = vpop.permute.xlu0 %1238
  %1240 = vrot.lane.b32.xlu0 %v1106, 64
  %v1241 = vpop.permute.xlu0 %1240
  %1242 = vrot.lane.b32.xlu0 %v1107, 64
  %v1243 = vpop.permute.xlu0 %1242
  %1244 = vrot.lane.b32.xlu0 %v1108, 64
  %v1245 = vpop.permute.xlu0 %1244
  %1246 = vrot.lane.b32.xlu0 %v1109, 64
  %v1247 = vpop.permute.xlu0 %1246
  %1248 = vrot.lane.b32.xlu0 %v1110, 64
  %v1249 = vpop.permute.xlu0 %1248
  %1250 = vrot.lane.b32.xlu0 %v1111, 64
  %v1251 = vpop.permute.xlu0 %1250
  %1252 = vrot.lane.b32.xlu0 %v1112, 64
  %v1253 = vpop.permute.xlu0 %1252
  %1254 = vrot.lane.b32.xlu0 %v1113, 64
  %v1255 = vpop.permute.xlu0 %1254
  %1256 = vrot.lane.b32.xlu0 %v1114, 64
  %v1257 = vpop.permute.xlu0 %1256
  %1258 = vrot.lane.b32.xlu0 %v1115, 64
  %v1259 = vpop.permute.xlu0 %1258
  %1260 = vrot.lane.b32.xlu0 %v1116, 64
  %v1261 = vpop.permute.xlu0 %1260
  %1262 = vrot.lane.b32.xlu0 %v1117, 64
  %v1263 = vpop.permute.xlu0 %1262
  %1264 = vrot.lane.b32.xlu0 %v1118, 64
  %v1265 = vpop.permute.xlu0 %1264
  %1266 = vrot.lane.b32.xlu0 %v1119, 64
  %v1267 = vpop.permute.xlu0 %1266
  %1268 = vrot.lane.b32.xlu0 %v1120, 64
  %v1269 = vpop.permute.xlu0 %1268
  %1270 = vrot.lane.b32.xlu0 %v1121, 64
  %v1271 = vpop.permute.xlu0 %1270
  %1272 = vrot.lane.b32.xlu0 %v1122, 64
  %v1273 = vpop.permute.xlu0 %1272
  %1274 = vrot.lane.b32.xlu0 %v1123, 64
  %v1275 = vpop.permute.xlu0 %1274
  %1276 = vrot.lane.b32.xlu0 %v1124, 64
  %v1277 = vpop.permute.xlu0 %1276
  %1278 = vrot.lane.b32.xlu0 %v1125, 64
  %v1279 = vpop.permute.xlu0 %1278
  %1280 = vrot.lane.b32.xlu0 %v1126, 64
  %v1281 = vpop.permute.xlu0 %1280
  %1282 = vrot.lane.b32.xlu0 %v1127, 64
  %v1283 = vpop.permute.xlu0 %1282
  %1284 = vrot.lane.b32.xlu0 %v1128, 64
  %v1285 = vpop.permute.xlu0 %1284
  %1286 = vrot.lane.b32.xlu0 %v1129, 64
  %v1287 = vpop.permute.xlu0 %1286
  %1288 = vrot.lane.b32.xlu0 %v1130, 64
  %v1289 = vpop.permute.xlu0 %1288
  %1290 = vrot.lane.b32.xlu0 %v1131, 64
  %v1291 = vpop.permute.xlu0 %1290
  %1292 = vrot.lane.b32.xlu0 %v1132, 64
  %v1293 = vpop.permute.xlu0 %1292
  %1294 = vrot.lane.b32.xlu0 %v1133, 64
  %v1295 = vpop.permute.xlu0 %1294
  %1296 = vrot.lane.b32.xlu0 %v1134, 64
  %v1297 = vpop.permute.xlu0 %1296
  %1298 = vrot.lane.b32.xlu0 %v1135, 64
  %v1299 = vpop.permute.xlu0 %1298
  %1300 = vrot.lane.b32.xlu0 %v1136, 64
  %v1301 = vpop.permute.xlu0 %1300
  %1302 = vrot.lane.b32.xlu0 %v1137, 64
  %v1303 = vpop.permute.xlu0 %1302
  %1304 = vrot.lane.b32.xlu0 %v1138, 64
  %v1305 = vpop.permute.xlu0 %1304
  %1306 = vrot.lane.b32.xlu0 %v1139, 64
  %v1307 = vpop.permute.xlu0 %1306
  %1308 = vrot.lane.b32.xlu0 %v1140, 64
  %v1309 = vpop.permute.xlu0 %1308
  %1310 = vrot.lane.b32.xlu0 %v1141, 64
  %v1311 = vpop.permute.xlu0 %1310
  %1312 = vrot.lane.b32.xlu0 %v1142, 64
  %v1313 = vpop.permute.xlu0 %1312
  %1314 = vrot.lane.b32.xlu0 %v1143, 64
  %v1315 = vpop.permute.xlu0 %1314
  %1316 = vrot.lane.b32.xlu0 %v1144, 64
  %v1317 = vpop.permute.xlu0 %1316
  %1318 = vrot.lane.b32.xlu0 %v1145, 64
  %v1319 = vpop.permute.xlu0 %1318
  %1320 = vrot.lane.b32.xlu0 %v1146, 64
  %v1321 = vpop.permute.xlu0 %1320
  %1322 = vrot.lane.b32.xlu0 %v1147, 64
  %v1323 = vpop.permute.xlu0 %1322
  %1324 = vrot.lane.b32.xlu0 %v1148, 64
  %v1325 = vpop.permute.xlu0 %1324
  %1326 = vrot.lane.b32.xlu0 %v1149, 64
  %v1327 = vpop.permute.xlu0 %1326
  %1328 = vrot.lane.b32.xlu0 %v1150, 64
  %v1329 = vpop.permute.xlu0 %1328
  %1330 = vrot.lane.b32.xlu0 %v1151, 64
  %v1331 = vpop.permute.xlu0 %1330
  %1332 = vrot.lane.b32.xlu0 %v1152, 64
  %v1333 = vpop.permute.xlu0 %1332
  %1334 = vrot.lane.b32.xlu0 %v1153, 64
  %v1335 = vpop.permute.xlu0 %1334
  %1336 = vrot.lane.b32.xlu0 %v1154, 64
  %v1337 = vpop.permute.xlu0 %1336
  %1338 = vrot.lane.b32.xlu0 %v1155, 64
  %v1339 = vpop.permute.xlu0 %1338
  %1340 = vrot.lane.b32.xlu0 %v1156, 64
  %v1341 = vpop.permute.xlu0 %1340
  %1342 = vrot.lane.b32.xlu0 %v1157, 64
  %v1343 = vpop.permute.xlu0 %1342
  %1344 = vrot.lane.b32.xlu0 %v1158, 64
  %v1345 = vpop.permute.xlu0 %1344
  %1346 = vrot.lane.b32.xlu0 %v1159, 64
  %v1347 = vpop.permute.xlu0 %1346
  %1348 = vrot.lane.b32.xlu0 %v1160, 64
  %v1349 = vpop.permute.xlu0 %1348
  %1350 = vrot.lane.b32.xlu0 %v1161, 64
  %v1351 = vpop.permute.xlu0 %1350
  %1352 = vrot.lane.b32.xlu0 %v1162, 64
  %v1353 = vpop.permute.xlu0 %1352
  %1354 = vrot.lane.b32.xlu0 %v1163, 64
  %v1355 = vpop.permute.xlu0 %1354
  %v1420 = vsel %vm599, %v1229, 0.0
  %1421 = vadd.xlane.f32.xlu0 %v1420
  %v1422 = vpop.xlane.xlu0 %1421
  %v1423 = vsel %vm599, %v1231, 0.0
  %1424 = vadd.xlane.f32.xlu0 %v1423
  %v1425 = vpop.xlane.xlu0 %1424
  %v1426 = vsel %vm599, %v1233, 0.0
  %1427 = vadd.xlane.f32.xlu0 %v1426
  %v1428 = vpop.xlane.xlu0 %1427
  %v1429 = vsel %vm599, %v1235, 0.0
  %1430 = vadd.xlane.f32.xlu0 %v1429
  %v1431 = vpop.xlane.xlu0 %1430
  %v1432 = vsel %vm599, %v1237, 0.0
  %1433 = vadd.xlane.f32.xlu0 %v1432
  %v1434 = vpop.xlane.xlu0 %1433
  %v1435 = vsel %vm599, %v1239, 0.0
  %1436 = vadd.xlane.f32.xlu0 %v1435
  %v1437 = vpop.xlane.xlu0 %1436
  %v1438 = vsel %vm599, %v1241, 0.0
  %1439 = vadd.xlane.f32.xlu0 %v1438
  %v1440 = vpop.xlane.xlu0 %1439
  %v1441 = vsel %vm599, %v1243, 0.0
  %1442 = vadd.xlane.f32.xlu0 %v1441
  %v1443 = vpop.xlane.xlu0 %1442
  %v1444 = vsel %vm599, %v1245, 0.0
  %1445 = vadd.xlane.f32.xlu0 %v1444
  %v1446 = vpop.xlane.xlu0 %1445
  %v1447 = vsel %vm599, %v1247, 0.0
  %1448 = vadd.xlane.f32.xlu0 %v1447
  %v1449 = vpop.xlane.xlu0 %1448
  %v1450 = vsel %vm599, %v1249, 0.0
  %1451 = vadd.xlane.f32.xlu0 %v1450
  %v1452 = vpop.xlane.xlu0 %1451
  %v1453 = vsel %vm599, %v1251, 0.0
  %1454 = vadd.xlane.f32.xlu0 %v1453
  %v1455 = vpop.xlane.xlu0 %1454
  %v1456 = vsel %vm599, %v1253, 0.0
  %1457 = vadd.xlane.f32.xlu0 %v1456
  %v1458 = vpop.xlane.xlu0 %1457
  %v1459 = vsel %vm599, %v1255, 0.0
  %1460 = vadd.xlane.f32.xlu0 %v1459
  %v1461 = vpop.xlane.xlu0 %1460
  %v1462 = vsel %vm599, %v1257, 0.0
  %1463 = vadd.xlane.f32.xlu0 %v1462
  %v1464 = vpop.xlane.xlu0 %1463
  %v1465 = vsel %vm599, %v1259, 0.0
  %1466 = vadd.xlane.f32.xlu0 %v1465
  %v1467 = vpop.xlane.xlu0 %1466
  %v1468 = vsel %vm599, %v1261, 0.0
  %1469 = vadd.xlane.f32.xlu0 %v1468
  %v1470 = vpop.xlane.xlu0 %1469
  %v1471 = vsel %vm599, %v1263, 0.0
  %1472 = vadd.xlane.f32.xlu0 %v1471
  %v1473 = vpop.xlane.xlu0 %1472
  %v1474 = vsel %vm599, %v1265, 0.0
  %1475 = vadd.xlane.f32.xlu0 %v1474
  %v1476 = vpop.xlane.xlu0 %1475
  %v1477 = vsel %vm599, %v1267, 0.0
  %1478 = vadd.xlane.f32.xlu0 %v1477
  %v1479 = vpop.xlane.xlu0 %1478
  %v1480 = vsel %vm599, %v1269, 0.0
  %1481 = vadd.xlane.f32.xlu0 %v1480
  %v1482 = vpop.xlane.xlu0 %1481
  %v1483 = vsel %vm599, %v1271, 0.0
  %1484 = vadd.xlane.f32.xlu0 %v1483
  %v1485 = vpop.xlane.xlu0 %1484
  %v1486 = vsel %vm599, %v1273, 0.0
  %1487 = vadd.xlane.f32.xlu0 %v1486
  %v1488 = vpop.xlane.xlu0 %1487
  %v1489 = vsel %vm599, %v1275, 0.0
  %1490 = vadd.xlane.f32.xlu0 %v1489
  %v1491 = vpop.xlane.xlu0 %1490
  %v1492 = vsel %vm599, %v1277, 0.0
  %1493 = vadd.xlane.f32.xlu0 %v1492
  %v1494 = vpop.xlane.xlu0 %1493
  %v1495 = vsel %vm599, %v1279, 0.0
  %1496 = vadd.xlane.f32.xlu0 %v1495
  %v1497 = vpop.xlane.xlu0 %1496
  %v1498 = vsel %vm599, %v1281, 0.0
  %1499 = vadd.xlane.f32.xlu0 %v1498
  %v1500 = vpop.xlane.xlu0 %1499
  %v1501 = vsel %vm599, %v1283, 0.0
  %1502 = vadd.xlane.f32.xlu0 %v1501
  %v1503 = vpop.xlane.xlu0 %1502
  %v1504 = vsel %vm599, %v1285, 0.0
  %1505 = vadd.xlane.f32.xlu0 %v1504
  %v1506 = vpop.xlane.xlu0 %1505
  %v1507 = vsel %vm599, %v1287, 0.0
  %1508 = vadd.xlane.f32.xlu0 %v1507
  %v1509 = vpop.xlane.xlu0 %1508
  %v1510 = vsel %vm599, %v1289, 0.0
  %1511 = vadd.xlane.f32.xlu0 %v1510
  %v1512 = vpop.xlane.xlu0 %1511
  %v1513 = vsel %vm599, %v1291, 0.0
  %1514 = vadd.xlane.f32.xlu0 %v1513
  %v1515 = vpop.xlane.xlu0 %1514
  %v1516 = vsel %vm599, %v1293, 0.0
  %1517 = vadd.xlane.f32.xlu0 %v1516
  %v1518 = vpop.xlane.xlu0 %1517
  %v1519 = vsel %vm599, %v1295, 0.0
  %1520 = vadd.xlane.f32.xlu0 %v1519
  %v1521 = vpop.xlane.xlu0 %1520
  %v1522 = vsel %vm599, %v1297, 0.0
  %1523 = vadd.xlane.f32.xlu0 %v1522
  %v1524 = vpop.xlane.xlu0 %1523
  %v1525 = vsel %vm599, %v1299, 0.0
  %1526 = vadd.xlane.f32.xlu0 %v1525
  %v1527 = vpop.xlane.xlu0 %1526
  %v1528 = vsel %vm599, %v1301, 0.0
  %1529 = vadd.xlane.f32.xlu0 %v1528
  %v1530 = vpop.xlane.xlu0 %1529
  %v1531 = vsel %vm599, %v1303, 0.0
  %1532 = vadd.xlane.f32.xlu0 %v1531
  %v1533 = vpop.xlane.xlu0 %1532
  %v1534 = vsel %vm599, %v1305, 0.0
  %1535 = vadd.xlane.f32.xlu0 %v1534
  %v1536 = vpop.xlane.xlu0 %1535
  %v1537 = vsel %vm599, %v1307, 0.0
  %1538 = vadd.xlane.f32.xlu0 %v1537
  %v1539 = vpop.xlane.xlu0 %1538
  %v1540 = vsel %vm599, %v1309, 0.0
  %1541 = vadd.xlane.f32.xlu0 %v1540
  %v1542 = vpop.xlane.xlu0 %1541
  %v1543 = vsel %vm599, %v1311, 0.0
  %1544 = vadd.xlane.f32.xlu0 %v1543
  %v1545 = vpop.xlane.xlu0 %1544
  %v1546 = vsel %vm599, %v1313, 0.0
  %1547 = vadd.xlane.f32.xlu0 %v1546
  %v1548 = vpop.xlane.xlu0 %1547
  %v1549 = vsel %vm599, %v1315, 0.0
  %1550 = vadd.xlane.f32.xlu0 %v1549
  %v1551 = vpop.xlane.xlu0 %1550
  %v1552 = vsel %vm599, %v1317, 0.0
  %1553 = vadd.xlane.f32.xlu0 %v1552
  %v1554 = vpop.xlane.xlu0 %1553
  %v1555 = vsel %vm599, %v1319, 0.0
  %1556 = vadd.xlane.f32.xlu0 %v1555
  %v1557 = vpop.xlane.xlu0 %1556
  %v1558 = vsel %vm599, %v1321, 0.0
  %1559 = vadd.xlane.f32.xlu0 %v1558
  %v1560 = vpop.xlane.xlu0 %1559
  %v1561 = vsel %vm599, %v1323, 0.0
  %1562 = vadd.xlane.f32.xlu0 %v1561
  %v1563 = vpop.xlane.xlu0 %1562
  %v1564 = vsel %vm599, %v1325, 0.0
  %1565 = vadd.xlane.f32.xlu0 %v1564
  %v1566 = vpop.xlane.xlu0 %1565
  %v1567 = vsel %vm599, %v1327, 0.0
  %1568 = vadd.xlane.f32.xlu0 %v1567
  %v1569 = vpop.xlane.xlu0 %1568
  %v1570 = vsel %vm599, %v1329, 0.0
  %1571 = vadd.xlane.f32.xlu0 %v1570
  %v1572 = vpop.xlane.xlu0 %1571
  %v1573 = vsel %vm599, %v1331, 0.0
  %1574 = vadd.xlane.f32.xlu0 %v1573
  %v1575 = vpop.xlane.xlu0 %1574
  %v1576 = vsel %vm599, %v1333, 0.0
  %1577 = vadd.xlane.f32.xlu0 %v1576
  %v1578 = vpop.xlane.xlu0 %1577
  %v1579 = vsel %vm599, %v1335, 0.0
  %1580 = vadd.xlane.f32.xlu0 %v1579
  %v1581 = vpop.xlane.xlu0 %1580
  %v1582 = vsel %vm599, %v1337, 0.0
  %1583 = vadd.xlane.f32.xlu0 %v1582
  %v1584 = vpop.xlane.xlu0 %1583
  %v1585 = vsel %vm599, %v1339, 0.0
  %1586 = vadd.xlane.f32.xlu0 %v1585
  %v1587 = vpop.xlane.xlu0 %1586
  %v1588 = vsel %vm599, %v1341, 0.0
  %1589 = vadd.xlane.f32.xlu0 %v1588
  %v1590 = vpop.xlane.xlu0 %1589
  %v1591 = vsel %vm599, %v1343, 0.0
  %1592 = vadd.xlane.f32.xlu0 %v1591
  %v1593 = vpop.xlane.xlu0 %1592
  %v1594 = vsel %vm599, %v1345, 0.0
  %1595 = vadd.xlane.f32.xlu0 %v1594
  %v1596 = vpop.xlane.xlu0 %1595
  %v1597 = vsel %vm599, %v1347, 0.0
  %1598 = vadd.xlane.f32.xlu0 %v1597
  %v1599 = vpop.xlane.xlu0 %1598
  %v1600 = vsel %vm599, %v1349, 0.0
  %1601 = vadd.xlane.f32.xlu0 %v1600
  %v1602 = vpop.xlane.xlu0 %1601
  %v1603 = vsel %vm599, %v1351, 0.0
  %1604 = vadd.xlane.f32.xlu0 %v1603
  %v1605 = vpop.xlane.xlu0 %1604
  %v1606 = vsel %vm599, %v1353, 0.0
  %1607 = vadd.xlane.f32.xlu0 %v1606
  %v1608 = vpop.xlane.xlu0 %1607
  %v1609 = vsel %vm599, %v1355, 0.0
  %1610 = vadd.xlane.f32.xlu0 %v1609
  %v1611 = vpop.xlane.xlu0 %1610
  %v1676 = vlaneseq
  %v1677 = vand.u32 %v1676, 127
  %v1678 = vperm.slane %v1422, %v1677
  %v1679 = vadd.s32 %v1677, 4294967288
  %v1680 = vperm.slane %v1425, %v1679
  %vm1681 = vcmask 130112
  %v1682 = vsel %vm1681, %v1680, %v1678
  %v1683 = vperm.slane %v1428, %v1677
  %v1684 = vperm.slane %v1431, %v1679
  %v1685 = vsel %vm1681, %v1684, %v1683
  %v1686 = vperm.slane %v1434, %v1677
  %v1687 = vperm.slane %v1437, %v1679
  %v1688 = vsel %vm1681, %v1687, %v1686
  %v1689 = vperm.slane %v1440, %v1677
  %v1690 = vperm.slane %v1443, %v1679
  %v1691 = vsel %vm1681, %v1690, %v1689
  %v1692 = vperm.slane %v1446, %v1677
  %v1693 = vperm.slane %v1449, %v1679
  %v1694 = vsel %vm1681, %v1693, %v1692
  %v1695 = vperm.slane %v1452, %v1677
  %v1696 = vperm.slane %v1455, %v1679
  %v1697 = vsel %vm1681, %v1696, %v1695
  %v1698 = vperm.slane %v1458, %v1677
  %v1699 = vperm.slane %v1461, %v1679
  %v1700 = vsel %vm1681, %v1699, %v1698
  %v1701 = vperm.slane %v1464, %v1677
  %v1702 = vperm.slane %v1467, %v1679
  %v1703 = vsel %vm1681, %v1702, %v1701
  %v1704 = vperm.slane %v1470, %v1677
  %v1705 = vperm.slane %v1473, %v1679
  %v1706 = vsel %vm1681, %v1705, %v1704
  %v1707 = vperm.slane %v1476, %v1677
  %v1708 = vperm.slane %v1479, %v1679
  %v1709 = vsel %vm1681, %v1708, %v1707
  %v1710 = vperm.slane %v1482, %v1677
  %v1711 = vperm.slane %v1485, %v1679
  %v1712 = vsel %vm1681, %v1711, %v1710
  %v1713 = vperm.slane %v1488, %v1677
  %v1714 = vperm.slane %v1491, %v1679
  %v1715 = vsel %vm1681, %v1714, %v1713
  %v1716 = vperm.slane %v1494, %v1677
  %v1717 = vperm.slane %v1497, %v1679
  %v1718 = vsel %vm1681, %v1717, %v1716
  %v1719 = vperm.slane %v1500, %v1677
  %v1720 = vperm.slane %v1503, %v1679
  %v1721 = vsel %vm1681, %v1720, %v1719
  %v1722 = vperm.slane %v1506, %v1677
  %v1723 = vperm.slane %v1509, %v1679
  %v1724 = vsel %vm1681, %v1723, %v1722
  %v1725 = vperm.slane %v1512, %v1677
  %v1726 = vperm.slane %v1515, %v1679
  %v1727 = vsel %vm1681, %v1726, %v1725
  %v1728 = vperm.slane %v1518, %v1677
  %v1729 = vperm.slane %v1521, %v1679
  %v1730 = vsel %vm1681, %v1729, %v1728
  %v1731 = vperm.slane %v1524, %v1677
  %v1732 = vperm.slane %v1527, %v1679
  %v1733 = vsel %vm1681, %v1732, %v1731
  %v1734 = vperm.slane %v1530, %v1677
  %v1735 = vperm.slane %v1533, %v1679
  %v1736 = vsel %vm1681, %v1735, %v1734
  %v1737 = vperm.slane %v1536, %v1677
  %v1738 = vperm.slane %v1539, %v1679
  %v1739 = vsel %vm1681, %v1738, %v1737
  %v1740 = vperm.slane %v1542, %v1677
  %v1741 = vperm.slane %v1545, %v1679
  %v1742 = vsel %vm1681, %v1741, %v1740
  %v1743 = vperm.slane %v1548, %v1677
  %v1744 = vperm.slane %v1551, %v1679
  %v1745 = vsel %vm1681, %v1744, %v1743
  %v1746 = vperm.slane %v1554, %v1677
  %v1747 = vperm.slane %v1557, %v1679
  %v1748 = vsel %vm1681, %v1747, %v1746
  %v1749 = vperm.slane %v1560, %v1677
  %v1750 = vperm.slane %v1563, %v1679
  %v1751 = vsel %vm1681, %v1750, %v1749
  %v1752 = vperm.slane %v1566, %v1677
  %v1753 = vperm.slane %v1569, %v1679
  %v1754 = vsel %vm1681, %v1753, %v1752
  %v1755 = vperm.slane %v1572, %v1677
  %v1756 = vperm.slane %v1575, %v1679
  %v1757 = vsel %vm1681, %v1756, %v1755
  %v1758 = vperm.slane %v1578, %v1677
  %v1759 = vperm.slane %v1581, %v1679
  %v1760 = vsel %vm1681, %v1759, %v1758
  %v1761 = vperm.slane %v1584, %v1677
  %v1762 = vperm.slane %v1587, %v1679
  %v1763 = vsel %vm1681, %v1762, %v1761
  %v1764 = vperm.slane %v1590, %v1677
  %v1765 = vperm.slane %v1593, %v1679
  %v1766 = vsel %vm1681, %v1765, %v1764
  %v1767 = vperm.slane %v1596, %v1677
  %v1768 = vperm.slane %v1599, %v1679
  %v1769 = vsel %vm1681, %v1768, %v1767
  %v1770 = vperm.slane %v1602, %v1677
  %v1771 = vperm.slane %v1605, %v1679
  %v1772 = vsel %vm1681, %v1771, %v1770
  %v1773 = vperm.slane %v1608, %v1677
  %v1774 = vperm.slane %v1611, %v1679
  %v1775 = vsel %vm1681, %v1774, %v1773
  %vm1776 = vcmask 1041409
  %v1777 = vsel %vm1776, %v1685, %v1682
  %vm1778 = vcmask 1042434
  %v1779 = vsel %vm1778, %v1688, %v1777
  %vm1780 = vcmask 1043459
  %v1781 = vsel %vm1780, %v1691, %v1779
  %vm1782 = vcmask 1044484
  %v1783 = vsel %vm1782, %v1694, %v1781
  %vm1784 = vcmask 1045509
  %v1785 = vsel %vm1784, %v1697, %v1783
  %vm1786 = vcmask 1046534
  %v1787 = vsel %vm1786, %v1700, %v1785
  %vm1788 = vcmask 1047559
  %v1789 = vsel %vm1788, %v1703, %v1787
  %v1790 = vsel %vm1776, %v1709, %v1706
  %v1791 = vsel %vm1778, %v1712, %v1790
  %v1792 = vsel %vm1780, %v1715, %v1791
  %v1793 = vsel %vm1782, %v1718, %v1792
  %v1794 = vsel %vm1784, %v1721, %v1793
  %v1795 = vsel %vm1786, %v1724, %v1794
  %v1796 = vsel %vm1788, %v1727, %v1795
  %v1797 = vsel %vm1776, %v1733, %v1730
  %v1798 = vsel %vm1778, %v1736, %v1797
  %v1799 = vsel %vm1780, %v1739, %v1798
  %v1800 = vsel %vm1782, %v1742, %v1799
  %v1801 = vsel %vm1784, %v1745, %v1800
  %v1802 = vsel %vm1786, %v1748, %v1801
  %v1803 = vsel %vm1788, %v1751, %v1802
  %v1804 = vsel %vm1776, %v1757, %v1754
  %v1805 = vsel %vm1778, %v1760, %v1804
  %v1806 = vsel %vm1780, %v1763, %v1805
  %v1807 = vsel %vm1782, %v1766, %v1806
  %v1808 = vsel %vm1784, %v1769, %v1807
  %v1809 = vsel %vm1786, %v1772, %v1808
  %v1810 = vsel %vm1788, %v1775, %v1809
  %vm1815 = vcmask 130048
  %v1816 = vsel %vm1815, %v1789, -inf
  %1817 = vmax.xlane.f32.xlu0 %v1816
  %v1818 = vpop.xlane.xlu0 %1817
  %v1819 = vsel %vm1815, %v1796, -inf
  %1820 = vmax.xlane.f32.xlu0 %v1819
  %v1821 = vpop.xlane.xlu0 %1820
  %v1822 = vsel %vm1815, %v1803, -inf
  %1823 = vmax.xlane.f32.xlu0 %v1822
  %v1824 = vpop.xlane.xlu0 %1823
  %v1825 = vsel %vm1815, %v1810, -inf
  %1826 = vmax.xlane.f32.xlu0 %v1825
  %v1827 = vpop.xlane.xlu0 %1826
  %v1832 = vperm.slane %v1818, 0
  %v1833 = vperm.slane %v1818, 1
  %v1834 = vperm.slane %v1818, 2
  %v1835 = vperm.slane %v1818, 3
  %v1836 = vperm.slane %v1818, 4
  %v1837 = vperm.slane %v1818, 5
  %v1838 = vperm.slane %v1818, 6
  %v1839 = vperm.slane %v1818, 7
  %v1840 = vperm.slane %v1821, 0
  %v1841 = vperm.slane %v1821, 1
  %v1842 = vperm.slane %v1821, 2
  %v1843 = vperm.slane %v1821, 3
  %v1844 = vperm.slane %v1821, 4
  %v1845 = vperm.slane %v1821, 5
  %v1846 = vperm.slane %v1821, 6
  %v1847 = vperm.slane %v1821, 7
  %v1848 = vperm.slane %v1824, 0
  %v1849 = vperm.slane %v1824, 1
  %v1850 = vperm.slane %v1824, 2
  %v1851 = vperm.slane %v1824, 3
  %v1852 = vperm.slane %v1824, 4
  %v1853 = vperm.slane %v1824, 5
  %v1854 = vperm.slane %v1824, 6
  %v1855 = vperm.slane %v1824, 7
  %v1856 = vperm.slane %v1827, 0
  %v1857 = vperm.slane %v1827, 1
  %v1858 = vperm.slane %v1827, 2
  %v1859 = vperm.slane %v1827, 3
  %v1860 = vperm.slane %v1827, 4
  %v1861 = vperm.slane %v1827, 5
  %v1862 = vperm.slane %v1827, 6
  %v1863 = vperm.slane %v1827, 7
  %v1896 = vsub.f32 %v1422, %v1832
  %v1897 = vsub.f32 %v1425, %v1832
  %v1898 = vsub.f32 %v1428, %v1833
  %v1899 = vsub.f32 %v1431, %v1833
  %v1900 = vsub.f32 %v1434, %v1834
  %v1901 = vsub.f32 %v1437, %v1834
  %v1902 = vsub.f32 %v1440, %v1835
  %v1903 = vsub.f32 %v1443, %v1835
  %v1904 = vsub.f32 %v1446, %v1836
  %v1905 = vsub.f32 %v1449, %v1836
  %v1906 = vsub.f32 %v1452, %v1837
  %v1907 = vsub.f32 %v1455, %v1837
  %v1908 = vsub.f32 %v1458, %v1838
  %v1909 = vsub.f32 %v1461, %v1838
  %v1910 = vsub.f32 %v1464, %v1839
  %v1911 = vsub.f32 %v1467, %v1839
  %v1912 = vsub.f32 %v1470, %v1840
  %v1913 = vsub.f32 %v1473, %v1840
  %v1914 = vsub.f32 %v1476, %v1841
  %v1915 = vsub.f32 %v1479, %v1841
  %v1916 = vsub.f32 %v1482, %v1842
  %v1917 = vsub.f32 %v1485, %v1842
  %v1918 = vsub.f32 %v1488, %v1843
  %v1919 = vsub.f32 %v1491, %v1843
  %v1920 = vsub.f32 %v1494, %v1844
  %v1921 = vsub.f32 %v1497, %v1844
  %v1922 = vsub.f32 %v1500, %v1845
  %v1923 = vsub.f32 %v1503, %v1845
  %v1924 = vsub.f32 %v1506, %v1846
  %v1925 = vsub.f32 %v1509, %v1846
  %v1926 = vsub.f32 %v1512, %v1847
  %v1927 = vsub.f32 %v1515, %v1847
  %v1928 = vsub.f32 %v1518, %v1848
  %v1929 = vsub.f32 %v1521, %v1848
  %v1930 = vsub.f32 %v1524, %v1849
  %v1931 = vsub.f32 %v1527, %v1849
  %v1932 = vsub.f32 %v1530, %v1850
  %v1933 = vsub.f32 %v1533, %v1850
  %v1934 = vsub.f32 %v1536, %v1851
  %v1935 = vsub.f32 %v1539, %v1851
  %v1936 = vsub.f32 %v1542, %v1852
  %v1937 = vsub.f32 %v1545, %v1852
  %v1938 = vsub.f32 %v1548, %v1853
  %v1939 = vsub.f32 %v1551, %v1853
  %v1940 = vsub.f32 %v1554, %v1854
  %v1941 = vsub.f32 %v1557, %v1854
  %v1942 = vsub.f32 %v1560, %v1855
  %v1943 = vsub.f32 %v1563, %v1855
  %v1944 = vsub.f32 %v1566, %v1856
  %v1945 = vsub.f32 %v1569, %v1856
  %v1946 = vsub.f32 %v1572, %v1857
  %v1947 = vsub.f32 %v1575, %v1857
  %v1948 = vsub.f32 %v1578, %v1858
  %v1949 = vsub.f32 %v1581, %v1858
  %v1950 = vsub.f32 %v1584, %v1859
  %v1951 = vsub.f32 %v1587, %v1859
  %v1952 = vsub.f32 %v1590, %v1860
  %v1953 = vsub.f32 %v1593, %v1860
  %v1954 = vsub.f32 %v1596, %v1861
  %v1955 = vsub.f32 %v1599, %v1861
  %v1956 = vsub.f32 %v1602, %v1862
  %v1957 = vsub.f32 %v1605, %v1862
  %v1958 = vsub.f32 %v1608, %v1863
  %v1959 = vsub.f32 %v1611, %v1863
  %v1960 = vmul.f32 %v1896, 1.442695
  %v1961 = vpow.pop %v1960
  %v1962 = vmul.f32 %v1897, 1.442695
  %v1963 = vpow.pop %v1962
  %v1964 = vmul.f32 %v1898, 1.442695
  %v1965 = vpow.pop %v1964
  %v1966 = vmul.f32 %v1899, 1.442695
  %v1967 = vpow.pop %v1966
  %v1968 = vmul.f32 %v1900, 1.442695
  %v1969 = vpow.pop %v1968
  %v1970 = vmul.f32 %v1901, 1.442695
  %v1971 = vpow.pop %v1970
  %v1972 = vmul.f32 %v1902, 1.442695
  %v1973 = vpow.pop %v1972
  %v1974 = vmul.f32 %v1903, 1.442695
  %v1975 = vpow.pop %v1974
  %v1976 = vmul.f32 %v1904, 1.442695
  %v1977 = vpow.pop %v1976
  %v1978 = vmul.f32 %v1905, 1.442695
  %v1979 = vpow.pop %v1978
  %v1980 = vmul.f32 %v1906, 1.442695
  %v1981 = vpow.pop %v1980
  %v1982 = vmul.f32 %v1907, 1.442695
  %v1983 = vpow.pop %v1982
  %v1984 = vmul.f32 %v1908, 1.442695
  %v1985 = vpow.pop %v1984
  %v1986 = vmul.f32 %v1909, 1.442695
  %v1987 = vpow.pop %v1986
  %v1988 = vmul.f32 %v1910, 1.442695
  %v1989 = vpow.pop %v1988
  %v1990 = vmul.f32 %v1911, 1.442695
  %v1991 = vpow.pop %v1990
  %v1992 = vmul.f32 %v1912, 1.442695
  %v1993 = vpow.pop %v1992
  %v1994 = vmul.f32 %v1913, 1.442695
  %v1995 = vpow.pop %v1994
  %v1996 = vmul.f32 %v1914, 1.442695
  %v1997 = vpow.pop %v1996
  %v1998 = vmul.f32 %v1915, 1.442695
  %v1999 = vpow.pop %v1998
  %v2000 = vmul.f32 %v1916, 1.442695
  %v2001 = vpow.pop %v2000
  %v2002 = vmul.f32 %v1917, 1.442695
  %v2003 = vpow.pop %v2002
  %v2004 = vmul.f32 %v1918, 1.442695
  %v2005 = vpow.pop %v2004
  %v2006 = vmul.f32 %v1919, 1.442695
  %v2007 = vpow.pop %v2006
  %v2008 = vmul.f32 %v1920, 1.442695
  %v2009 = vpow.pop %v2008
  %v2010 = vmul.f32 %v1921, 1.442695
  %v2011 = vpow.pop %v2010
  %v2012 = vmul.f32 %v1922, 1.442695
  %v2013 = vpow.pop %v2012
  %v2014 = vmul.f32 %v1923, 1.442695
  %v2015 = vpow.pop %v2014
  %v2016 = vmul.f32 %v1924, 1.442695
  %v2017 = vpow.pop %v2016
  %v2018 = vmul.f32 %v1925, 1.442695
  %v2019 = vpow.pop %v2018
  %v2020 = vmul.f32 %v1926, 1.442695
  %v2021 = vpow.pop %v2020
  %v2022 = vmul.f32 %v1927, 1.442695
  %v2023 = vpow.pop %v2022
  %v2024 = vmul.f32 %v1928, 1.442695
  %v2025 = vpow.pop %v2024
  %v2026 = vmul.f32 %v1929, 1.442695
  %v2027 = vpow.pop %v2026
  %v2028 = vmul.f32 %v1930, 1.442695
  %v2029 = vpow.pop %v2028
  %v2030 = vmul.f32 %v1931, 1.442695
  %v2031 = vpow.pop %v2030
  %v2032 = vmul.f32 %v1932, 1.442695
  %v2033 = vpow.pop %v2032
  %v2034 = vmul.f32 %v1933, 1.442695
  %v2035 = vpow.pop %v2034
  %v2036 = vmul.f32 %v1934, 1.442695
  %v2037 = vpow.pop %v2036
  %v2038 = vmul.f32 %v1935, 1.442695
  %v2039 = vpow.pop %v2038
  %v2040 = vmul.f32 %v1936, 1.442695
  %v2041 = vpow.pop %v2040
  %v2042 = vmul.f32 %v1937, 1.442695
  %v2043 = vpow.pop %v2042
  %v2044 = vmul.f32 %v1938, 1.442695
  %v2045 = vpow.pop %v2044
  %v2046 = vmul.f32 %v1939, 1.442695
  %v2047 = vpow.pop %v2046
  %v2048 = vmul.f32 %v1940, 1.442695
  %v2049 = vpow.pop %v2048
  %v2050 = vmul.f32 %v1941, 1.442695
  %v2051 = vpow.pop %v2050
  %v2052 = vmul.f32 %v1942, 1.442695
  %v2053 = vpow.pop %v2052
  %v2054 = vmul.f32 %v1943, 1.442695
  %v2055 = vpow.pop %v2054
  %v2056 = vmul.f32 %v1944, 1.442695
  %v2057 = vpow.pop %v2056
  %v2058 = vmul.f32 %v1945, 1.442695
  %v2059 = vpow.pop %v2058
  %v2060 = vmul.f32 %v1946, 1.442695
  %v2061 = vpow.pop %v2060
  %v2062 = vmul.f32 %v1947, 1.442695
  %v2063 = vpow.pop %v2062
  %v2064 = vmul.f32 %v1948, 1.442695
  %v2065 = vpow.pop %v2064
  %v2066 = vmul.f32 %v1949, 1.442695
  %v2067 = vpow.pop %v2066
  %v2068 = vmul.f32 %v1950, 1.442695
  %v2069 = vpow.pop %v2068
  %v2070 = vmul.f32 %v1951, 1.442695
  %v2071 = vpow.pop %v2070
  %v2072 = vmul.f32 %v1952, 1.442695
  %v2073 = vpow.pop %v2072
  %v2074 = vmul.f32 %v1953, 1.442695
  %v2075 = vpow.pop %v2074
  %v2076 = vmul.f32 %v1954, 1.442695
  %v2077 = vpow.pop %v2076
  %v2078 = vmul.f32 %v1955, 1.442695
  %v2079 = vpow.pop %v2078
  %v2080 = vmul.f32 %v1956, 1.442695
  %v2081 = vpow.pop %v2080
  %v2082 = vmul.f32 %v1957, 1.442695
  %v2083 = vpow.pop %v2082
  %v2084 = vmul.f32 %v1958, 1.442695
  %v2085 = vpow.pop %v2084
  %v2086 = vmul.f32 %v1959, 1.442695
  %v2087 = vpow.pop %v2086
  %2152 = vset.pattern.permute.xlu0 0
  %2153 = vperm.xlu0 %2152, %v1961
  %v2154 = vpop.permute.xlu0 %2153
  %2155 = vset.pattern.permute.xlu0 0
  %2156 = vperm.xlu0 %2155, %v1963
  %v2157 = vpop.permute.xlu0 %2156
  %2158 = vset.pattern.permute.xlu0 0
  %2159 = vperm.xlu0 %2158, %v1965
  %v2160 = vpop.permute.xlu0 %2159
  %2161 = vset.pattern.permute.xlu0 0
  %2162 = vperm.xlu0 %2161, %v1967
  %v2163 = vpop.permute.xlu0 %2162
  %2164 = vset.pattern.permute.xlu0 0
  %2165 = vperm.xlu0 %2164, %v1969
  %v2166 = vpop.permute.xlu0 %2165
  %2167 = vset.pattern.permute.xlu0 0
  %2168 = vperm.xlu0 %2167, %v1971
  %v2169 = vpop.permute.xlu0 %2168
  %2170 = vset.pattern.permute.xlu0 0
  %2171 = vperm.xlu0 %2170, %v1973
  %v2172 = vpop.permute.xlu0 %2171
  %2173 = vset.pattern.permute.xlu0 0
  %2174 = vperm.xlu0 %2173, %v1975
  %v2175 = vpop.permute.xlu0 %2174
  %2176 = vset.pattern.permute.xlu0 0
  %2177 = vperm.xlu0 %2176, %v1977
  %v2178 = vpop.permute.xlu0 %2177
  %2179 = vset.pattern.permute.xlu0 0
  %2180 = vperm.xlu0 %2179, %v1979
  %v2181 = vpop.permute.xlu0 %2180
  %2182 = vset.pattern.permute.xlu0 0
  %2183 = vperm.xlu0 %2182, %v1981
  %v2184 = vpop.permute.xlu0 %2183
  %2185 = vset.pattern.permute.xlu0 0
  %2186 = vperm.xlu0 %2185, %v1983
  %v2187 = vpop.permute.xlu0 %2186
  %2188 = vset.pattern.permute.xlu0 0
  %2189 = vperm.xlu0 %2188, %v1985
  %v2190 = vpop.permute.xlu0 %2189
  %2191 = vset.pattern.permute.xlu0 0
  %2192 = vperm.xlu0 %2191, %v1987
  %v2193 = vpop.permute.xlu0 %2192
  %2194 = vset.pattern.permute.xlu0 0
  %2195 = vperm.xlu0 %2194, %v1989
  %v2196 = vpop.permute.xlu0 %2195
  %2197 = vset.pattern.permute.xlu0 0
  %2198 = vperm.xlu0 %2197, %v1991
  %v2199 = vpop.permute.xlu0 %2198
  %2200 = vset.pattern.permute.xlu0 0
  %2201 = vperm.xlu0 %2200, %v1993
  %v2202 = vpop.permute.xlu0 %2201
  %2203 = vset.pattern.permute.xlu0 0
  %2204 = vperm.xlu0 %2203, %v1995
  %v2205 = vpop.permute.xlu0 %2204
  %2206 = vset.pattern.permute.xlu0 0
  %2207 = vperm.xlu0 %2206, %v1997
  %v2208 = vpop.permute.xlu0 %2207
  %2209 = vset.pattern.permute.xlu0 0
  %2210 = vperm.xlu0 %2209, %v1999
  %v2211 = vpop.permute.xlu0 %2210
  %2212 = vset.pattern.permute.xlu0 0
  %2213 = vperm.xlu0 %2212, %v2001
  %v2214 = vpop.permute.xlu0 %2213
  %2215 = vset.pattern.permute.xlu0 0
  %2216 = vperm.xlu0 %2215, %v2003
  %v2217 = vpop.permute.xlu0 %2216
  %2218 = vset.pattern.permute.xlu0 0
  %2219 = vperm.xlu0 %2218, %v2005
  %v2220 = vpop.permute.xlu0 %2219
  %2221 = vset.pattern.permute.xlu0 0
  %2222 = vperm.xlu0 %2221, %v2007
  %v2223 = vpop.permute.xlu0 %2222
  %2224 = vset.pattern.permute.xlu0 0
  %2225 = vperm.xlu0 %2224, %v2009
  %v2226 = vpop.permute.xlu0 %2225
  %2227 = vset.pattern.permute.xlu0 0
  %2228 = vperm.xlu0 %2227, %v2011
  %v2229 = vpop.permute.xlu0 %2228
  %2230 = vset.pattern.permute.xlu0 0
  %2231 = vperm.xlu0 %2230, %v2013
  %v2232 = vpop.permute.xlu0 %2231
  %2233 = vset.pattern.permute.xlu0 0
  %2234 = vperm.xlu0 %2233, %v2015
  %v2235 = vpop.permute.xlu0 %2234
  %2236 = vset.pattern.permute.xlu0 0
  %2237 = vperm.xlu0 %2236, %v2017
  %v2238 = vpop.permute.xlu0 %2237
  %2239 = vset.pattern.permute.xlu0 0
  %2240 = vperm.xlu0 %2239, %v2019
  %v2241 = vpop.permute.xlu0 %2240
  %2242 = vset.pattern.permute.xlu0 0
  %2243 = vperm.xlu0 %2242, %v2021
  %v2244 = vpop.permute.xlu0 %2243
  %2245 = vset.pattern.permute.xlu0 0
  %2246 = vperm.xlu0 %2245, %v2023
  %v2247 = vpop.permute.xlu0 %2246
  %2248 = vset.pattern.permute.xlu0 0
  %2249 = vperm.xlu0 %2248, %v2025
  %v2250 = vpop.permute.xlu0 %2249
  %2251 = vset.pattern.permute.xlu0 0
  %2252 = vperm.xlu0 %2251, %v2027
  %v2253 = vpop.permute.xlu0 %2252
  %2254 = vset.pattern.permute.xlu0 0
  %2255 = vperm.xlu0 %2254, %v2029
  %v2256 = vpop.permute.xlu0 %2255
  %2257 = vset.pattern.permute.xlu0 0
  %2258 = vperm.xlu0 %2257, %v2031
  %v2259 = vpop.permute.xlu0 %2258
  %2260 = vset.pattern.permute.xlu0 0
  %2261 = vperm.xlu0 %2260, %v2033
  %v2262 = vpop.permute.xlu0 %2261
  %2263 = vset.pattern.permute.xlu0 0
  %2264 = vperm.xlu0 %2263, %v2035
  %v2265 = vpop.permute.xlu0 %2264
  %2266 = vset.pattern.permute.xlu0 0
  %2267 = vperm.xlu0 %2266, %v2037
  %v2268 = vpop.permute.xlu0 %2267
  %2269 = vset.pattern.permute.xlu0 0
  %2270 = vperm.xlu0 %2269, %v2039
  %v2271 = vpop.permute.xlu0 %2270
  %2272 = vset.pattern.permute.xlu0 0
  %2273 = vperm.xlu0 %2272, %v2041
  %v2274 = vpop.permute.xlu0 %2273
  %2275 = vset.pattern.permute.xlu0 0
  %2276 = vperm.xlu0 %2275, %v2043
  %v2277 = vpop.permute.xlu0 %2276
  %2278 = vset.pattern.permute.xlu0 0
  %2279 = vperm.xlu0 %2278, %v2045
  %v2280 = vpop.permute.xlu0 %2279
  %2281 = vset.pattern.permute.xlu0 0
  %2282 = vperm.xlu0 %2281, %v2047
  %v2283 = vpop.permute.xlu0 %2282
  %2284 = vset.pattern.permute.xlu0 0
  %2285 = vperm.xlu0 %2284, %v2049
  %v2286 = vpop.permute.xlu0 %2285
  %2287 = vset.pattern.permute.xlu0 0
  %2288 = vperm.xlu0 %2287, %v2051
  %v2289 = vpop.permute.xlu0 %2288
  %2290 = vset.pattern.permute.xlu0 0
  %2291 = vperm.xlu0 %2290, %v2053
  %v2292 = vpop.permute.xlu0 %2291
  %2293 = vset.pattern.permute.xlu0 0
  %2294 = vperm.xlu0 %2293, %v2055
  %v2295 = vpop.permute.xlu0 %2294
  %2296 = vset.pattern.permute.xlu0 0
  %2297 = vperm.xlu0 %2296, %v2057
  %v2298 = vpop.permute.xlu0 %2297
  %2299 = vset.pattern.permute.xlu0 0
  %2300 = vperm.xlu0 %2299, %v2059
  %v2301 = vpop.permute.xlu0 %2300
  %2302 = vset.pattern.permute.xlu0 0
  %2303 = vperm.xlu0 %2302, %v2061
  %v2304 = vpop.permute.xlu0 %2303
  %2305 = vset.pattern.permute.xlu0 0
  %2306 = vperm.xlu0 %2305, %v2063
  %v2307 = vpop.permute.xlu0 %2306
  %2308 = vset.pattern.permute.xlu0 0
  %2309 = vperm.xlu0 %2308, %v2065
  %v2310 = vpop.permute.xlu0 %2309
  %2311 = vset.pattern.permute.xlu0 0
  %2312 = vperm.xlu0 %2311, %v2067
  %v2313 = vpop.permute.xlu0 %2312
  %2314 = vset.pattern.permute.xlu0 0
  %2315 = vperm.xlu0 %2314, %v2069
  %v2316 = vpop.permute.xlu0 %2315
  %2317 = vset.pattern.permute.xlu0 0
  %2318 = vperm.xlu0 %2317, %v2071
  %v2319 = vpop.permute.xlu0 %2318
  %2320 = vset.pattern.permute.xlu0 0
  %2321 = vperm.xlu0 %2320, %v2073
  %v2322 = vpop.permute.xlu0 %2321
  %2323 = vset.pattern.permute.xlu0 0
  %2324 = vperm.xlu0 %2323, %v2075
  %v2325 = vpop.permute.xlu0 %2324
  %2326 = vset.pattern.permute.xlu0 0
  %2327 = vperm.xlu0 %2326, %v2077
  %v2328 = vpop.permute.xlu0 %2327
  %2329 = vset.pattern.permute.xlu0 0
  %2330 = vperm.xlu0 %2329, %v2079
  %v2331 = vpop.permute.xlu0 %2330
  %2332 = vset.pattern.permute.xlu0 0
  %2333 = vperm.xlu0 %2332, %v2081
  %v2334 = vpop.permute.xlu0 %2333
  %2335 = vset.pattern.permute.xlu0 0
  %2336 = vperm.xlu0 %2335, %v2083
  %v2337 = vpop.permute.xlu0 %2336
  %2338 = vset.pattern.permute.xlu0 0
  %2339 = vperm.xlu0 %2338, %v2085
  %v2340 = vpop.permute.xlu0 %2339
  %2341 = vset.pattern.permute.xlu0 0
  %2342 = vperm.xlu0 %2341, %v2087
  %v2343 = vpop.permute.xlu0 %2342
  %v2344 = vperm.slane %v2154, %v1677
  %v2345 = vperm.slane %v2157, %v1679
  %v2346 = vsel %vm1681, %v2345, %v2344
  %v2347 = vperm.slane %v2160, %v1677
  %v2348 = vperm.slane %v2163, %v1679
  %v2349 = vsel %vm1681, %v2348, %v2347
  %v2350 = vperm.slane %v2166, %v1677
  %v2351 = vperm.slane %v2169, %v1679
  %v2352 = vsel %vm1681, %v2351, %v2350
  %v2353 = vperm.slane %v2172, %v1677
  %v2354 = vperm.slane %v2175, %v1679
  %v2355 = vsel %vm1681, %v2354, %v2353
  %v2356 = vperm.slane %v2178, %v1677
  %v2357 = vperm.slane %v2181, %v1679
  %v2358 = vsel %vm1681, %v2357, %v2356
  %v2359 = vperm.slane %v2184, %v1677
  %v2360 = vperm.slane %v2187, %v1679
  %v2361 = vsel %vm1681, %v2360, %v2359
  %v2362 = vperm.slane %v2190, %v1677
  %v2363 = vperm.slane %v2193, %v1679
  %v2364 = vsel %vm1681, %v2363, %v2362
  %v2365 = vperm.slane %v2196, %v1677
  %v2366 = vperm.slane %v2199, %v1679
  %v2367 = vsel %vm1681, %v2366, %v2365
  %v2368 = vperm.slane %v2202, %v1677
  %v2369 = vperm.slane %v2205, %v1679
  %v2370 = vsel %vm1681, %v2369, %v2368
  %v2371 = vperm.slane %v2208, %v1677
  %v2372 = vperm.slane %v2211, %v1679
  %v2373 = vsel %vm1681, %v2372, %v2371
  %v2374 = vperm.slane %v2214, %v1677
  %v2375 = vperm.slane %v2217, %v1679
  %v2376 = vsel %vm1681, %v2375, %v2374
  %v2377 = vperm.slane %v2220, %v1677
  %v2378 = vperm.slane %v2223, %v1679
  %v2379 = vsel %vm1681, %v2378, %v2377
  %v2380 = vperm.slane %v2226, %v1677
  %v2381 = vperm.slane %v2229, %v1679
  %v2382 = vsel %vm1681, %v2381, %v2380
  %v2383 = vperm.slane %v2232, %v1677
  %v2384 = vperm.slane %v2235, %v1679
  %v2385 = vsel %vm1681, %v2384, %v2383
  %v2386 = vperm.slane %v2238, %v1677
  %v2387 = vperm.slane %v2241, %v1679
  %v2388 = vsel %vm1681, %v2387, %v2386
  %v2389 = vperm.slane %v2244, %v1677
  %v2390 = vperm.slane %v2247, %v1679
  %v2391 = vsel %vm1681, %v2390, %v2389
  %v2392 = vperm.slane %v2250, %v1677
  %v2393 = vperm.slane %v2253, %v1679
  %v2394 = vsel %vm1681, %v2393, %v2392
  %v2395 = vperm.slane %v2256, %v1677
  %v2396 = vperm.slane %v2259, %v1679
  %v2397 = vsel %vm1681, %v2396, %v2395
  %v2398 = vperm.slane %v2262, %v1677
  %v2399 = vperm.slane %v2265, %v1679
  %v2400 = vsel %vm1681, %v2399, %v2398
  %v2401 = vperm.slane %v2268, %v1677
  %v2402 = vperm.slane %v2271, %v1679
  %v2403 = vsel %vm1681, %v2402, %v2401
  %v2404 = vperm.slane %v2274, %v1677
  %v2405 = vperm.slane %v2277, %v1679
  %v2406 = vsel %vm1681, %v2405, %v2404
  %v2407 = vperm.slane %v2280, %v1677
  %v2408 = vperm.slane %v2283, %v1679
  %v2409 = vsel %vm1681, %v2408, %v2407
  %v2410 = vperm.slane %v2286, %v1677
  %v2411 = vperm.slane %v2289, %v1679
  %v2412 = vsel %vm1681, %v2411, %v2410
  %v2413 = vperm.slane %v2292, %v1677
  %v2414 = vperm.slane %v2295, %v1679
  %v2415 = vsel %vm1681, %v2414, %v2413
  %v2416 = vperm.slane %v2298, %v1677
  %v2417 = vperm.slane %v2301, %v1679
  %v2418 = vsel %vm1681, %v2417, %v2416
  %v2419 = vperm.slane %v2304, %v1677
  %v2420 = vperm.slane %v2307, %v1679
  %v2421 = vsel %vm1681, %v2420, %v2419
  %v2422 = vperm.slane %v2310, %v1677
  %v2423 = vperm.slane %v2313, %v1679
  %v2424 = vsel %vm1681, %v2423, %v2422
  %v2425 = vperm.slane %v2316, %v1677
  %v2426 = vperm.slane %v2319, %v1679
  %v2427 = vsel %vm1681, %v2426, %v2425
  %v2428 = vperm.slane %v2322, %v1677
  %v2429 = vperm.slane %v2325, %v1679
  %v2430 = vsel %vm1681, %v2429, %v2428
  %v2431 = vperm.slane %v2328, %v1677
  %v2432 = vperm.slane %v2331, %v1679
  %v2433 = vsel %vm1681, %v2432, %v2431
  %v2434 = vperm.slane %v2334, %v1677
  %v2435 = vperm.slane %v2337, %v1679
  %v2436 = vsel %vm1681, %v2435, %v2434
  %v2437 = vperm.slane %v2340, %v1677
  %v2438 = vperm.slane %v2343, %v1679
  %v2439 = vsel %vm1681, %v2438, %v2437
  %v2440 = vsel %vm1776, %v2349, %v2346
  %v2441 = vsel %vm1778, %v2352, %v2440
  %v2442 = vsel %vm1780, %v2355, %v2441
  %v2443 = vsel %vm1782, %v2358, %v2442
  %v2444 = vsel %vm1784, %v2361, %v2443
  %v2445 = vsel %vm1786, %v2364, %v2444
  %v2446 = vsel %vm1788, %v2367, %v2445
  %v2447 = vsel %vm1776, %v2373, %v2370
  %v2448 = vsel %vm1778, %v2376, %v2447
  %v2449 = vsel %vm1780, %v2379, %v2448
  %v2450 = vsel %vm1782, %v2382, %v2449
  %v2451 = vsel %vm1784, %v2385, %v2450
  %v2452 = vsel %vm1786, %v2388, %v2451
  %v2453 = vsel %vm1788, %v2391, %v2452
  %v2454 = vsel %vm1776, %v2397, %v2394
  %v2455 = vsel %vm1778, %v2400, %v2454
  %v2456 = vsel %vm1780, %v2403, %v2455
  %v2457 = vsel %vm1782, %v2406, %v2456
  %v2458 = vsel %vm1784, %v2409, %v2457
  %v2459 = vsel %vm1786, %v2412, %v2458
  %v2460 = vsel %vm1788, %v2415, %v2459
  %v2461 = vsel %vm1776, %v2421, %v2418
  %v2462 = vsel %vm1778, %v2424, %v2461
  %v2463 = vsel %vm1780, %v2427, %v2462
  %v2464 = vsel %vm1782, %v2430, %v2463
  %v2465 = vsel %vm1784, %v2433, %v2464
  %v2466 = vsel %vm1786, %v2436, %v2465
  %v2467 = vsel %vm1788, %v2439, %v2466
  %v2472 = vsel %vm1815, %v2446, 0.0
  %2473 = vadd.xlane.f32.xlu0 %v2472
  %v2474 = vpop.xlane.xlu0 %2473
  %v2475 = vsel %vm1815, %v2453, 0.0
  %2476 = vadd.xlane.f32.xlu0 %v2475
  %v2477 = vpop.xlane.xlu0 %2476
  %v2478 = vsel %vm1815, %v2460, 0.0
  %2479 = vadd.xlane.f32.xlu0 %v2478
  %v2480 = vpop.xlane.xlu0 %2479
  %v2481 = vsel %vm1815, %v2467, 0.0
  %2482 = vadd.xlane.f32.xlu0 %v2481
  %v2483 = vpop.xlane.xlu0 %2482
  %v2488 = vperm.slane %v2474, 0
  %v2489 = vperm.slane %v2474, 1
  %v2490 = vperm.slane %v2474, 2
  %v2491 = vperm.slane %v2474, 3
  %v2492 = vperm.slane %v2474, 4
  %v2493 = vperm.slane %v2474, 5
  %v2494 = vperm.slane %v2474, 6
  %v2495 = vperm.slane %v2474, 7
  %v2496 = vperm.slane %v2477, 0
  %v2497 = vperm.slane %v2477, 1
  %v2498 = vperm.slane %v2477, 2
  %v2499 = vperm.slane %v2477, 3
  %v2500 = vperm.slane %v2477, 4
  %v2501 = vperm.slane %v2477, 5
  %v2502 = vperm.slane %v2477, 6
  %v2503 = vperm.slane %v2477, 7
  %v2504 = vperm.slane %v2480, 0
  %v2505 = vperm.slane %v2480, 1
  %v2506 = vperm.slane %v2480, 2
  %v2507 = vperm.slane %v2480, 3
  %v2508 = vperm.slane %v2480, 4
  %v2509 = vperm.slane %v2480, 5
  %v2510 = vperm.slane %v2480, 6
  %v2511 = vperm.slane %v2480, 7
  %v2512 = vperm.slane %v2483, 0
  %v2513 = vperm.slane %v2483, 1
  %v2514 = vperm.slane %v2483, 2
  %v2515 = vperm.slane %v2483, 3
  %v2516 = vperm.slane %v2483, 4
  %v2517 = vperm.slane %v2483, 5
  %v2518 = vperm.slane %v2483, 6
  %v2519 = vperm.slane %v2483, 7
  %v2552 = vrcp.pop %v2488
  %v2553 = vmul.f32 %v2488, %v2552
  %v2554 = vsub.f32 1.0, %v2553
  %v2555 = vmul.f32 %v2552, %v2554
  %v2556 = vadd.f32 %v2552, %v2555
  %vm2557 = vweird.f32 %v2488
  %vm2558 = vweird.f32 %v2552
  %vm2559 = vmor %vm2557, %vm2558
  %v2560 = vsel %vm2559, %v2552, %v2556
  %v2561 = vand.u32 2147483647, %v2488
  %vm2562 = vcmp.eq.f32.partialorder %v2561, 8.507059e+37
  %v2563 = vand.u32 %v2488, 2147483648
  %v2564 = vor.u32 1.1754944e-38, %v2563
  %v2565 = vsel %vm2562, %v2564, %v2560
  %v2566 = vmul.f32 %v1961, %v2565
  %v2567 = vmul.f32 %v1963, %v2565
  %v2568 = vrcp.pop %v2489
  %v2569 = vmul.f32 %v2489, %v2568
  %v2570 = vsub.f32 1.0, %v2569
  %v2571 = vmul.f32 %v2568, %v2570
  %v2572 = vadd.f32 %v2568, %v2571
  %vm2573 = vweird.f32 %v2489
  %vm2574 = vweird.f32 %v2568
  %vm2575 = vmor %vm2573, %vm2574
  %v2576 = vsel %vm2575, %v2568, %v2572
  %v2577 = vand.u32 2147483647, %v2489
  %vm2578 = vcmp.eq.f32.partialorder %v2577, 8.507059e+37
  %v2579 = vand.u32 %v2489, 2147483648
  %v2580 = vor.u32 1.1754944e-38, %v2579
  %v2581 = vsel %vm2578, %v2580, %v2576
  %v2582 = vmul.f32 %v1965, %v2581
  %v2583 = vmul.f32 %v1967, %v2581
  %v2584 = vrcp.pop %v2490
  %v2585 = vmul.f32 %v2490, %v2584
  %v2586 = vsub.f32 1.0, %v2585
  %v2587 = vmul.f32 %v2584, %v2586
  %v2588 = vadd.f32 %v2584, %v2587
  %vm2589 = vweird.f32 %v2490
  %vm2590 = vweird.f32 %v2584
  %vm2591 = vmor %vm2589, %vm2590
  %v2592 = vsel %vm2591, %v2584, %v2588
  %v2593 = vand.u32 2147483647, %v2490
  %vm2594 = vcmp.eq.f32.partialorder %v2593, 8.507059e+37
  %v2595 = vand.u32 %v2490, 2147483648
  %v2596 = vor.u32 1.1754944e-38, %v2595
  %v2597 = vsel %vm2594, %v2596, %v2592
  %v2598 = vmul.f32 %v1969, %v2597
  %v2599 = vmul.f32 %v1971, %v2597
  %v2600 = vrcp.pop %v2491
  %v2601 = vmul.f32 %v2491, %v2600
  %v2602 = vsub.f32 1.0, %v2601
  %v2603 = vmul.f32 %v2600, %v2602
  %v2604 = vadd.f32 %v2600, %v2603
  %vm2605 = vweird.f32 %v2491
  %vm2606 = vweird.f32 %v2600
  %vm2607 = vmor %vm2605, %vm2606
  %v2608 = vsel %vm2607, %v2600, %v2604
  %v2609 = vand.u32 2147483647, %v2491
  %vm2610 = vcmp.eq.f32.partialorder %v2609, 8.507059e+37
  %v2611 = vand.u32 %v2491, 2147483648
  %v2612 = vor.u32 1.1754944e-38, %v2611
  %v2613 = vsel %vm2610, %v2612, %v2608
  %v2614 = vmul.f32 %v1973, %v2613
  %v2615 = vmul.f32 %v1975, %v2613
  %v2616 = vrcp.pop %v2492
  %v2617 = vmul.f32 %v2492, %v2616
  %v2618 = vsub.f32 1.0, %v2617
  %v2619 = vmul.f32 %v2616, %v2618
  %v2620 = vadd.f32 %v2616, %v2619
  %vm2621 = vweird.f32 %v2492
  %vm2622 = vweird.f32 %v2616
  %vm2623 = vmor %vm2621, %vm2622
  %v2624 = vsel %vm2623, %v2616, %v2620
  %v2625 = vand.u32 2147483647, %v2492
  %vm2626 = vcmp.eq.f32.partialorder %v2625, 8.507059e+37
  %v2627 = vand.u32 %v2492, 2147483648
  %v2628 = vor.u32 1.1754944e-38, %v2627
  %v2629 = vsel %vm2626, %v2628, %v2624
  %v2630 = vmul.f32 %v1977, %v2629
  %v2631 = vmul.f32 %v1979, %v2629
  %v2632 = vrcp.pop %v2493
  %v2633 = vmul.f32 %v2493, %v2632
  %v2634 = vsub.f32 1.0, %v2633
  %v2635 = vmul.f32 %v2632, %v2634
  %v2636 = vadd.f32 %v2632, %v2635
  %vm2637 = vweird.f32 %v2493
  %vm2638 = vweird.f32 %v2632
  %vm2639 = vmor %vm2637, %vm2638
  %v2640 = vsel %vm2639, %v2632, %v2636
  %v2641 = vand.u32 2147483647, %v2493
  %vm2642 = vcmp.eq.f32.partialorder %v2641, 8.507059e+37
  %v2643 = vand.u32 %v2493, 2147483648
  %v2644 = vor.u32 1.1754944e-38, %v2643
  %v2645 = vsel %vm2642, %v2644, %v2640
  %v2646 = vmul.f32 %v1981, %v2645
  %v2647 = vmul.f32 %v1983, %v2645
  %v2648 = vrcp.pop %v2494
  %v2649 = vmul.f32 %v2494, %v2648
  %v2650 = vsub.f32 1.0, %v2649
  %v2651 = vmul.f32 %v2648, %v2650
  %v2652 = vadd.f32 %v2648, %v2651
  %vm2653 = vweird.f32 %v2494
  %vm2654 = vweird.f32 %v2648
  %vm2655 = vmor %vm2653, %vm2654
  %v2656 = vsel %vm2655, %v2648, %v2652
  %v2657 = vand.u32 2147483647, %v2494
  %vm2658 = vcmp.eq.f32.partialorder %v2657, 8.507059e+37
  %v2659 = vand.u32 %v2494, 2147483648
  %v2660 = vor.u32 1.1754944e-38, %v2659
  %v2661 = vsel %vm2658, %v2660, %v2656
  %v2662 = vmul.f32 %v1985, %v2661
  %v2663 = vmul.f32 %v1987, %v2661
  %v2664 = vrcp.pop %v2495
  %v2665 = vmul.f32 %v2495, %v2664
  %v2666 = vsub.f32 1.0, %v2665
  %v2667 = vmul.f32 %v2664, %v2666
  %v2668 = vadd.f32 %v2664, %v2667
  %vm2669 = vweird.f32 %v2495
  %vm2670 = vweird.f32 %v2664
  %vm2671 = vmor %vm2669, %vm2670
  %v2672 = vsel %vm2671, %v2664, %v2668
  %v2673 = vand.u32 2147483647, %v2495
  %vm2674 = vcmp.eq.f32.partialorder %v2673, 8.507059e+37
  %v2675 = vand.u32 %v2495, 2147483648
  %v2676 = vor.u32 1.1754944e-38, %v2675
  %v2677 = vsel %vm2674, %v2676, %v2672
  %v2678 = vmul.f32 %v1989, %v2677
  %v2679 = vmul.f32 %v1991, %v2677
  %v2680 = vrcp.pop %v2496
  %v2681 = vmul.f32 %v2496, %v2680
  %v2682 = vsub.f32 1.0, %v2681
  %v2683 = vmul.f32 %v2680, %v2682
  %v2684 = vadd.f32 %v2680, %v2683
  %vm2685 = vweird.f32 %v2496
  %vm2686 = vweird.f32 %v2680
  %vm2687 = vmor %vm2685, %vm2686
  %v2688 = vsel %vm2687, %v2680, %v2684
  %v2689 = vand.u32 2147483647, %v2496
  %vm2690 = vcmp.eq.f32.partialorder %v2689, 8.507059e+37
  %v2691 = vand.u32 %v2496, 2147483648
  %v2692 = vor.u32 1.1754944e-38, %v2691
  %v2693 = vsel %vm2690, %v2692, %v2688
  %v2694 = vmul.f32 %v1993, %v2693
  %v2695 = vmul.f32 %v1995, %v2693
  %v2696 = vrcp.pop %v2497
  %v2697 = vmul.f32 %v2497, %v2696
  %v2698 = vsub.f32 1.0, %v2697
  %v2699 = vmul.f32 %v2696, %v2698
  %v2700 = vadd.f32 %v2696, %v2699
  %vm2701 = vweird.f32 %v2497
  %vm2702 = vweird.f32 %v2696
  %vm2703 = vmor %vm2701, %vm2702
  %v2704 = vsel %vm2703, %v2696, %v2700
  %v2705 = vand.u32 2147483647, %v2497
  %vm2706 = vcmp.eq.f32.partialorder %v2705, 8.507059e+37
  %v2707 = vand.u32 %v2497, 2147483648
  %v2708 = vor.u32 1.1754944e-38, %v2707
  %v2709 = vsel %vm2706, %v2708, %v2704
  %v2710 = vmul.f32 %v1997, %v2709
  %v2711 = vmul.f32 %v1999, %v2709
  %v2712 = vrcp.pop %v2498
  %v2713 = vmul.f32 %v2498, %v2712
  %v2714 = vsub.f32 1.0, %v2713
  %v2715 = vmul.f32 %v2712, %v2714
  %v2716 = vadd.f32 %v2712, %v2715
  %vm2717 = vweird.f32 %v2498
  %vm2718 = vweird.f32 %v2712
  %vm2719 = vmor %vm2717, %vm2718
  %v2720 = vsel %vm2719, %v2712, %v2716
  %v2721 = vand.u32 2147483647, %v2498
  %vm2722 = vcmp.eq.f32.partialorder %v2721, 8.507059e+37
  %v2723 = vand.u32 %v2498, 2147483648
  %v2724 = vor.u32 1.1754944e-38, %v2723
  %v2725 = vsel %vm2722, %v2724, %v2720
  %v2726 = vmul.f32 %v2001, %v2725
  %v2727 = vmul.f32 %v2003, %v2725
  %v2728 = vrcp.pop %v2499
  %v2729 = vmul.f32 %v2499, %v2728
  %v2730 = vsub.f32 1.0, %v2729
  %v2731 = vmul.f32 %v2728, %v2730
  %v2732 = vadd.f32 %v2728, %v2731
  %vm2733 = vweird.f32 %v2499
  %vm2734 = vweird.f32 %v2728
  %vm2735 = vmor %vm2733, %vm2734
  %v2736 = vsel %vm2735, %v2728, %v2732
  %v2737 = vand.u32 2147483647, %v2499
  %vm2738 = vcmp.eq.f32.partialorder %v2737, 8.507059e+37
  %v2739 = vand.u32 %v2499, 2147483648
  %v2740 = vor.u32 1.1754944e-38, %v2739
  %v2741 = vsel %vm2738, %v2740, %v2736
  %v2742 = vmul.f32 %v2005, %v2741
  %v2743 = vmul.f32 %v2007, %v2741
  %v2744 = vrcp.pop %v2500
  %v2745 = vmul.f32 %v2500, %v2744
  %v2746 = vsub.f32 1.0, %v2745
  %v2747 = vmul.f32 %v2744, %v2746
  %v2748 = vadd.f32 %v2744, %v2747
  %vm2749 = vweird.f32 %v2500
  %vm2750 = vweird.f32 %v2744
  %vm2751 = vmor %vm2749, %vm2750
  %v2752 = vsel %vm2751, %v2744, %v2748
  %v2753 = vand.u32 2147483647, %v2500
  %vm2754 = vcmp.eq.f32.partialorder %v2753, 8.507059e+37
  %v2755 = vand.u32 %v2500, 2147483648
  %v2756 = vor.u32 1.1754944e-38, %v2755
  %v2757 = vsel %vm2754, %v2756, %v2752
  %v2758 = vmul.f32 %v2009, %v2757
  %v2759 = vmul.f32 %v2011, %v2757
  %v2760 = vrcp.pop %v2501
  %v2761 = vmul.f32 %v2501, %v2760
  %v2762 = vsub.f32 1.0, %v2761
  %v2763 = vmul.f32 %v2760, %v2762
  %v2764 = vadd.f32 %v2760, %v2763
  %vm2765 = vweird.f32 %v2501
  %vm2766 = vweird.f32 %v2760
  %vm2767 = vmor %vm2765, %vm2766
  %v2768 = vsel %vm2767, %v2760, %v2764
  %v2769 = vand.u32 2147483647, %v2501
  %vm2770 = vcmp.eq.f32.partialorder %v2769, 8.507059e+37
  %v2771 = vand.u32 %v2501, 2147483648
  %v2772 = vor.u32 1.1754944e-38, %v2771
  %v2773 = vsel %vm2770, %v2772, %v2768
  %v2774 = vmul.f32 %v2013, %v2773
  %v2775 = vmul.f32 %v2015, %v2773
  %v2776 = vrcp.pop %v2502
  %v2777 = vmul.f32 %v2502, %v2776
  %v2778 = vsub.f32 1.0, %v2777
  %v2779 = vmul.f32 %v2776, %v2778
  %v2780 = vadd.f32 %v2776, %v2779
  %vm2781 = vweird.f32 %v2502
  %vm2782 = vweird.f32 %v2776
  %vm2783 = vmor %vm2781, %vm2782
  %v2784 = vsel %vm2783, %v2776, %v2780
  %v2785 = vand.u32 2147483647, %v2502
  %vm2786 = vcmp.eq.f32.partialorder %v2785, 8.507059e+37
  %v2787 = vand.u32 %v2502, 2147483648
  %v2788 = vor.u32 1.1754944e-38, %v2787
  %v2789 = vsel %vm2786, %v2788, %v2784
  %v2790 = vmul.f32 %v2017, %v2789
  %v2791 = vmul.f32 %v2019, %v2789
  %v2792 = vrcp.pop %v2503
  %v2793 = vmul.f32 %v2503, %v2792
  %v2794 = vsub.f32 1.0, %v2793
  %v2795 = vmul.f32 %v2792, %v2794
  %v2796 = vadd.f32 %v2792, %v2795
  %vm2797 = vweird.f32 %v2503
  %vm2798 = vweird.f32 %v2792
  %vm2799 = vmor %vm2797, %vm2798
  %v2800 = vsel %vm2799, %v2792, %v2796
  %v2801 = vand.u32 2147483647, %v2503
  %vm2802 = vcmp.eq.f32.partialorder %v2801, 8.507059e+37
  %v2803 = vand.u32 %v2503, 2147483648
  %v2804 = vor.u32 1.1754944e-38, %v2803
  %v2805 = vsel %vm2802, %v2804, %v2800
  %v2806 = vmul.f32 %v2021, %v2805
  %v2807 = vmul.f32 %v2023, %v2805
  %v2808 = vrcp.pop %v2504
  %v2809 = vmul.f32 %v2504, %v2808
  %v2810 = vsub.f32 1.0, %v2809
  %v2811 = vmul.f32 %v2808, %v2810
  %v2812 = vadd.f32 %v2808, %v2811
  %vm2813 = vweird.f32 %v2504
  %vm2814 = vweird.f32 %v2808
  %vm2815 = vmor %vm2813, %vm2814
  %v2816 = vsel %vm2815, %v2808, %v2812
  %v2817 = vand.u32 2147483647, %v2504
  %vm2818 = vcmp.eq.f32.partialorder %v2817, 8.507059e+37
  %v2819 = vand.u32 %v2504, 2147483648
  %v2820 = vor.u32 1.1754944e-38, %v2819
  %v2821 = vsel %vm2818, %v2820, %v2816
  %v2822 = vmul.f32 %v2025, %v2821
  %v2823 = vmul.f32 %v2027, %v2821
  %v2824 = vrcp.pop %v2505
  %v2825 = vmul.f32 %v2505, %v2824
  %v2826 = vsub.f32 1.0, %v2825
  %v2827 = vmul.f32 %v2824, %v2826
  %v2828 = vadd.f32 %v2824, %v2827
  %vm2829 = vweird.f32 %v2505
  %vm2830 = vweird.f32 %v2824
  %vm2831 = vmor %vm2829, %vm2830
  %v2832 = vsel %vm2831, %v2824, %v2828
  %v2833 = vand.u32 2147483647, %v2505
  %vm2834 = vcmp.eq.f32.partialorder %v2833, 8.507059e+37
  %v2835 = vand.u32 %v2505, 2147483648
  %v2836 = vor.u32 1.1754944e-38, %v2835
  %v2837 = vsel %vm2834, %v2836, %v2832
  %v2838 = vmul.f32 %v2029, %v2837
  %v2839 = vmul.f32 %v2031, %v2837
  %v2840 = vrcp.pop %v2506
  %v2841 = vmul.f32 %v2506, %v2840
  %v2842 = vsub.f32 1.0, %v2841
  %v2843 = vmul.f32 %v2840, %v2842
  %v2844 = vadd.f32 %v2840, %v2843
  %vm2845 = vweird.f32 %v2506
  %vm2846 = vweird.f32 %v2840
  %vm2847 = vmor %vm2845, %vm2846
  %v2848 = vsel %vm2847, %v2840, %v2844
  %v2849 = vand.u32 2147483647, %v2506
  %vm2850 = vcmp.eq.f32.partialorder %v2849, 8.507059e+37
  %v2851 = vand.u32 %v2506, 2147483648
  %v2852 = vor.u32 1.1754944e-38, %v2851
  %v2853 = vsel %vm2850, %v2852, %v2848
  %v2854 = vmul.f32 %v2033, %v2853
  %v2855 = vmul.f32 %v2035, %v2853
  %v2856 = vrcp.pop %v2507
  %v2857 = vmul.f32 %v2507, %v2856
  %v2858 = vsub.f32 1.0, %v2857
  %v2859 = vmul.f32 %v2856, %v2858
  %v2860 = vadd.f32 %v2856, %v2859
  %vm2861 = vweird.f32 %v2507
  %vm2862 = vweird.f32 %v2856
  %vm2863 = vmor %vm2861, %vm2862
  %v2864 = vsel %vm2863, %v2856, %v2860
  %v2865 = vand.u32 2147483647, %v2507
  %vm2866 = vcmp.eq.f32.partialorder %v2865, 8.507059e+37
  %v2867 = vand.u32 %v2507, 2147483648
  %v2868 = vor.u32 1.1754944e-38, %v2867
  %v2869 = vsel %vm2866, %v2868, %v2864
  %v2870 = vmul.f32 %v2037, %v2869
  %v2871 = vmul.f32 %v2039, %v2869
  %v2872 = vrcp.pop %v2508
  %v2873 = vmul.f32 %v2508, %v2872
  %v2874 = vsub.f32 1.0, %v2873
  %v2875 = vmul.f32 %v2872, %v2874
  %v2876 = vadd.f32 %v2872, %v2875
  %vm2877 = vweird.f32 %v2508
  %vm2878 = vweird.f32 %v2872
  %vm2879 = vmor %vm2877, %vm2878
  %v2880 = vsel %vm2879, %v2872, %v2876
  %v2881 = vand.u32 2147483647, %v2508
  %vm2882 = vcmp.eq.f32.partialorder %v2881, 8.507059e+37
  %v2883 = vand.u32 %v2508, 2147483648
  %v2884 = vor.u32 1.1754944e-38, %v2883
  %v2885 = vsel %vm2882, %v2884, %v2880
  %v2886 = vmul.f32 %v2041, %v2885
  %v2887 = vmul.f32 %v2043, %v2885
  %v2888 = vrcp.pop %v2509
  %v2889 = vmul.f32 %v2509, %v2888
  %v2890 = vsub.f32 1.0, %v2889
  %v2891 = vmul.f32 %v2888, %v2890
  %v2892 = vadd.f32 %v2888, %v2891
  %vm2893 = vweird.f32 %v2509
  %vm2894 = vweird.f32 %v2888
  %vm2895 = vmor %vm2893, %vm2894
  %v2896 = vsel %vm2895, %v2888, %v2892
  %v2897 = vand.u32 2147483647, %v2509
  %vm2898 = vcmp.eq.f32.partialorder %v2897, 8.507059e+37
  %v2899 = vand.u32 %v2509, 2147483648
  %v2900 = vor.u32 1.1754944e-38, %v2899
  %v2901 = vsel %vm2898, %v2900, %v2896
  %v2902 = vmul.f32 %v2045, %v2901
  %v2903 = vmul.f32 %v2047, %v2901
  %v2904 = vrcp.pop %v2510
  %v2905 = vmul.f32 %v2510, %v2904
  %v2906 = vsub.f32 1.0, %v2905
  %v2907 = vmul.f32 %v2904, %v2906
  %v2908 = vadd.f32 %v2904, %v2907
  %vm2909 = vweird.f32 %v2510
  %vm2910 = vweird.f32 %v2904
  %vm2911 = vmor %vm2909, %vm2910
  %v2912 = vsel %vm2911, %v2904, %v2908
  %v2913 = vand.u32 2147483647, %v2510
  %vm2914 = vcmp.eq.f32.partialorder %v2913, 8.507059e+37
  %v2915 = vand.u32 %v2510, 2147483648
  %v2916 = vor.u32 1.1754944e-38, %v2915
  %v2917 = vsel %vm2914, %v2916, %v2912
  %v2918 = vmul.f32 %v2049, %v2917
  %v2919 = vmul.f32 %v2051, %v2917
  %v2920 = vrcp.pop %v2511
  %v2921 = vmul.f32 %v2511, %v2920
  %v2922 = vsub.f32 1.0, %v2921
  %v2923 = vmul.f32 %v2920, %v2922
  %v2924 = vadd.f32 %v2920, %v2923
  %vm2925 = vweird.f32 %v2511
  %vm2926 = vweird.f32 %v2920
  %vm2927 = vmor %vm2925, %vm2926
  %v2928 = vsel %vm2927, %v2920, %v2924
  %v2929 = vand.u32 2147483647, %v2511
  %vm2930 = vcmp.eq.f32.partialorder %v2929, 8.507059e+37
  %v2931 = vand.u32 %v2511, 2147483648
  %v2932 = vor.u32 1.1754944e-38, %v2931
  %v2933 = vsel %vm2930, %v2932, %v2928
  %v2934 = vmul.f32 %v2053, %v2933
  %v2935 = vmul.f32 %v2055, %v2933
  %v2936 = vrcp.pop %v2512
  %v2937 = vmul.f32 %v2512, %v2936
  %v2938 = vsub.f32 1.0, %v2937
  %v2939 = vmul.f32 %v2936, %v2938
  %v2940 = vadd.f32 %v2936, %v2939
  %vm2941 = vweird.f32 %v2512
  %vm2942 = vweird.f32 %v2936
  %vm2943 = vmor %vm2941, %vm2942
  %v2944 = vsel %vm2943, %v2936, %v2940
  %v2945 = vand.u32 2147483647, %v2512
  %vm2946 = vcmp.eq.f32.partialorder %v2945, 8.507059e+37
  %v2947 = vand.u32 %v2512, 2147483648
  %v2948 = vor.u32 1.1754944e-38, %v2947
  %v2949 = vsel %vm2946, %v2948, %v2944
  %v2950 = vmul.f32 %v2057, %v2949
  %v2951 = vmul.f32 %v2059, %v2949
  %v2952 = vrcp.pop %v2513
  %v2953 = vmul.f32 %v2513, %v2952
  %v2954 = vsub.f32 1.0, %v2953
  %v2955 = vmul.f32 %v2952, %v2954
  %v2956 = vadd.f32 %v2952, %v2955
  %vm2957 = vweird.f32 %v2513
  %vm2958 = vweird.f32 %v2952
  %vm2959 = vmor %vm2957, %vm2958
  %v2960 = vsel %vm2959, %v2952, %v2956
  %v2961 = vand.u32 2147483647, %v2513
  %vm2962 = vcmp.eq.f32.partialorder %v2961, 8.507059e+37
  %v2963 = vand.u32 %v2513, 2147483648
  %v2964 = vor.u32 1.1754944e-38, %v2963
  %v2965 = vsel %vm2962, %v2964, %v2960
  %v2966 = vmul.f32 %v2061, %v2965
  %v2967 = vmul.f32 %v2063, %v2965
  %v2968 = vrcp.pop %v2514
  %v2969 = vmul.f32 %v2514, %v2968
  %v2970 = vsub.f32 1.0, %v2969
  %v2971 = vmul.f32 %v2968, %v2970
  %v2972 = vadd.f32 %v2968, %v2971
  %vm2973 = vweird.f32 %v2514
  %vm2974 = vweird.f32 %v2968
  %vm2975 = vmor %vm2973, %vm2974
  %v2976 = vsel %vm2975, %v2968, %v2972
  %v2977 = vand.u32 2147483647, %v2514
  %vm2978 = vcmp.eq.f32.partialorder %v2977, 8.507059e+37
  %v2979 = vand.u32 %v2514, 2147483648
  %v2980 = vor.u32 1.1754944e-38, %v2979
  %v2981 = vsel %vm2978, %v2980, %v2976
  %v2982 = vmul.f32 %v2065, %v2981
  %v2983 = vmul.f32 %v2067, %v2981
  %v2984 = vrcp.pop %v2515
  %v2985 = vmul.f32 %v2515, %v2984
  %v2986 = vsub.f32 1.0, %v2985
  %v2987 = vmul.f32 %v2984, %v2986
  %v2988 = vadd.f32 %v2984, %v2987
  %vm2989 = vweird.f32 %v2515
  %vm2990 = vweird.f32 %v2984
  %vm2991 = vmor %vm2989, %vm2990
  %v2992 = vsel %vm2991, %v2984, %v2988
  %v2993 = vand.u32 2147483647, %v2515
  %vm2994 = vcmp.eq.f32.partialorder %v2993, 8.507059e+37
  %v2995 = vand.u32 %v2515, 2147483648
  %v2996 = vor.u32 1.1754944e-38, %v2995
  %v2997 = vsel %vm2994, %v2996, %v2992
  %v2998 = vmul.f32 %v2069, %v2997
  %v2999 = vmul.f32 %v2071, %v2997
  %v3000 = vrcp.pop %v2516
  %v3001 = vmul.f32 %v2516, %v3000
  %v3002 = vsub.f32 1.0, %v3001
  %v3003 = vmul.f32 %v3000, %v3002
  %v3004 = vadd.f32 %v3000, %v3003
  %vm3005 = vweird.f32 %v2516
  %vm3006 = vweird.f32 %v3000
  %vm3007 = vmor %vm3005, %vm3006
  %v3008 = vsel %vm3007, %v3000, %v3004
  %v3009 = vand.u32 2147483647, %v2516
  %vm3010 = vcmp.eq.f32.partialorder %v3009, 8.507059e+37
  %v3011 = vand.u32 %v2516, 2147483648
  %v3012 = vor.u32 1.1754944e-38, %v3011
  %v3013 = vsel %vm3010, %v3012, %v3008
  %v3014 = vmul.f32 %v2073, %v3013
  %v3015 = vmul.f32 %v2075, %v3013
  %v3016 = vrcp.pop %v2517
  %v3017 = vmul.f32 %v2517, %v3016
  %v3018 = vsub.f32 1.0, %v3017
  %v3019 = vmul.f32 %v3016, %v3018
  %v3020 = vadd.f32 %v3016, %v3019
  %vm3021 = vweird.f32 %v2517
  %vm3022 = vweird.f32 %v3016
  %vm3023 = vmor %vm3021, %vm3022
  %v3024 = vsel %vm3023, %v3016, %v3020
  %v3025 = vand.u32 2147483647, %v2517
  %vm3026 = vcmp.eq.f32.partialorder %v3025, 8.507059e+37
  %v3027 = vand.u32 %v2517, 2147483648
  %v3028 = vor.u32 1.1754944e-38, %v3027
  %v3029 = vsel %vm3026, %v3028, %v3024
  %v3030 = vmul.f32 %v2077, %v3029
  %v3031 = vmul.f32 %v2079, %v3029
  %v3032 = vrcp.pop %v2518
  %v3033 = vmul.f32 %v2518, %v3032
  %v3034 = vsub.f32 1.0, %v3033
  %v3035 = vmul.f32 %v3032, %v3034
  %v3036 = vadd.f32 %v3032, %v3035
  %vm3037 = vweird.f32 %v2518
  %vm3038 = vweird.f32 %v3032
  %vm3039 = vmor %vm3037, %vm3038
  %v3040 = vsel %vm3039, %v3032, %v3036
  %v3041 = vand.u32 2147483647, %v2518
  %vm3042 = vcmp.eq.f32.partialorder %v3041, 8.507059e+37
  %v3043 = vand.u32 %v2518, 2147483648
  %v3044 = vor.u32 1.1754944e-38, %v3043
  %v3045 = vsel %vm3042, %v3044, %v3040
  %v3046 = vmul.f32 %v2081, %v3045
  %v3047 = vmul.f32 %v2083, %v3045
  %v3048 = vrcp.pop %v2519
  %v3049 = vmul.f32 %v2519, %v3048
  %v3050 = vsub.f32 1.0, %v3049
  %v3051 = vmul.f32 %v3048, %v3050
  %v3052 = vadd.f32 %v3048, %v3051
  %vm3053 = vweird.f32 %v2519
  %vm3054 = vweird.f32 %v3048
  %vm3055 = vmor %vm3053, %vm3054
  %v3056 = vsel %vm3055, %v3048, %v3052
  %v3057 = vand.u32 2147483647, %v2519
  %vm3058 = vcmp.eq.f32.partialorder %v3057, 8.507059e+37
  %v3059 = vand.u32 %v2519, 2147483648
  %v3060 = vor.u32 1.1754944e-38, %v3059
  %v3061 = vsel %vm3058, %v3060, %v3056
  %v3062 = vmul.f32 %v2085, %v3061
  %v3063 = vmul.f32 %v2087, %v3061
  %3065 = vset.pattern.permute.xlu0 0
  %3066 = vperm.xlu0 %3065, %v2566
  %v3067 = vpop.permute.xlu0 %3066
  %3070 = vset.pattern.permute.xlu0 0
  %3071 = vperm.xlu0 %3070, %v2567
  %v3072 = vpop.permute.xlu0 %3071
  %3075 = vset.pattern.permute.xlu0 0
  %3076 = vperm.xlu0 %3075, %v2582
  %v3077 = vpop.permute.xlu0 %3076
  %3080 = vset.pattern.permute.xlu0 0
  %3081 = vperm.xlu0 %3080, %v2583
  %v3082 = vpop.permute.xlu0 %3081
  %3085 = vset.pattern.permute.xlu0 0
  %3086 = vperm.xlu0 %3085, %v2598
  %v3087 = vpop.permute.xlu0 %3086
  %3090 = vset.pattern.permute.xlu0 0
  %3091 = vperm.xlu0 %3090, %v2599
  %v3092 = vpop.permute.xlu0 %3091
  %3095 = vset.pattern.permute.xlu0 0
  %3096 = vperm.xlu0 %3095, %v2614
  %v3097 = vpop.permute.xlu0 %3096
  %3100 = vset.pattern.permute.xlu0 0
  %3101 = vperm.xlu0 %3100, %v2615
  %v3102 = vpop.permute.xlu0 %3101
  %3105 = vset.pattern.permute.xlu0 0
  %3106 = vperm.xlu0 %3105, %v2630
  %v3107 = vpop.permute.xlu0 %3106
  %3110 = vset.pattern.permute.xlu0 0
  %3111 = vperm.xlu0 %3110, %v2631
  %v3112 = vpop.permute.xlu0 %3111
  %3115 = vset.pattern.permute.xlu0 0
  %3116 = vperm.xlu0 %3115, %v2646
  %v3117 = vpop.permute.xlu0 %3116
  %3120 = vset.pattern.permute.xlu0 0
  %3121 = vperm.xlu0 %3120, %v2647
  %v3122 = vpop.permute.xlu0 %3121
  %3125 = vset.pattern.permute.xlu0 0
  %3126 = vperm.xlu0 %3125, %v2662
  %v3127 = vpop.permute.xlu0 %3126
  %3130 = vset.pattern.permute.xlu0 0
  %3131 = vperm.xlu0 %3130, %v2663
  %v3132 = vpop.permute.xlu0 %3131
  %3135 = vset.pattern.permute.xlu0 0
  %3136 = vperm.xlu0 %3135, %v2678
  %v3137 = vpop.permute.xlu0 %3136
  %3140 = vset.pattern.permute.xlu0 0
  %3141 = vperm.xlu0 %3140, %v2679
  %v3142 = vpop.permute.xlu0 %3141
  %3145 = vset.pattern.permute.xlu0 0
  %3146 = vperm.xlu0 %3145, %v2694
  %v3147 = vpop.permute.xlu0 %3146
  %3150 = vset.pattern.permute.xlu0 0
  %3151 = vperm.xlu0 %3150, %v2695
  %v3152 = vpop.permute.xlu0 %3151
  %3155 = vset.pattern.permute.xlu0 0
  %3156 = vperm.xlu0 %3155, %v2710
  %v3157 = vpop.permute.xlu0 %3156
  %3160 = vset.pattern.permute.xlu0 0
  %3161 = vperm.xlu0 %3160, %v2711
  %v3162 = vpop.permute.xlu0 %3161
  %3165 = vset.pattern.permute.xlu0 0
  %3166 = vperm.xlu0 %3165, %v2726
  %v3167 = vpop.permute.xlu0 %3166
  %3170 = vset.pattern.permute.xlu0 0
  %3171 = vperm.xlu0 %3170, %v2727
  %v3172 = vpop.permute.xlu0 %3171
  %3175 = vset.pattern.permute.xlu0 0
  %3176 = vperm.xlu0 %3175, %v2742
  %v3177 = vpop.permute.xlu0 %3176
  %3180 = vset.pattern.permute.xlu0 0
  %3181 = vperm.xlu0 %3180, %v2743
  %v3182 = vpop.permute.xlu0 %3181
  %3185 = vset.pattern.permute.xlu0 0
  %3186 = vperm.xlu0 %3185, %v2758
  %v3187 = vpop.permute.xlu0 %3186
  %3190 = vset.pattern.permute.xlu0 0
  %3191 = vperm.xlu0 %3190, %v2759
  %v3192 = vpop.permute.xlu0 %3191
  %3195 = vset.pattern.permute.xlu0 0
  %3196 = vperm.xlu0 %3195, %v2774
  %v3197 = vpop.permute.xlu0 %3196
  %3200 = vset.pattern.permute.xlu0 0
  %3201 = vperm.xlu0 %3200, %v2775
  %v3202 = vpop.permute.xlu0 %3201
  %3205 = vset.pattern.permute.xlu0 0
  %3206 = vperm.xlu0 %3205, %v2790
  %v3207 = vpop.permute.xlu0 %3206
  %3210 = vset.pattern.permute.xlu0 0
  %3211 = vperm.xlu0 %3210, %v2791
  %v3212 = vpop.permute.xlu0 %3211
  %3215 = vset.pattern.permute.xlu0 0
  %3216 = vperm.xlu0 %3215, %v2806
  %v3217 = vpop.permute.xlu0 %3216
  %3220 = vset.pattern.permute.xlu0 0
  %3221 = vperm.xlu0 %3220, %v2807
  %v3222 = vpop.permute.xlu0 %3221
  %3225 = vset.pattern.permute.xlu0 0
  %3226 = vperm.xlu0 %3225, %v2822
  %v3227 = vpop.permute.xlu0 %3226
  %3230 = vset.pattern.permute.xlu0 0
  %3231 = vperm.xlu0 %3230, %v2823
  %v3232 = vpop.permute.xlu0 %3231
  %3235 = vset.pattern.permute.xlu0 0
  %3236 = vperm.xlu0 %3235, %v2838
  %v3237 = vpop.permute.xlu0 %3236
  %3240 = vset.pattern.permute.xlu0 0
  %3241 = vperm.xlu0 %3240, %v2839
  %v3242 = vpop.permute.xlu0 %3241
  %3245 = vset.pattern.permute.xlu0 0
  %3246 = vperm.xlu0 %3245, %v2854
  %v3247 = vpop.permute.xlu0 %3246
  %3250 = vset.pattern.permute.xlu0 0
  %3251 = vperm.xlu0 %3250, %v2855
  %v3252 = vpop.permute.xlu0 %3251
  %3255 = vset.pattern.permute.xlu0 0
  %3256 = vperm.xlu0 %3255, %v2870
  %v3257 = vpop.permute.xlu0 %3256
  %3260 = vset.pattern.permute.xlu0 0
  %3261 = vperm.xlu0 %3260, %v2871
  %v3262 = vpop.permute.xlu0 %3261
  %3265 = vset.pattern.permute.xlu0 0
  %3266 = vperm.xlu0 %3265, %v2886
  %v3267 = vpop.permute.xlu0 %3266
  %3270 = vset.pattern.permute.xlu0 0
  %3271 = vperm.xlu0 %3270, %v2887
  %v3272 = vpop.permute.xlu0 %3271
  %3275 = vset.pattern.permute.xlu0 0
  %3276 = vperm.xlu0 %3275, %v2902
  %v3277 = vpop.permute.xlu0 %3276
  %3280 = vset.pattern.permute.xlu0 0
  %3281 = vperm.xlu0 %3280, %v2903
  %v3282 = vpop.permute.xlu0 %3281
  %3285 = vset.pattern.permute.xlu0 0
  %3286 = vperm.xlu0 %3285, %v2918
  %v3287 = vpop.permute.xlu0 %3286
  %3290 = vset.pattern.permute.xlu0 0
  %3291 = vperm.xlu0 %3290, %v2919
  %v3292 = vpop.permute.xlu0 %3291
  %3295 = vset.pattern.permute.xlu0 0
  %3296 = vperm.xlu0 %3295, %v2934
  %v3297 = vpop.permute.xlu0 %3296
  %3300 = vset.pattern.permute.xlu0 0
  %3301 = vperm.xlu0 %3300, %v2935
  %v3302 = vpop.permute.xlu0 %3301
  %3305 = vset.pattern.permute.xlu0 0
  %3306 = vperm.xlu0 %3305, %v2950
  %v3307 = vpop.permute.xlu0 %3306
  %3310 = vset.pattern.permute.xlu0 0
  %3311 = vperm.xlu0 %3310, %v2951
  %v3312 = vpop.permute.xlu0 %3311
  %3315 = vset.pattern.permute.xlu0 0
  %3316 = vperm.xlu0 %3315, %v2966
  %v3317 = vpop.permute.xlu0 %3316
  %3320 = vset.pattern.permute.xlu0 0
  %3321 = vperm.xlu0 %3320, %v2967
  %v3322 = vpop.permute.xlu0 %3321
  %3325 = vset.pattern.permute.xlu0 0
  %3326 = vperm.xlu0 %3325, %v2982
  %v3327 = vpop.permute.xlu0 %3326
  %3330 = vset.pattern.permute.xlu0 0
  %3331 = vperm.xlu0 %3330, %v2983
  %v3332 = vpop.permute.xlu0 %3331
  %3335 = vset.pattern.permute.xlu0 0
  %3336 = vperm.xlu0 %3335, %v2998
  %v3337 = vpop.permute.xlu0 %3336
  %3340 = vset.pattern.permute.xlu0 0
  %3341 = vperm.xlu0 %3340, %v2999
  %v3342 = vpop.permute.xlu0 %3341
  %3345 = vset.pattern.permute.xlu0 0
  %3346 = vperm.xlu0 %3345, %v3014
  %v3347 = vpop.permute.xlu0 %3346
  %3350 = vset.pattern.permute.xlu0 0
  %3351 = vperm.xlu0 %3350, %v3015
  %v3352 = vpop.permute.xlu0 %3351
  %3355 = vset.pattern.permute.xlu0 0
  %3356 = vperm.xlu0 %3355, %v3030
  %v3357 = vpop.permute.xlu0 %3356
  %3360 = vset.pattern.permute.xlu0 0
  %3361 = vperm.xlu0 %3360, %v3031
  %v3362 = vpop.permute.xlu0 %3361
  %3365 = vset.pattern.permute.xlu0 0
  %3366 = vperm.xlu0 %3365, %v3046
  %v3367 = vpop.permute.xlu0 %3366
  %3370 = vset.pattern.permute.xlu0 0
  %3371 = vperm.xlu0 %3370, %v3047
  %v3372 = vpop.permute.xlu0 %3371
  %3375 = vset.pattern.permute.xlu0 0
  %3376 = vperm.xlu0 %3375, %v3062
  %v3377 = vpop.permute.xlu0 %3376
  %3380 = vset.pattern.permute.xlu0 0
  %3381 = vperm.xlu0 %3380, %v3063
  %v3382 = vpop.permute.xlu0 %3381
  %v3384 = vmul.f32 %v3067, %v688
  %v3385 = vmul.f32 %v3072, %v689
  %v3386 = vmul.f32 %v3077, %v690
  %v3387 = vmul.f32 %v3082, %v691
  %v3388 = vmul.f32 %v3087, %v692
  %v3389 = vmul.f32 %v3092, %v693
  %v3390 = vmul.f32 %v3097, %v694
  %v3391 = vmul.f32 %v3102, %v695
  %v3392 = vmul.f32 %v3107, %v696
  %v3393 = vmul.f32 %v3112, %v697
  %v3394 = vmul.f32 %v3117, %v698
  %v3395 = vmul.f32 %v3122, %v699
  %v3396 = vmul.f32 %v3127, %v700
  %v3397 = vmul.f32 %v3132, %v701
  %v3398 = vmul.f32 %v3137, %v702
  %v3399 = vmul.f32 %v3142, %v703
  %v3400 = vmul.f32 %v3147, %v704
  %v3401 = vmul.f32 %v3152, %v705
  %v3402 = vmul.f32 %v3157, %v706
  %v3403 = vmul.f32 %v3162, %v707
  %v3404 = vmul.f32 %v3167, %v708
  %v3405 = vmul.f32 %v3172, %v709
  %v3406 = vmul.f32 %v3177, %v710
  %v3407 = vmul.f32 %v3182, %v711
  %v3408 = vmul.f32 %v3187, %v712
  %v3409 = vmul.f32 %v3192, %v713
  %v3410 = vmul.f32 %v3197, %v714
  %v3411 = vmul.f32 %v3202, %v715
  %v3412 = vmul.f32 %v3207, %v716
  %v3413 = vmul.f32 %v3212, %v717
  %v3414 = vmul.f32 %v3217, %v718
  %v3415 = vmul.f32 %v3222, %v719
  %v3416 = vmul.f32 %v3227, %v720
  %v3417 = vmul.f32 %v3232, %v721
  %v3418 = vmul.f32 %v3237, %v722
  %v3419 = vmul.f32 %v3242, %v723
  %v3420 = vmul.f32 %v3247, %v724
  %v3421 = vmul.f32 %v3252, %v725
  %v3422 = vmul.f32 %v3257, %v726
  %v3423 = vmul.f32 %v3262, %v727
  %v3424 = vmul.f32 %v3267, %v728
  %v3425 = vmul.f32 %v3272, %v729
  %v3426 = vmul.f32 %v3277, %v730
  %v3427 = vmul.f32 %v3282, %v731
  %v3428 = vmul.f32 %v3287, %v732
  %v3429 = vmul.f32 %v3292, %v733
  %v3430 = vmul.f32 %v3297, %v734
  %v3431 = vmul.f32 %v3302, %v735
  %v3432 = vmul.f32 %v3307, %v736
  %v3433 = vmul.f32 %v3312, %v737
  %v3434 = vmul.f32 %v3317, %v738
  %v3435 = vmul.f32 %v3322, %v739
  %v3436 = vmul.f32 %v3327, %v740
  %v3437 = vmul.f32 %v3332, %v741
  %v3438 = vmul.f32 %v3337, %v742
  %v3439 = vmul.f32 %v3342, %v743
  %v3440 = vmul.f32 %v3347, %v744
  %v3441 = vmul.f32 %v3352, %v745
  %v3442 = vmul.f32 %v3357, %v746
  %v3443 = vmul.f32 %v3362, %v747
  %v3444 = vmul.f32 %v3367, %v748
  %v3445 = vmul.f32 %v3372, %v749
  %v3446 = vmul.f32 %v3377, %v750
  %v3447 = vmul.f32 %v3382, %v751
  %v3448 = vsel %vm599, %v3384, 0.0
  %v3449 = vsel %vm599, %v3385, 0.0
  %v3450 = vadd.f32 %v3448, %v3449
  %v3451 = vrot.slane %v3450, 4
  %v3452 = vadd.f32 %v3450, %v3451
  %v3453 = vrot.slane %v3452, 2
  %v3454 = vadd.f32 %v3452, %v3453
  %v3455 = vrot.slane %v3454, 1
  %v3456 = vadd.f32 %v3454, %v3455
  %v3457 = vsel %vm599, %v3386, 0.0
  %v3458 = vsel %vm599, %v3387, 0.0
  %v3459 = vadd.f32 %v3457, %v3458
  %v3460 = vrot.slane %v3459, 4
  %v3461 = vadd.f32 %v3459, %v3460
  %v3462 = vrot.slane %v3461, 2
  %v3463 = vadd.f32 %v3461, %v3462
  %v3464 = vrot.slane %v3463, 1
  %v3465 = vadd.f32 %v3463, %v3464
  %v3466 = vsel %vm599, %v3388, 0.0
  %v3467 = vsel %vm599, %v3389, 0.0
  %v3468 = vadd.f32 %v3466, %v3467
  %v3469 = vrot.slane %v3468, 4
  %v3470 = vadd.f32 %v3468, %v3469
  %v3471 = vrot.slane %v3470, 2
  %v3472 = vadd.f32 %v3470, %v3471
  %v3473 = vrot.slane %v3472, 1
  %v3474 = vadd.f32 %v3472, %v3473
  %v3475 = vsel %vm599, %v3390, 0.0
  %v3476 = vsel %vm599, %v3391, 0.0
  %v3477 = vadd.f32 %v3475, %v3476
  %v3478 = vrot.slane %v3477, 4
  %v3479 = vadd.f32 %v3477, %v3478
  %v3480 = vrot.slane %v3479, 2
  %v3481 = vadd.f32 %v3479, %v3480
  %v3482 = vrot.slane %v3481, 1
  %v3483 = vadd.f32 %v3481, %v3482
  %v3484 = vsel %vm599, %v3392, 0.0
  %v3485 = vsel %vm599, %v3393, 0.0
  %v3486 = vadd.f32 %v3484, %v3485
  %v3487 = vrot.slane %v3486, 4
  %v3488 = vadd.f32 %v3486, %v3487
  %v3489 = vrot.slane %v3488, 2
  %v3490 = vadd.f32 %v3488, %v3489
  %v3491 = vrot.slane %v3490, 1
  %v3492 = vadd.f32 %v3490, %v3491
  %v3493 = vsel %vm599, %v3394, 0.0
  %v3494 = vsel %vm599, %v3395, 0.0
  %v3495 = vadd.f32 %v3493, %v3494
  %v3496 = vrot.slane %v3495, 4
  %v3497 = vadd.f32 %v3495, %v3496
  %v3498 = vrot.slane %v3497, 2
  %v3499 = vadd.f32 %v3497, %v3498
  %v3500 = vrot.slane %v3499, 1
  %v3501 = vadd.f32 %v3499, %v3500
  %v3502 = vsel %vm599, %v3396, 0.0
  %v3503 = vsel %vm599, %v3397, 0.0
  %v3504 = vadd.f32 %v3502, %v3503
  %v3505 = vrot.slane %v3504, 4
  %v3506 = vadd.f32 %v3504, %v3505
  %v3507 = vrot.slane %v3506, 2
  %v3508 = vadd.f32 %v3506, %v3507
  %v3509 = vrot.slane %v3508, 1
  %v3510 = vadd.f32 %v3508, %v3509
  %v3511 = vsel %vm599, %v3398, 0.0
  %v3512 = vsel %vm599, %v3399, 0.0
  %v3513 = vadd.f32 %v3511, %v3512
  %v3514 = vrot.slane %v3513, 4
  %v3515 = vadd.f32 %v3513, %v3514
  %v3516 = vrot.slane %v3515, 2
  %v3517 = vadd.f32 %v3515, %v3516
  %v3518 = vrot.slane %v3517, 1
  %v3519 = vadd.f32 %v3517, %v3518
  %v3520 = vsel %vm599, %v3400, 0.0
  %v3521 = vsel %vm599, %v3401, 0.0
  %v3522 = vadd.f32 %v3520, %v3521
  %v3523 = vrot.slane %v3522, 4
  %v3524 = vadd.f32 %v3522, %v3523
  %v3525 = vrot.slane %v3524, 2
  %v3526 = vadd.f32 %v3524, %v3525
  %v3527 = vrot.slane %v3526, 1
  %v3528 = vadd.f32 %v3526, %v3527
  %v3529 = vsel %vm599, %v3402, 0.0
  %v3530 = vsel %vm599, %v3403, 0.0
  %v3531 = vadd.f32 %v3529, %v3530
  %v3532 = vrot.slane %v3531, 4
  %v3533 = vadd.f32 %v3531, %v3532
  %v3534 = vrot.slane %v3533, 2
  %v3535 = vadd.f32 %v3533, %v3534
  %v3536 = vrot.slane %v3535, 1
  %v3537 = vadd.f32 %v3535, %v3536
  %v3538 = vsel %vm599, %v3404, 0.0
  %v3539 = vsel %vm599, %v3405, 0.0
  %v3540 = vadd.f32 %v3538, %v3539
  %v3541 = vrot.slane %v3540, 4
  %v3542 = vadd.f32 %v3540, %v3541
  %v3543 = vrot.slane %v3542, 2
  %v3544 = vadd.f32 %v3542, %v3543
  %v3545 = vrot.slane %v3544, 1
  %v3546 = vadd.f32 %v3544, %v3545
  %v3547 = vsel %vm599, %v3406, 0.0
  %v3548 = vsel %vm599, %v3407, 0.0
  %v3549 = vadd.f32 %v3547, %v3548
  %v3550 = vrot.slane %v3549, 4
  %v3551 = vadd.f32 %v3549, %v3550
  %v3552 = vrot.slane %v3551, 2
  %v3553 = vadd.f32 %v3551, %v3552
  %v3554 = vrot.slane %v3553, 1
  %v3555 = vadd.f32 %v3553, %v3554
  %v3556 = vsel %vm599, %v3408, 0.0
  %v3557 = vsel %vm599, %v3409, 0.0
  %v3558 = vadd.f32 %v3556, %v3557
  %v3559 = vrot.slane %v3558, 4
  %v3560 = vadd.f32 %v3558, %v3559
  %v3561 = vrot.slane %v3560, 2
  %v3562 = vadd.f32 %v3560, %v3561
  %v3563 = vrot.slane %v3562, 1
  %v3564 = vadd.f32 %v3562, %v3563
  %v3565 = vsel %vm599, %v3410, 0.0
  %v3566 = vsel %vm599, %v3411, 0.0
  %v3567 = vadd.f32 %v3565, %v3566
  %v3568 = vrot.slane %v3567, 4
  %v3569 = vadd.f32 %v3567, %v3568
  %v3570 = vrot.slane %v3569, 2
  %v3571 = vadd.f32 %v3569, %v3570
  %v3572 = vrot.slane %v3571, 1
  %v3573 = vadd.f32 %v3571, %v3572
  %v3574 = vsel %vm599, %v3412, 0.0
  %v3575 = vsel %vm599, %v3413, 0.0
  %v3576 = vadd.f32 %v3574, %v3575
  %v3577 = vrot.slane %v3576, 4
  %v3578 = vadd.f32 %v3576, %v3577
  %v3579 = vrot.slane %v3578, 2
  %v3580 = vadd.f32 %v3578, %v3579
  %v3581 = vrot.slane %v3580, 1
  %v3582 = vadd.f32 %v3580, %v3581
  %v3583 = vsel %vm599, %v3414, 0.0
  %v3584 = vsel %vm599, %v3415, 0.0
  %v3585 = vadd.f32 %v3583, %v3584
  %v3586 = vrot.slane %v3585, 4
  %v3587 = vadd.f32 %v3585, %v3586
  %v3588 = vrot.slane %v3587, 2
  %v3589 = vadd.f32 %v3587, %v3588
  %v3590 = vrot.slane %v3589, 1
  %v3591 = vadd.f32 %v3589, %v3590
  %v3592 = vsel %vm599, %v3416, 0.0
  %v3593 = vsel %vm599, %v3417, 0.0
  %v3594 = vadd.f32 %v3592, %v3593
  %v3595 = vrot.slane %v3594, 4
  %v3596 = vadd.f32 %v3594, %v3595
  %v3597 = vrot.slane %v3596, 2
  %v3598 = vadd.f32 %v3596, %v3597
  %v3599 = vrot.slane %v3598, 1
  %v3600 = vadd.f32 %v3598, %v3599
  %v3601 = vsel %vm599, %v3418, 0.0
  %v3602 = vsel %vm599, %v3419, 0.0
  %v3603 = vadd.f32 %v3601, %v3602
  %v3604 = vrot.slane %v3603, 4
  %v3605 = vadd.f32 %v3603, %v3604
  %v3606 = vrot.slane %v3605, 2
  %v3607 = vadd.f32 %v3605, %v3606
  %v3608 = vrot.slane %v3607, 1
  %v3609 = vadd.f32 %v3607, %v3608
  %v3610 = vsel %vm599, %v3420, 0.0
  %v3611 = vsel %vm599, %v3421, 0.0
  %v3612 = vadd.f32 %v3610, %v3611
  %v3613 = vrot.slane %v3612, 4
  %v3614 = vadd.f32 %v3612, %v3613
  %v3615 = vrot.slane %v3614, 2
  %v3616 = vadd.f32 %v3614, %v3615
  %v3617 = vrot.slane %v3616, 1
  %v3618 = vadd.f32 %v3616, %v3617
  %v3619 = vsel %vm599, %v3422, 0.0
  %v3620 = vsel %vm599, %v3423, 0.0
  %v3621 = vadd.f32 %v3619, %v3620
  %v3622 = vrot.slane %v3621, 4
  %v3623 = vadd.f32 %v3621, %v3622
  %v3624 = vrot.slane %v3623, 2
  %v3625 = vadd.f32 %v3623, %v3624
  %v3626 = vrot.slane %v3625, 1
  %v3627 = vadd.f32 %v3625, %v3626
  %v3628 = vsel %vm599, %v3424, 0.0
  %v3629 = vsel %vm599, %v3425, 0.0
  %v3630 = vadd.f32 %v3628, %v3629
  %v3631 = vrot.slane %v3630, 4
  %v3632 = vadd.f32 %v3630, %v3631
  %v3633 = vrot.slane %v3632, 2
  %v3634 = vadd.f32 %v3632, %v3633
  %v3635 = vrot.slane %v3634, 1
  %v3636 = vadd.f32 %v3634, %v3635
  %v3637 = vsel %vm599, %v3426, 0.0
  %v3638 = vsel %vm599, %v3427, 0.0
  %v3639 = vadd.f32 %v3637, %v3638
  %v3640 = vrot.slane %v3639, 4
  %v3641 = vadd.f32 %v3639, %v3640
  %v3642 = vrot.slane %v3641, 2
  %v3643 = vadd.f32 %v3641, %v3642
  %v3644 = vrot.slane %v3643, 1
  %v3645 = vadd.f32 %v3643, %v3644
  %v3646 = vsel %vm599, %v3428, 0.0
  %v3647 = vsel %vm599, %v3429, 0.0
  %v3648 = vadd.f32 %v3646, %v3647
  %v3649 = vrot.slane %v3648, 4
  %v3650 = vadd.f32 %v3648, %v3649
  %v3651 = vrot.slane %v3650, 2
  %v3652 = vadd.f32 %v3650, %v3651
  %v3653 = vrot.slane %v3652, 1
  %v3654 = vadd.f32 %v3652, %v3653
  %v3655 = vsel %vm599, %v3430, 0.0
  %v3656 = vsel %vm599, %v3431, 0.0
  %v3657 = vadd.f32 %v3655, %v3656
  %v3658 = vrot.slane %v3657, 4
  %v3659 = vadd.f32 %v3657, %v3658
  %v3660 = vrot.slane %v3659, 2
  %v3661 = vadd.f32 %v3659, %v3660
  %v3662 = vrot.slane %v3661, 1
  %v3663 = vadd.f32 %v3661, %v3662
  %v3664 = vsel %vm599, %v3432, 0.0
  %v3665 = vsel %vm599, %v3433, 0.0
  %v3666 = vadd.f32 %v3664, %v3665
  %v3667 = vrot.slane %v3666, 4
  %v3668 = vadd.f32 %v3666, %v3667
  %v3669 = vrot.slane %v3668, 2
  %v3670 = vadd.f32 %v3668, %v3669
  %v3671 = vrot.slane %v3670, 1
  %v3672 = vadd.f32 %v3670, %v3671
  %v3673 = vsel %vm599, %v3434, 0.0
  %v3674 = vsel %vm599, %v3435, 0.0
  %v3675 = vadd.f32 %v3673, %v3674
  %v3676 = vrot.slane %v3675, 4
  %v3677 = vadd.f32 %v3675, %v3676
  %v3678 = vrot.slane %v3677, 2
  %v3679 = vadd.f32 %v3677, %v3678
  %v3680 = vrot.slane %v3679, 1
  %v3681 = vadd.f32 %v3679, %v3680
  %v3682 = vsel %vm599, %v3436, 0.0
  %v3683 = vsel %vm599, %v3437, 0.0
  %v3684 = vadd.f32 %v3682, %v3683
  %v3685 = vrot.slane %v3684, 4
  %v3686 = vadd.f32 %v3684, %v3685
  %v3687 = vrot.slane %v3686, 2
  %v3688 = vadd.f32 %v3686, %v3687
  %v3689 = vrot.slane %v3688, 1
  %v3690 = vadd.f32 %v3688, %v3689
  %v3691 = vsel %vm599, %v3438, 0.0
  %v3692 = vsel %vm599, %v3439, 0.0
  %v3693 = vadd.f32 %v3691, %v3692
  %v3694 = vrot.slane %v3693, 4
  %v3695 = vadd.f32 %v3693, %v3694
  %v3696 = vrot.slane %v3695, 2
  %v3697 = vadd.f32 %v3695, %v3696
  %v3698 = vrot.slane %v3697, 1
  %v3699 = vadd.f32 %v3697, %v3698
  %v3700 = vsel %vm599, %v3440, 0.0
  %v3701 = vsel %vm599, %v3441, 0.0
  %v3702 = vadd.f32 %v3700, %v3701
  %v3703 = vrot.slane %v3702, 4
  %v3704 = vadd.f32 %v3702, %v3703
  %v3705 = vrot.slane %v3704, 2
  %v3706 = vadd.f32 %v3704, %v3705
  %v3707 = vrot.slane %v3706, 1
  %v3708 = vadd.f32 %v3706, %v3707
  %v3709 = vsel %vm599, %v3442, 0.0
  %v3710 = vsel %vm599, %v3443, 0.0
  %v3711 = vadd.f32 %v3709, %v3710
  %v3712 = vrot.slane %v3711, 4
  %v3713 = vadd.f32 %v3711, %v3712
  %v3714 = vrot.slane %v3713, 2
  %v3715 = vadd.f32 %v3713, %v3714
  %v3716 = vrot.slane %v3715, 1
  %v3717 = vadd.f32 %v3715, %v3716
  %v3718 = vsel %vm599, %v3444, 0.0
  %v3719 = vsel %vm599, %v3445, 0.0
  %v3720 = vadd.f32 %v3718, %v3719
  %v3721 = vrot.slane %v3720, 4
  %v3722 = vadd.f32 %v3720, %v3721
  %v3723 = vrot.slane %v3722, 2
  %v3724 = vadd.f32 %v3722, %v3723
  %v3725 = vrot.slane %v3724, 1
  %v3726 = vadd.f32 %v3724, %v3725
  %v3727 = vsel %vm599, %v3446, 0.0
  %v3728 = vsel %vm599, %v3447, 0.0
  %v3729 = vadd.f32 %v3727, %v3728
  %v3730 = vrot.slane %v3729, 4
  %v3731 = vadd.f32 %v3729, %v3730
  %v3732 = vrot.slane %v3731, 2
  %v3733 = vadd.f32 %v3731, %v3732
  %v3734 = vrot.slane %v3733, 1
  %v3735 = vadd.f32 %v3733, %v3734
  %v3768 = vsel %vm1776, %v3465, %v3456
  %v3769 = vsel %vm1778, %v3474, %v3768
  %v3770 = vsel %vm1780, %v3483, %v3769
  %v3771 = vsel %vm1782, %v3492, %v3770
  %v3772 = vsel %vm1784, %v3501, %v3771
  %v3773 = vsel %vm1786, %v3510, %v3772
  %v3774 = vsel %vm1788, %v3519, %v3773
  %v3775 = vsel %vm1776, %v3537, %v3528
  %v3776 = vsel %vm1778, %v3546, %v3775
  %v3777 = vsel %vm1780, %v3555, %v3776
  %v3778 = vsel %vm1782, %v3564, %v3777
  %v3779 = vsel %vm1784, %v3573, %v3778
  %v3780 = vsel %vm1786, %v3582, %v3779
  %v3781 = vsel %vm1788, %v3591, %v3780
  %v3782 = vsel %vm1776, %v3609, %v3600
  %v3783 = vsel %vm1778, %v3618, %v3782
  %v3784 = vsel %vm1780, %v3627, %v3783
  %v3785 = vsel %vm1782, %v3636, %v3784
  %v3786 = vsel %vm1784, %v3645, %v3785
  %v3787 = vsel %vm1786, %v3654, %v3786
  %v3788 = vsel %vm1788, %v3663, %v3787
  %v3789 = vsel %vm1776, %v3681, %v3672
  %v3790 = vsel %vm1778, %v3690, %v3789
  %v3791 = vsel %vm1780, %v3699, %v3790
  %v3792 = vsel %vm1782, %v3708, %v3791
  %v3793 = vsel %vm1784, %v3717, %v3792
  %v3794 = vsel %vm1786, %v3726, %v3793
  %v3795 = vsel %vm1788, %v3735, %v3794
  %3800 = vst.msk [vmem:[#allocation6] sm:$0xff] %vm599, %v3774
  %3801 = vst.msk [vmem:[#allocation6 + $0x8] sm:$0xff] %vm599, %v3781
  %3802 = vst.msk [vmem:[#allocation6 + $0x10] sm:$0xff] %vm599, %v3788
  %3803 = vst.msk [vmem:[#allocation6 + $0x18] sm:$0xff] %vm599, %v3795
  %v3804 = vpack.c.bf16 %v579, %v579
  %v3805 = vpack.c.bf16 %v580, %v580
  %v3806 = vpack.c.bf16 %v581, %v581
  %v3807 = vpack.c.bf16 %v582, %v582
  %3812 = vrot.lane.b32.xlu0 %v3804, 64
  %v3813 = vpop.permute.xlu0 %3812
  %3814 = vrot.lane.b32.xlu0 %v3805, 64
  %v3815 = vpop.permute.xlu0 %3814
  %3816 = vrot.lane.b32.xlu0 %v3806, 64
  %v3817 = vpop.permute.xlu0 %3816
  %3818 = vrot.lane.b32.xlu0 %v3807, 64
  %v3819 = vpop.permute.xlu0 %3818
  %vm3824 = vcmask 519168
  %3825 = vst.msk [vmem:[#allocation3] sm:$0xf] %vm3824, %v3813
  %3826 = vst.msk [vmem:[#allocation3 + $0x4] sm:$0xf] %vm3824, %v3815
  %3827 = vst.msk [vmem:[#allocation3 + $0x8] sm:$0xf] %vm3824, %v3817
  %3828 = vst.msk [vmem:[#allocation3 + $0xc] sm:$0xf] %vm3824, %v3819
  %v3829 = vpack.c.bf16 %v3456, %v3456
  %v3830 = vpack.c.bf16 %v3465, %v3465
  %v3831 = vpack.c.bf16 %v3474, %v3474
  %v3832 = vpack.c.bf16 %v3483, %v3483
  %v3833 = vpack.c.bf16 %v3492, %v3492
  %v3834 = vpack.c.bf16 %v3501, %v3501
  %v3835 = vpack.c.bf16 %v3510, %v3510
  %v3836 = vpack.c.bf16 %v3519, %v3519
  %v3837 = vpack.c.bf16 %v3528, %v3528
  %v3838 = vpack.c.bf16 %v3537, %v3537
  %v3839 = vpack.c.bf16 %v3546, %v3546
  %v3840 = vpack.c.bf16 %v3555, %v3555
  %v3841 = vpack.c.bf16 %v3564, %v3564
  %v3842 = vpack.c.bf16 %v3573, %v3573
  %v3843 = vpack.c.bf16 %v3582, %v3582
  %v3844 = vpack.c.bf16 %v3591, %v3591
  %v3845 = vpack.c.bf16 %v3600, %v3600
  %v3846 = vpack.c.bf16 %v3609, %v3609
  %v3847 = vpack.c.bf16 %v3618, %v3618
  %v3848 = vpack.c.bf16 %v3627, %v3627
  %v3849 = vpack.c.bf16 %v3636, %v3636
  %v3850 = vpack.c.bf16 %v3645, %v3645
  %v3851 = vpack.c.bf16 %v3654, %v3654
  %v3852 = vpack.c.bf16 %v3663, %v3663
  %v3853 = vpack.c.bf16 %v3672, %v3672
  %v3854 = vpack.c.bf16 %v3681, %v3681
  %v3855 = vpack.c.bf16 %v3690, %v3690
  %v3856 = vpack.c.bf16 %v3699, %v3699
  %v3857 = vpack.c.bf16 %v3708, %v3708
  %v3858 = vpack.c.bf16 %v3717, %v3717
  %v3859 = vpack.c.bf16 %v3726, %v3726
  %v3860 = vpack.c.bf16 %v3735, %v3735
  %v3893 = vunpack.c.l.b16 %v3829
  %v3894 = vunpack.c.l.b16 %v3830
  %v3895 = vunpack.c.l.b16 %v3831
  %v3896 = vunpack.c.l.b16 %v3832
  %v3897 = vunpack.c.l.b16 %v3833
  %v3898 = vunpack.c.l.b16 %v3834
  %v3899 = vunpack.c.l.b16 %v3835
  %v3900 = vunpack.c.l.b16 %v3836
  %v3901 = vunpack.c.l.b16 %v3837
  %v3902 = vunpack.c.l.b16 %v3838
  %v3903 = vunpack.c.l.b16 %v3839
  %v3904 = vunpack.c.l.b16 %v3840
  %v3905 = vunpack.c.l.b16 %v3841
  %v3906 = vunpack.c.l.b16 %v3842
  %v3907 = vunpack.c.l.b16 %v3843
  %v3908 = vunpack.c.l.b16 %v3844
  %v3909 = vunpack.c.l.b16 %v3845
  %v3910 = vunpack.c.l.b16 %v3846
  %v3911 = vunpack.c.l.b16 %v3847
  %v3912 = vunpack.c.l.b16 %v3848
  %v3913 = vunpack.c.l.b16 %v3849
  %v3914 = vunpack.c.l.b16 %v3850
  %v3915 = vunpack.c.l.b16 %v3851
  %v3916 = vunpack.c.l.b16 %v3852
  %v3917 = vunpack.c.l.b16 %v3853
  %v3918 = vunpack.c.l.b16 %v3854
  %v3919 = vunpack.c.l.b16 %v3855
  %v3920 = vunpack.c.l.b16 %v3856
  %v3921 = vunpack.c.l.b16 %v3857
  %v3922 = vunpack.c.l.b16 %v3858
  %v3923 = vunpack.c.l.b16 %v3859
  %v3924 = vunpack.c.l.b16 %v3860
  %v3925 = vsel %vm1776, %v3894, %v3893
  %v3926 = vsel %vm1778, %v3895, %v3925
  %v3927 = vsel %vm1780, %v3896, %v3926
  %v3928 = vsel %vm1782, %v3897, %v3927
  %v3929 = vsel %vm1784, %v3898, %v3928
  %v3930 = vsel %vm1786, %v3899, %v3929
  %v3931 = vsel %vm1788, %v3900, %v3930
  %v3932 = vsel %vm1776, %v3902, %v3901
  %v3933 = vsel %vm1778, %v3903, %v3932
  %v3934 = vsel %vm1780, %v3904, %v3933
  %v3935 = vsel %vm1782, %v3905, %v3934
  %v3936 = vsel %vm1784, %v3906, %v3935
  %v3937 = vsel %vm1786, %v3907, %v3936
  %v3938 = vsel %vm1788, %v3908, %v3937
  %v3939 = vsel %vm1776, %v3910, %v3909
  %v3940 = vsel %vm1778, %v3911, %v3939
  %v3941 = vsel %vm1780, %v3912, %v3940
  %v3942 = vsel %vm1782, %v3913, %v3941
  %v3943 = vsel %vm1784, %v3914, %v3942
  %v3944 = vsel %vm1786, %v3915, %v3943
  %v3945 = vsel %vm1788, %v3916, %v3944
  %v3946 = vsel %vm1776, %v3918, %v3917
  %v3947 = vsel %vm1778, %v3919, %v3946
  %v3948 = vsel %vm1780, %v3920, %v3947
  %v3949 = vsel %vm1782, %v3921, %v3948
  %v3950 = vsel %vm1784, %v3922, %v3949
  %v3951 = vsel %vm1786, %v3923, %v3950
  %v3952 = vsel %vm1788, %v3924, %v3951
  %v3953 = vpack.c.b16 %v3931, %v3931
  %v3954 = vpack.c.b16 %v3938, %v3938
  %v3955 = vpack.c.b16 %v3945, %v3945
  %v3956 = vpack.c.b16 %v3952, %v3952
  %3957 = vrot.lane.b32.xlu0 %v3953, 64
  %v3958 = vpop.permute.xlu0 %3957
  %3959 = vrot.lane.b32.xlu0 %v3954, 64
  %v3960 = vpop.permute.xlu0 %3959
  %3961 = vrot.lane.b32.xlu0 %v3955, 64
  %v3962 = vpop.permute.xlu0 %3961
  %3963 = vrot.lane.b32.xlu0 %v3956, 64
  %v3964 = vpop.permute.xlu0 %3963
  %vm3969 = vcmask 1043968
  %3970 = vst.msk [vmem:[#allocation3] sm:$0xf] %vm3969, %v3958
  %3971 = vst.msk [vmem:[#allocation3 + $0x4] sm:$0xf] %vm3969, %v3960
  %3972 = vst.msk [vmem:[#allocation3 + $0x8] sm:$0xf] %vm3969, %v3962
  %3973 = vst.msk [vmem:[#allocation3 + $0xc] sm:$0xf] %vm3969, %v3964
  %v3974 = vld [vmem:[#allocation3] sm:$0xf]
  %v3975 = vld [vmem:[#allocation3 + $0x4] sm:$0xf]
  %v3976 = vld [vmem:[#allocation3 + $0x8] sm:$0xf]
  %v3977 = vld [vmem:[#allocation3 + $0xc] sm:$0xf]
  %v3978 = vld [vmem:[%s7] sm:$0xf]
  %v3979 = vld [vmem:[%s7 + $0x4] sm:$0xf]
  %v3980 = vld [vmem:[%s7 + $0x8] sm:$0xf]
  %v3981 = vld [vmem:[%s7 + $0xc] sm:$0xf]
  %v3982 = vld [vmem:[%s7 + $0x10] sm:$0xf]
  %v3983 = vld [vmem:[%s7 + $0x14] sm:$0xf]
  %v3984 = vld [vmem:[%s7 + $0x18] sm:$0xf]
  %v3985 = vld [vmem:[%s7 + $0x1c] sm:$0xf]
  %v3986 = vld [vmem:[%s7 + $0x20] sm:$0xf]
  %v3987 = vld [vmem:[%s7 + $0x24] sm:$0xf]
  %v3988 = vld [vmem:[%s7 + $0x28] sm:$0xf]
  %v3989 = vld [vmem:[%s7 + $0x2c] sm:$0xf]
  %v3990 = vld [vmem:[%s7 + $0x30] sm:$0xf]
  %v3991 = vld [vmem:[%s7 + $0x34] sm:$0xf]
  %v3992 = vld [vmem:[%s7 + $0x38] sm:$0xf]
  %v3993 = vld [vmem:[%s7 + $0x3c] sm:$0xf]
  %v3994 = vld [vmem:[%s8] sm:$0x1]
  %v3996 = vperm.slane %v3994, 0
  %v4002 = vunpack.c.l.b16 %v3974
  %v4003 = vunpack.c.l.b16 %v3975
  %v4004 = vunpack.c.l.b16 %v3976
  %v4005 = vunpack.c.l.b16 %v3977
  %v4006 = vpack.c.b16 %v4003, %v4002
  %v4007 = vpack.c.b16 %v4005, %v4004
  %v4026 = vunpack.c.l.b16 %v3978
  %v4027 = vunpack.c.l.b16 %v3979
  %v4028 = vunpack.c.l.b16 %v3980
  %v4029 = vunpack.c.l.b16 %v3981
  %v4030 = vunpack.c.l.b16 %v3982
  %v4031 = vunpack.c.l.b16 %v3983
  %v4032 = vunpack.c.l.b16 %v3984
  %v4033 = vunpack.c.l.b16 %v3985
  %v4034 = vunpack.c.l.b16 %v3986
  %v4035 = vunpack.c.l.b16 %v3987
  %v4036 = vunpack.c.l.b16 %v3988
  %v4037 = vunpack.c.l.b16 %v3989
  %v4038 = vunpack.c.l.b16 %v3990
  %v4039 = vunpack.c.l.b16 %v3991
  %v4040 = vunpack.c.l.b16 %v3992
  %v4041 = vunpack.c.l.b16 %v3993
  %v4042 = vpack.c.b16 %v4027, %v4026
  %v4043 = vpack.c.b16 %v4029, %v4028
  %v4044 = vpack.c.b16 %v4031, %v4030
  %v4045 = vpack.c.b16 %v4033, %v4032
  %v4046 = vpack.c.b16 %v4035, %v4034
  %v4047 = vpack.c.b16 %v4037, %v4036
  %v4048 = vpack.c.b16 %v4039, %v4038
  %v4049 = vpack.c.b16 %v4041, %v4040
  %4058 = vmatpush.bf16.msra.mxu0 %v4049
  %4059 = vmatpush.bf16.msra.mxu0 %v4048
  %4060 = vmatpush.bf16.msra.mxu0 %v4047
  %4061 = vmatpush.bf16.msra.mxu0 %v4046
  %4062 = vmatpush.bf16.msra.mxu0 %v4045
  %4063 = vmatpush.bf16.msra.mxu0 %v4044
  %4064 = vmatpush.bf16.msra.mxu0 %v4043
  %4065 = vmatpush.bf16.msra.mxu0 %v4042
  %4066 = vmatmul.bf16.gmra.mxu0 %v4006
  %v4067 = vpop.f32.mrf.mxu0
  %v4068 = vadd.f32 %v3996, %v4067
  %v4069 = vpop.f32.mrf.mxu0
  %v4070 = vadd.f32 %v3996, %v4069
  %4071 = vmatmul.bf16.gmra.mxu0 %v4007
  %v4072 = vpop.f32.mrf.mxu0
  %v4073 = vadd.f32 %v3996, %v4072
  %v4074 = vpop.f32.mrf.mxu0
  %v4075 = vadd.f32 %v3996, %v4074
  %4076 = vdwg.mxu0
  %4077 = vmax.xlane.f32.xlu0 %v4068
  %v4078 = vpop.xlane.xlu0 %4077
  %4079 = vmax.xlane.f32.xlu0 %v4070
  %v4080 = vpop.xlane.xlu0 %4079
  %4081 = vmax.xlane.f32.xlu0 %v4073
  %v4082 = vpop.xlane.xlu0 %4081
  %4083 = vmax.xlane.f32.xlu0 %v4075
  %v4084 = vpop.xlane.xlu0 %4083
  %v4085 = vsub.f32 %v4068, %v4078
  %v4086 = vsub.f32 %v4070, %v4080
  %v4087 = vsub.f32 %v4073, %v4082
  %v4088 = vsub.f32 %v4075, %v4084
  %v4089 = vmul.f32 %v4085, 1.442695
  %v4090 = vpow.pop %v4089
  %v4091 = vmul.f32 %v4086, 1.442695
  %v4092 = vpow.pop %v4091
  %v4093 = vmul.f32 %v4087, 1.442695
  %v4094 = vpow.pop %v4093
  %v4095 = vmul.f32 %v4088, 1.442695
  %v4096 = vpow.pop %v4095
  %4097 = vadd.xlane.f32.xlu0 %v4090
  %v4098 = vpop.xlane.xlu0 %4097
  %4099 = vadd.xlane.f32.xlu0 %v4092
  %v4100 = vpop.xlane.xlu0 %4099
  %4101 = vadd.xlane.f32.xlu0 %v4094
  %v4102 = vpop.xlane.xlu0 %4101
  %4103 = vadd.xlane.f32.xlu0 %v4096
  %v4104 = vpop.xlane.xlu0 %4103
  %v4105 = vlog2.pop %v4098
  %v4106 = vmul.f32 %v4105, 0.6931472
  %v4107 = vlog2.pop %v4100
  %v4108 = vmul.f32 %v4107, 0.6931472
  %v4109 = vlog2.pop %v4102
  %v4110 = vmul.f32 %v4109, 0.6931472
  %v4111 = vlog2.pop %v4104
  %v4112 = vmul.f32 %v4111, 0.6931472
  %v4113 = vadd.f32 %v4106, %v4078
  %v4114 = vadd.f32 %v4108, %v4080
  %v4115 = vadd.f32 %v4110, %v4082
  %v4116 = vadd.f32 %v4112, %v4084
  %v4117 = vsub.f32 %v4068, %v4113
  %v4118 = vsub.f32 %v4070, %v4114
  %v4119 = vsub.f32 %v4073, %v4115
  %v4120 = vsub.f32 %v4075, %v4116
  %4121 = vst [vmem:[%s9] sm:$0xff] %v4117
  %4122 = vst [vmem:[%s9 + $0x18] sm:$0xff] %v4118
  %4123 = vst [vmem:[%s9 + $0x30] sm:$0xff] %v4119
  %4124 = vst [vmem:[%s9 + $0x48] sm:$0xff] %v4120
  %4125 = vst.msk [vmem:[%s9 + $0x8] sm:$0xff] %vm599, %v609
  %4126 = vst.msk [vmem:[%s9 + $0x20] sm:$0xff] %vm599, %v611
  %4127 = vst.msk [vmem:[%s9 + $0x38] sm:$0xff] %vm599, %v613
  %4128 = vst.msk [vmem:[%s9 + $0x50] sm:$0xff] %vm599, %v615
  %4129 = vrot.lane.b32.xlu0 %v3774, 64
  %v4130 = vpop.permute.xlu0 %4129
  %4131 = vrot.lane.b32.xlu0 %v3781, 64
  %v4132 = vpop.permute.xlu0 %4131
  %4133 = vrot.lane.b32.xlu0 %v3788, 64
  %v4134 = vpop.permute.xlu0 %4133
  %4135 = vrot.lane.b32.xlu0 %v3795, 64
  %v4136 = vpop.permute.xlu0 %4135
  %vm4141 = vcmask 1048064
  %4142 = vst.msk [vmem:[%s9 + $0x8] sm:$0xff] %vm4141, %v4130
  %4143 = vst.msk [vmem:[%s9 + $0x20] sm:$0xff] %vm4141, %v4132
  %4144 = vst.msk [vmem:[%s9 + $0x38] sm:$0xff] %vm4141, %v4134
  %4145 = vst.msk [vmem:[%s9 + $0x50] sm:$0xff] %vm4141, %v4136
  %4146 = vst.msk [vmem:[%s9 + $0x10] sm:$0xff] %vm599, %v588
  %4147 = vst.msk [vmem:[%s9 + $0x28] sm:$0xff] %vm599, %v590
  %4148 = vst.msk [vmem:[%s9 + $0x40] sm:$0xff] %vm599, %v592
  %4149 = vst.msk [vmem:[%s9 + $0x58] sm:$0xff] %vm599, %v594
  %v4150 = vadd.s32 %v1677, 4294967232
  %v4151 = vperm.slane %v3067, %v4150
  %v4152 = vadd.s32 %v1677, 4294967224
  %v4153 = vperm.slane %v3072, %v4152
  %vm4154 = vcmask 654912
  %v4155 = vsel %vm4154, %v4153, %v4151
  %v4156 = vperm.slane %v3077, %v4150
  %v4157 = vperm.slane %v3082, %v4152
  %v4158 = vsel %vm4154, %v4157, %v4156
  %v4159 = vperm.slane %v3087, %v4150
  %v4160 = vperm.slane %v3092, %v4152
  %v4161 = vsel %vm4154, %v4160, %v4159
  %v4162 = vperm.slane %v3097, %v4150
  %v4163 = vperm.slane %v3102, %v4152
  %v4164 = vsel %vm4154, %v4163, %v4162
  %v4165 = vperm.slane %v3107, %v4150
  %v4166 = vperm.slane %v3112, %v4152
  %v4167 = vsel %vm4154, %v4166, %v4165
  %v4168 = vperm.slane %v3117, %v4150
  %v4169 = vperm.slane %v3122, %v4152
  %v4170 = vsel %vm4154, %v4169, %v4168
  %v4171 = vperm.slane %v3127, %v4150
  %v4172 = vperm.slane %v3132, %v4152
  %v4173 = vsel %vm4154, %v4172, %v4171
  %v4174 = vperm.slane %v3137, %v4150
  %v4175 = vperm.slane %v3142, %v4152
  %v4176 = vsel %vm4154, %v4175, %v4174
  %v4177 = vperm.slane %v3147, %v4150
  %v4178 = vperm.slane %v3152, %v4152
  %v4179 = vsel %vm4154, %v4178, %v4177
  %v4180 = vperm.slane %v3157, %v4150
  %v4181 = vperm.slane %v3162, %v4152
  %v4182 = vsel %vm4154, %v4181, %v4180
  %v4183 = vperm.slane %v3167, %v4150
  %v4184 = vperm.slane %v3172, %v4152
  %v4185 = vsel %vm4154, %v4184, %v4183
  %v4186 = vperm.slane %v3177, %v4150
  %v4187 = vperm.slane %v3182, %v4152
  %v4188 = vsel %vm4154, %v4187, %v4186
  %v4189 = vperm.slane %v3187, %v4150
  %v4190 = vperm.slane %v3192, %v4152
  %v4191 = vsel %vm4154, %v4190, %v4189
  %v4192 = vperm.slane %v3197, %v4150
  %v4193 = vperm.slane %v3202, %v4152
  %v4194 = vsel %vm4154, %v4193, %v4192
  %v4195 = vperm.slane %v3207, %v4150
  %v4196 = vperm.slane %v3212, %v4152
  %v4197 = vsel %vm4154, %v4196, %v4195
  %v4198 = vperm.slane %v3217, %v4150
  %v4199 = vperm.slane %v3222, %v4152
  %v4200 = vsel %vm4154, %v4199, %v4198
  %v4201 = vperm.slane %v3227, %v4150
  %v4202 = vperm.slane %v3232, %v4152
  %v4203 = vsel %vm4154, %v4202, %v4201
  %v4204 = vperm.slane %v3237, %v4150
  %v4205 = vperm.slane %v3242, %v4152
  %v4206 = vsel %vm4154, %v4205, %v4204
  %v4207 = vperm.slane %v3247, %v4150
  %v4208 = vperm.slane %v3252, %v4152
  %v4209 = vsel %vm4154, %v4208, %v4207
  %v4210 = vperm.slane %v3257, %v4150
  %v4211 = vperm.slane %v3262, %v4152
  %v4212 = vsel %vm4154, %v4211, %v4210
  %v4213 = vperm.slane %v3267, %v4150
  %v4214 = vperm.slane %v3272, %v4152
  %v4215 = vsel %vm4154, %v4214, %v4213
  %v4216 = vperm.slane %v3277, %v4150
  %v4217 = vperm.slane %v3282, %v4152
  %v4218 = vsel %vm4154, %v4217, %v4216
  %v4219 = vperm.slane %v3287, %v4150
  %v4220 = vperm.slane %v3292, %v4152
  %v4221 = vsel %vm4154, %v4220, %v4219
  %v4222 = vperm.slane %v3297, %v4150
  %v4223 = vperm.slane %v3302, %v4152
  %v4224 = vsel %vm4154, %v4223, %v4222
  %v4225 = vperm.slane %v3307, %v4150
  %v4226 = vperm.slane %v3312, %v4152
  %v4227 = vsel %vm4154, %v4226, %v4225
  %v4228 = vperm.slane %v3317, %v4150
  %v4229 = vperm.slane %v3322, %v4152
  %v4230 = vsel %vm4154, %v4229, %v4228
  %v4231 = vperm.slane %v3327, %v4150
  %v4232 = vperm.slane %v3332, %v4152
  %v4233 = vsel %vm4154, %v4232, %v4231
  %v4234 = vperm.slane %v3337, %v4150
  %v4235 = vperm.slane %v3342, %v4152
  %v4236 = vsel %vm4154, %v4235, %v4234
  %v4237 = vperm.slane %v3347, %v4150
  %v4238 = vperm.slane %v3352, %v4152
  %v4239 = vsel %vm4154, %v4238, %v4237
  %v4240 = vperm.slane %v3357, %v4150
  %v4241 = vperm.slane %v3362, %v4152
  %v4242 = vsel %vm4154, %v4241, %v4240
  %v4243 = vperm.slane %v3367, %v4150
  %v4244 = vperm.slane %v3372, %v4152
  %v4245 = vsel %vm4154, %v4244, %v4243
  %v4246 = vperm.slane %v3377, %v4150
  %v4247 = vperm.slane %v3382, %v4152
  %v4248 = vsel %vm4154, %v4247, %v4246
  %v4249 = vsel %vm1776, %v4158, %v4155
  %v4250 = vsel %vm1778, %v4161, %v4249
  %v4251 = vsel %vm1780, %v4164, %v4250
  %v4252 = vsel %vm1782, %v4167, %v4251
  %v4253 = vsel %vm1784, %v4170, %v4252
  %v4254 = vsel %vm1786, %v4173, %v4253
  %v4255 = vsel %vm1788, %v4176, %v4254
  %v4256 = vsel %vm1776, %v4182, %v4179
  %v4257 = vsel %vm1778, %v4185, %v4256
  %v4258 = vsel %vm1780, %v4188, %v4257
  %v4259 = vsel %vm1782, %v4191, %v4258
  %v4260 = vsel %vm1784, %v4194, %v4259
  %v4261 = vsel %vm1786, %v4197, %v4260
  %v4262 = vsel %vm1788, %v4200, %v4261
  %v4263 = vsel %vm1776, %v4206, %v4203
  %v4264 = vsel %vm1778, %v4209, %v4263
  %v4265 = vsel %vm1780, %v4212, %v4264
  %v4266 = vsel %vm1782, %v4215, %v4265
  %v4267 = vsel %vm1784, %v4218, %v4266
  %v4268 = vsel %vm1786, %v4221, %v4267
  %v4269 = vsel %vm1788, %v4224, %v4268
  %v4270 = vsel %vm1776, %v4230, %v4227
  %v4271 = vsel %vm1778, %v4233, %v4270
  %v4272 = vsel %vm1780, %v4236, %v4271
  %v4273 = vsel %vm1782, %v4239, %v4272
  %v4274 = vsel %vm1784, %v4242, %v4273
  %v4275 = vsel %vm1786, %v4245, %v4274
  %v4276 = vsel %vm1788, %v4248, %v4275
  %vm4281 = vcmask 654848
  %4282 = vst.msk [vmem:[%s9 + $0x10] sm:$0xff] %vm4281, %v4255
  %4283 = vst.msk [vmem:[%s9 + $0x28] sm:$0xff] %vm4281, %v4262
  %4284 = vst.msk [vmem:[%s9 + $0x40] sm:$0xff] %vm4281, %v4269
  %4285 = vst.msk [vmem:[%s9 + $0x58] sm:$0xff] %vm4281, %v4276
  %vm4286 = vcmask 1048192
  %4287 = vst.msk [vmem:[%s9 + $0x10] sm:$0xff] %vm4286, 0.0
  %4288 = vst.msk [vmem:[%s9 + $0x28] sm:$0xff] %vm4286, 0.0
  %4289 = vst.msk [vmem:[%s9 + $0x40] sm:$0xff] %vm4286, 0.0
  %4290 = vst.msk [vmem:[%s9 + $0x58] sm:$0xff] %vm4286, 0.0
  // Predicated region
  $region42: #{attn_decoder_forward.1} parent=0 // pred_check
    _
  $region43: #{attn_decoder_forward.1} parent=0 // pred_check_branch
    %4292 = sbr.rel (0) target = $region45
  $region44: #{attn_decoder_forward.1} parent=0 // pred_region
    _
  $region45: #{attn_decoder_forward.1} parent=0 // pred_fallthru
    _
  // Predicated region
  $region46: #{attn_decoder_forward.1} parent=0 // pred_check
    _
  $region47: #{attn_decoder_forward.1} parent=0 // pred_check_branch
    %4294 = sbr.rel (0) target = $region49
  $region48: #{attn_decoder_forward.1} parent=0 // pred_region
    _
  $region49: #{attn_decoder_forward.1} parent=0 // pred_fallthru
    _

</llo_original>
